<compile_context>
chip_gen: v6e
topology: v6e:2x2x1
jax: 0.10.0
libtpu: 0.0.40
codegen_flags: <defaults>
</compile_context>

<pallas_src>
import functools

import jax
import jax.numpy as jnp
from jax import lax
from jax.experimental import pallas as pl
from jax.experimental.pallas import tpu as pltpu

LN_EPS = 1e-5


def _layer_norm(v, g, b):
    mu = jnp.mean(v, axis=-1, keepdims=True)
    var = jnp.mean((v - mu) ** 2, axis=-1, keepdims=True)
    return (v - mu) * lax.rsqrt(var + LN_EPS) * g + b


def _gelu(x):
    # GPT-2 style tanh-approximate GELU.
    return 0.5 * x * (1.0 + jnp.tanh(0.7978845608028654 * (x + 0.044715 * x * x * x)))


def mm_attention_block_kernel(
    seq_x_ref, seq_y_ref,
    g1_ref, b1_ref,
    wq_ref, bq_ref, wk_ref, bk_ref, wv_ref, bv_ref,
    wff_ref, bff_ref,
    g2_ref, b2_ref,
    w1_ref, bb1_ref, w2_ref, bb2_ref,
    out_ref,
    *, num_heads, head_dim, attn_scale,
):
    f32 = jnp.float32
    bf16 = jnp.bfloat16
    Bb, Sx, D = seq_x_ref.shape
    _, Sy, _ = seq_y_ref.shape
    H, dh = num_heads, head_dim

    # ---- shared row-wise work: fold (Bb, S, D) -> (Bb*S, D) so the MXU sees tall matmuls.
    x2 = seq_x_ref[...].reshape(Bb * Sx, D)                       # f32
    y2 = seq_y_ref[...].reshape(Bb * Sy, D)

    g1 = g1_ref[0]
    b1 = b1_ref[0]
    ln_x = _layer_norm(x2, g1, b1).astype(bf16)
    ln_y = _layer_norm(y2, g1, b1).astype(bf16)

    # Projections: bf16 operands, f32 accumulation on the MXU; biases added once in f32.
    q2 = jnp.dot(ln_x, wq_ref[...], preferred_element_type=f32) + bq_ref[0]   # (Bb*Sx, D)
    k2 = jnp.dot(ln_y, wk_ref[...], preferred_element_type=f32) + bk_ref[0]   # (Bb*Sy, D)
    v2 = jnp.dot(ln_y, wv_ref[...], preferred_element_type=f32) + bv_ref[0]   # (Bb*Sy, D)

    q3 = q2.reshape(Bb, Sx, D).astype(bf16)
    k3 = k2.reshape(Bb, Sy, D).astype(bf16)
    v3 = v2.reshape(Bb, Sy, D).astype(bf16)

    # ---- per-head cross attention, batched over the Bb batch elements of this grid step.
    # Scores are materialized transposed, sc[b, n, s] (n = seq_x query pos, s = seq_y pos),
    # so both dots are in flash-attention canonical 3-D single-batch form.  Softmax is over
    # axis 1, which is the QUERY axis — faithfully matching the torch einsums
    # 'bhsd,bhnd->bhsn' + F.softmax(dim=-1).  Do NOT "fix" this into a key-axis softmax.
    #
    # The head merge is fused into ff_layer: each head's context multiplies its own (dh, D)
    # row block of Wff (pre-folded to (H, dh, D) in the wrapper) and accumulates at value
    # level — no VMEM scratch, no masked lane-slice stores.
    acc = x2 + bff_ref[0]                                         # residual + ff bias (f32)
    for h in range(H):
        sl = slice(h * dh, (h + 1) * dh)
        qh = q3[:, :, sl]                                          # (Bb, Sx, dh) bf16
        kh = k3[:, :, sl]                                          # (Bb, Sy, dh)
        vh = v3[:, :, sl]                                          # (Bb, Sy, dh)
        # sc[b, n, s] = sum_d qh[b, n, d] * kh[b, s, d]
        sc = lax.dot_general(qh, kh, (((2,), (2,)), ((0,), (0,))),
                             preferred_element_type=f32)           # (Bb, Sx, Sy)
        if attn_scale != 1.0:                                      # static: skipped when 1.0
            sc = sc * attn_scale
        m = jnp.max(sc, axis=1, keepdims=True)                     # softmax over query axis n
        e = jnp.exp(sc - m)
        w = e * pl.reciprocal(jnp.sum(e, axis=1, keepdims=True), approx=True)
        # ctx[b, n, d] = sum_s w[b, n, s] * vh[b, s, d]
        ctx_h = lax.dot_general(w.astype(bf16), vh, (((2,), (1,)), ((0,), (0,))),
                                preferred_element_type=f32)        # (Bb, Sx, dh)
        # Head-merge fused with the ff projection: ctx_h @ Wff[h*dh:(h+1)*dh, :].
        acc = acc + jnp.dot(ctx_h.reshape(Bb * Sx, dh).astype(bf16), wff_ref[h],
                            preferred_element_type=f32)            # (Bb*Sx, D)

    # ---- r = seq_x + ff(attn); z = ln_2(r); out = z + MLP(z)  (Residual wraps MLP around z)
    z = _layer_norm(acc, g2_ref[0], b2_ref[0])                                # f32
    hdn = _gelu(jnp.dot(z.astype(bf16), w1_ref[...], preferred_element_type=f32) + bb1_ref[0])
    mlp = jnp.dot(hdn.astype(bf16), w2_ref[...], preferred_element_type=f32) + bb2_ref[0]
    out_ref[...] = (z + mlp).reshape(Bb, Sx, D)


def _const_spec(shape, index_map):
    # Constant-index weight/bias blocks: single-buffered so resident VMEM is halved vs the
    # default double-buffering (matters most on v7x's 64 MiB VMEM).
    try:
        return pl.BlockSpec(shape, index_map, pipeline_mode=pl.Buffered(1))
    except Exception:   # older API without pipeline_mode — fall back to default buffering
        return pl.BlockSpec(shape, index_map)


def _vmem_limit_bytes():
    cap = 128 * 1024 * 1024
    try:
        info = pltpu.get_tpu_info()
        cap = int(getattr(info, "vmem_capacity_bytes", cap) or cap)
    except Exception:
        pass
    # 3/4 of physical VMEM (≈48 MiB on v7x) with a 96 MiB cap for 128 MiB-VMEM chips.
    return int(min(96 * 1024 * 1024, (cap * 3) // 4))


def prepare_params(params, num_heads):
    """One-time parameter prep (do NOT redo per forward): split the fused KV projection,
    pre-fold Wff into per-head row blocks, and cast matmul weights to bf16."""
    (g1, b1, Wq, bq, Wkv, bkv, Wff, bff, g2, b2, W1, bb1, W2, bb2) = params
    D = Wq.shape[0]
    assert D % num_heads == 0, "hidden size must be divisible by num_heads"
    dh = D // num_heads
    bf16 = jnp.bfloat16
    Wk, Wv = Wkv[:, :D], Wkv[:, D:]
    bk, bv = bkv[:, :D], bkv[:, D:]
    Wff_h = Wff.reshape(num_heads, dh, Wff.shape[1])   # row block h == head h's dh rows
    return (g1, b1,
            Wq.astype(bf16), bq, Wk.astype(bf16), bk, Wv.astype(bf16), bv,
            Wff_h.astype(bf16), bff, g2, b2,
            W1.astype(bf16), bb1, W2.astype(bf16), bb2)


def multimodal_attention_block(seq_x, seq_y, kernel_params, *, num_heads, attn_scale,
                               batch_block=None):
    B, Sx, D = seq_x.shape
    By, Sy, Dy = seq_y.shape
    assert By == B and Dy == D
    assert D % num_heads == 0, "hidden size must be divisible by num_heads"
    head_dim = D // num_heads

    (g1, b1, Wq, bq, Wk, bk, Wv, bv, Wff_h, bff, g2, b2, W1, bb1, W2, bb2) = kernel_params
    inner = W1.shape[1]

    # Fold several batch elements into one grid step so the shared LN/Q/KV/FF/MLP matmuls
    # present tall operands to the MXU, but keep grid >= 2 whenever B >= 2 so the "parallel"
    # batch axis can shard across v7x's two TensorCores.  (On v6e, target_rows ~512 is worth
    # trying via an explicit batch_block.)
    if batch_block is None:
        target_rows = 256
        bb = max(1, min(B, target_rows // max(Sx, 1)))
        if B >= 2:
            bb = min(bb, B // 2)
        bb = max(bb, 1)
        while B % bb != 0:
            bb -= 1
        batch_block = bb
    Bb = batch_block
    grid = (B // Bb,)

    c2 = lambda shape: _const_spec(shape, lambda i: (0, 0))
    c3 = lambda shape: _const_spec(shape, lambda i: (0, 0, 0))

    in_specs = [
        pl.BlockSpec((Bb, Sx, D), lambda i: (i, 0, 0)),   # seq_x  (default double-buffered)
        pl.BlockSpec((Bb, Sy, D), lambda i: (i, 0, 0)),   # seq_y
        c2((1, D)), c2((1, D)),                           # ln_1 gamma, beta
        c2((D, D)), c2((1, D)),                           # Wq, bq
        c2((D, D)), c2((1, D)),                           # Wk, bk
        c2((D, D)), c2((1, D)),                           # Wv, bv
        c3((num_heads, head_dim, D)), c2((1, D)),         # Wff (per-head row blocks), bff
        c2((1, D)), c2((1, D)),                           # ln_2 gamma, beta
        c2((D, inner)), c2((1, inner)),                   # MLP W1, b1
        c2((inner, D)), c2((1, D)),                       # MLP W2, b2
    ]

    kernel = functools.partial(
        mm_attention_block_kernel,
        num_heads=num_heads, head_dim=head_dim, attn_scale=float(attn_scale))

    # NOTE: I/O stays f32 to match the torch module; if the surrounding model is bf16, feed
    # bf16 activations and set out_shape dtype to bf16 to halve activation DMA.
    return pl.pallas_call(
        kernel,
        grid=grid,
        in_specs=in_specs,
        out_specs=pl.BlockSpec((Bb, Sx, D), lambda i: (i, 0, 0)),
        out_shape=jax.ShapeDtypeStruct((B, Sx, D), jnp.float32),
        compiler_params=pltpu.CompilerParams(
            dimension_semantics=("parallel",),
            vmem_limit_bytes=_vmem_limit_bytes(),
        ),
    )(seq_x, seq_y, g1, b1, Wq, bq, Wk, bk, Wv, bv, Wff_h, bff,
      g2, b2, W1, bb1, W2, bb2)


def init_params(key, D):
    inner = 4 * D
    std = 0.02
    ks = jax.random.split(key, 10)
    f32 = jnp.float32
    g1 = jnp.ones((1, D), f32)
    b1 = jnp.zeros((1, D), f32)
    Wq = jax.random.normal(ks[0], (D, D), f32) * std
    bq = jax.random.normal(ks[1], (1, D), f32) * std
    Wkv = jax.random.normal(ks[2], (D, 2 * D), f32) * std
    bkv = jax.random.normal(ks[3], (1, 2 * D), f32) * std
    Wff = jax.random.normal(ks[4], (D, D), f32) * std
    bff = jax.random.normal(ks[5], (1, D), f32) * std
    g2 = jnp.ones((1, D), f32)
    b2 = jnp.zeros((1, D), f32)
    W1 = jax.random.normal(ks[6], (D, inner), f32) * std
    bb1 = jax.random.normal(ks[7], (1, inner), f32) * std
    W2 = jax.random.normal(ks[8], (inner, D), f32) * std
    bb2 = jax.random.normal(ks[9], (1, D), f32) * std
    return (g1, b1, Wq, bq, Wkv, bkv, Wff, bff, g2, b2, W1, bb1, W2, bb2)


def reference(seq_x, seq_y, params, num_heads, attn_scale):
    # Pure-JAX, full-f32 reference of the torch module's forward.
    (g1, b1, Wq, bq, Wkv, bkv, Wff, bff, g2, b2, W1, bb1, W2, bb2) = params

    def ln(v, g, b):
        mu = v.mean(-1, keepdims=True)
        var = ((v - mu) ** 2).mean(-1, keepdims=True)
        return (v - mu) / jnp.sqrt(var + LN_EPS) * g + b

    B, Sx, D = seq_x.shape
    Sy = seq_y.shape[1]
    H = num_heads
    dh = D // H
    lx = ln(seq_x, g1[0], b1[0])
    ly = ln(seq_y, g1[0], b1[0])
    q = lx @ Wq + bq[0]
    kv = ly @ Wkv + bkv[0]
    k, v = kv[..., :D], kv[..., D:]
    qh = q.reshape(B, Sx, H, dh).transpose(0, 2, 1, 3)
    kh = k.reshape(B, Sy, H, dh).transpose(0, 2, 1, 3)
    vh = v.reshape(B, Sy, H, dh).transpose(0, 2, 1, 3)
    sc = jnp.einsum('bhsd,bhnd->bhsn', kh, qh) * attn_scale
    w = jax.nn.softmax(sc, axis=-1)
    ctx = jnp.einsum('bhsn,bhsd->bhnd', w, vh)
    ctx = ctx.transpose(0, 2, 1, 3).reshape(B, Sx, D)
    attn_out = ctx @ Wff + bff[0]
    r = seq_x + attn_out
    z = ln(r, g2[0], b2[0])
    hdn = _gelu(z @ W1 + bb1[0])
    return z + hdn @ W2 + bb2[0]


if __name__ == "__main__":
    B, Sx, Sy, D, H = 2, 8, 16, 32, 8
    # MultiModalAttentionBlock passes scale=False to the attention module:
    # self.scale = hidden_size ** (-False) == 1.0 (no 1/sqrt(dh) scaling — intentional).
    scale_flag = False
    attn_scale = float(D) ** (-float(scale_flag))

    key = jax.random.PRNGKey(0)
    kx, ky, kp = jax.random.split(key, 3)
    seq_x = jax.random.normal(kx, (B, Sx, D), jnp.float32)
    seq_y = jax.random.normal(ky, (B, Sy, D), jnp.float32)
    params = init_params(kp, D)
    kparams = prepare_params(params, H)   # one-time: split KV, head-fold Wff, bf16 weights

    out = multimodal_attention_block(seq_x, seq_y, kparams,
                                     num_heads=H, attn_scale=attn_scale)
    out = jax.block_until_ready(out)

    ref = reference(seq_x, seq_y, params, H, attn_scale)
    assert out.shape == (B, Sx, D)
    # bf16 matmul operands (f32 accumulation) vs a full-f32 reference -> loose-ish tolerance.
    max_err = float(jnp.max(jnp.abs(out - ref)))
    assert bool(jnp.allclose(out, ref, atol=2e-2, rtol=2e-2)), (
        f"Pallas output mismatch vs reference (max abs err {max_err})")
    print("KERNEL_OK")
</pallas_src>

<mosaic_0001>
module attributes {stable_mosaic.version = 11 : i64} {
  func.func @mm_attention_block_kernel(%arg0: i32, %arg1: memref<1x8x32xf32, #tpu.memory_space<vmem>>, %arg2: memref<1x16x32xf32, #tpu.memory_space<vmem>>, %arg3: memref<1x32xf32, #tpu.memory_space<vmem>>, %arg4: memref<1x32xf32, #tpu.memory_space<vmem>>, %arg5: memref<32x32xbf16, #tpu.memory_space<vmem>>, %arg6: memref<1x32xf32, #tpu.memory_space<vmem>>, %arg7: memref<32x32xbf16, #tpu.memory_space<vmem>>, %arg8: memref<1x32xf32, #tpu.memory_space<vmem>>, %arg9: memref<32x32xbf16, #tpu.memory_space<vmem>>, %arg10: memref<1x32xf32, #tpu.memory_space<vmem>>, %arg11: memref<8x4x32xbf16, #tpu.memory_space<vmem>>, %arg12: memref<1x32xf32, #tpu.memory_space<vmem>>, %arg13: memref<1x32xf32, #tpu.memory_space<vmem>>, %arg14: memref<1x32xf32, #tpu.memory_space<vmem>>, %arg15: memref<32x128xbf16, #tpu.memory_space<vmem>>, %arg16: memref<1x128xf32, #tpu.memory_space<vmem>>, %arg17: memref<128x32xbf16, #tpu.memory_space<vmem>>, %arg18: memref<1x32xf32, #tpu.memory_space<vmem>>, %arg19: memref<1x8x32xf32, #tpu.memory_space<vmem>>) attributes {dimension_semantics = [#tpu.dimension_semantics<parallel>], iteration_bounds = array<i64: 2>, scalar_prefetch = 0 : i64, scratch_operands = 0 : i64, tpu.core_type = #tpu.core_type<tc>, window_params = [{transform_indices = @transform_0, window_bounds = array<i64: 1, 8, 32>}, {transform_indices = @transform_1, window_bounds = array<i64: 1, 16, 32>}, {pipeline_mode = #tpu.pipeline_mode<synchronous>, transform_indices = @transform_2, window_bounds = array<i64: 1, 32>}, {pipeline_mode = #tpu.pipeline_mode<synchronous>, transform_indices = @transform_3, window_bounds = array<i64: 1, 32>}, {pipeline_mode = #tpu.pipeline_mode<synchronous>, transform_indices = @transform_4, window_bounds = array<i64: 32, 32>}, {pipeline_mode = #tpu.pipeline_mode<synchronous>, transform_indices = @transform_5, window_bounds = array<i64: 1, 32>}, {pipeline_mode = #tpu.pipeline_mode<synchronous>, transform_indices = @transform_6, window_bounds = array<i64: 32, 32>}, {pipeline_mode = #tpu.pipeline_mode<synchronous>, transform_indices = @transform_7, window_bounds = array<i64: 1, 32>}, {pipeline_mode = #tpu.pipeline_mode<synchronous>, transform_indices = @transform_8, window_bounds = array<i64: 32, 32>}, {pipeline_mode = #tpu.pipeline_mode<synchronous>, transform_indices = @transform_9, window_bounds = array<i64: 1, 32>}, {pipeline_mode = #tpu.pipeline_mode<synchronous>, transform_indices = @transform_10, window_bounds = array<i64: 8, 4, 32>}, {pipeline_mode = #tpu.pipeline_mode<synchronous>, transform_indices = @transform_11, window_bounds = array<i64: 1, 32>}, {pipeline_mode = #tpu.pipeline_mode<synchronous>, transform_indices = @transform_12, window_bounds = array<i64: 1, 32>}, {pipeline_mode = #tpu.pipeline_mode<synchronous>, transform_indices = @transform_13, window_bounds = array<i64: 1, 32>}, {pipeline_mode = #tpu.pipeline_mode<synchronous>, transform_indices = @transform_14, window_bounds = array<i64: 32, 128>}, {pipeline_mode = #tpu.pipeline_mode<synchronous>, transform_indices = @transform_15, window_bounds = array<i64: 1, 128>}, {pipeline_mode = #tpu.pipeline_mode<synchronous>, transform_indices = @transform_16, window_bounds = array<i64: 128, 32>}, {pipeline_mode = #tpu.pipeline_mode<synchronous>, transform_indices = @transform_17, window_bounds = array<i64: 1, 32>}, {transform_indices = @transform_18, window_bounds = array<i64: 1, 8, 32>}]} {
    %c0 = arith.constant 0 : index
    %c0_0 = arith.constant 0 : index
    %c0_1 = arith.constant 0 : index
    %0 = vector.load %arg1[%c0, %c0_0, %c0_1] : memref<1x8x32xf32, #tpu.memory_space<vmem>>, vector<1x8x32xf32>
    %1 = vector.shape_cast %0 : vector<1x8x32xf32> to vector<8x32xf32>
    %c0_2 = arith.constant 0 : index
    %c0_3 = arith.constant 0 : index
    %c0_4 = arith.constant 0 : index
    %2 = vector.load %arg2[%c0_2, %c0_3, %c0_4] : memref<1x16x32xf32, #tpu.memory_space<vmem>>, vector<1x16x32xf32>
    %3 = vector.shape_cast %2 : vector<1x16x32xf32> to vector<16x32xf32>
    %c0_5 = arith.constant 0 : index
    %c0_6 = arith.constant 0 : index
    %4 = vector.load %arg3[%c0_5, %c0_6] : memref<1x32xf32, #tpu.memory_space<vmem>>, vector<1x32xf32>
    %5 = vector.shape_cast %4 : vector<1x32xf32> to vector<32xf32>
    %c0_7 = arith.constant 0 : index
    %c0_8 = arith.constant 0 : index
    %6 = vector.load %arg4[%c0_7, %c0_8] : memref<1x32xf32, #tpu.memory_space<vmem>>, vector<1x32xf32>
    %7 = vector.shape_cast %6 : vector<1x32xf32> to vector<32xf32>
    %cst = arith.constant dense<0.000000e+00> : vector<8xf32>
    %8 = vector.multi_reduction <add>, %1, %cst [1] : vector<8x32xf32> to vector<8xf32>
    %9 = vector.shape_cast %8 : vector<8xf32> to vector<8x1xf32>
    %cst_9 = arith.constant 3.200000e+01 : f32
    %10 = vector.broadcast %cst_9 : f32 to vector<8x1xf32>
    %11 = arith.divf %9, %10 : vector<8x1xf32>
    %12 = vector.broadcast %11 : vector<8x1xf32> to vector<8x32xf32>
    %13 = arith.subf %1, %12 : vector<8x32xf32>
    %14 = arith.mulf %13, %13 : vector<8x32xf32>
    %cst_10 = arith.constant dense<0.000000e+00> : vector<8xf32>
    %15 = vector.multi_reduction <add>, %14, %cst_10 [1] : vector<8x32xf32> to vector<8xf32>
    %16 = vector.shape_cast %15 : vector<8xf32> to vector<8x1xf32>
    %cst_11 = arith.constant 3.200000e+01 : f32
    %17 = vector.broadcast %cst_11 : f32 to vector<8x1xf32>
    %18 = arith.divf %16, %17 : vector<8x1xf32>
    %19 = vector.broadcast %11 : vector<8x1xf32> to vector<8x32xf32>
    %20 = arith.subf %1, %19 : vector<8x32xf32>
    %cst_12 = arith.constant 9.99999974E-6 : f32
    %21 = vector.broadcast %cst_12 : f32 to vector<8x1xf32>
    %22 = arith.addf %18, %21 : vector<8x1xf32>
    %23 = math.rsqrt %22 : vector<8x1xf32>
    %24 = vector.broadcast %23 : vector<8x1xf32> to vector<8x32xf32>
    %25 = arith.mulf %20, %24 : vector<8x32xf32>
    %26 = vector.shape_cast %5 : vector<32xf32> to vector<1x32xf32>
    %27 = vector.broadcast %26 : vector<1x32xf32> to vector<8x32xf32>
    %28 = arith.mulf %25, %27 : vector<8x32xf32>
    %29 = vector.shape_cast %7 : vector<32xf32> to vector<1x32xf32>
    %30 = vector.broadcast %29 : vector<1x32xf32> to vector<8x32xf32>
    %31 = arith.addf %28, %30 : vector<8x32xf32>
    %32 = arith.truncf %31 : vector<8x32xf32> to vector<8x32xbf16>
    %cst_13 = arith.constant dense<0.000000e+00> : vector<16xf32>
    %33 = vector.multi_reduction <add>, %3, %cst_13 [1] : vector<16x32xf32> to vector<16xf32>
    %34 = vector.shape_cast %33 : vector<16xf32> to vector<16x1xf32>
    %cst_14 = arith.constant 3.200000e+01 : f32
    %35 = vector.broadcast %cst_14 : f32 to vector<16x1xf32>
    %36 = arith.divf %34, %35 : vector<16x1xf32>
    %37 = vector.broadcast %36 : vector<16x1xf32> to vector<16x32xf32>
    %38 = arith.subf %3, %37 : vector<16x32xf32>
    %39 = arith.mulf %38, %38 : vector<16x32xf32>
    %cst_15 = arith.constant dense<0.000000e+00> : vector<16xf32>
    %40 = vector.multi_reduction <add>, %39, %cst_15 [1] : vector<16x32xf32> to vector<16xf32>
    %41 = vector.shape_cast %40 : vector<16xf32> to vector<16x1xf32>
    %cst_16 = arith.constant 3.200000e+01 : f32
    %42 = vector.broadcast %cst_16 : f32 to vector<16x1xf32>
    %43 = arith.divf %41, %42 : vector<16x1xf32>
    %44 = vector.broadcast %36 : vector<16x1xf32> to vector<16x32xf32>
    %45 = arith.subf %3, %44 : vector<16x32xf32>
    %cst_17 = arith.constant 9.99999974E-6 : f32
    %46 = vector.broadcast %cst_17 : f32 to vector<16x1xf32>
    %47 = arith.addf %43, %46 : vector<16x1xf32>
    %48 = math.rsqrt %47 : vector<16x1xf32>
    %49 = vector.broadcast %48 : vector<16x1xf32> to vector<16x32xf32>
    %50 = arith.mulf %45, %49 : vector<16x32xf32>
    %51 = vector.shape_cast %5 : vector<32xf32> to vector<1x32xf32>
    %52 = vector.broadcast %51 : vector<1x32xf32> to vector<16x32xf32>
    %53 = arith.mulf %50, %52 : vector<16x32xf32>
    %54 = vector.shape_cast %7 : vector<32xf32> to vector<1x32xf32>
    %55 = vector.broadcast %54 : vector<1x32xf32> to vector<16x32xf32>
    %56 = arith.addf %53, %55 : vector<16x32xf32>
    %57 = arith.truncf %56 : vector<16x32xf32> to vector<16x32xbf16>
    %c0_18 = arith.constant 0 : index
    %c0_19 = arith.constant 0 : index
    %58 = vector.load %arg5[%c0_18, %c0_19] : memref<32x32xbf16, #tpu.memory_space<vmem>>, vector<32x32xbf16>
    %cst_20 = arith.constant dense<0.000000e+00> : vector<8x32xf32>
    %59 = tpu.matmul %32, %58, %cst_20 {dimension_numbers = #tpu.dot_dimension_numbers<[1], [0], [0], [1], [0, 0, 1, 1], [], []>} : vector<8x32xbf16>, vector<32x32xbf16>, vector<8x32xf32> -> vector<8x32xf32>
    %c0_21 = arith.constant 0 : index
    %c0_22 = arith.constant 0 : index
    %60 = vector.load %arg6[%c0_21, %c0_22] : memref<1x32xf32, #tpu.memory_space<vmem>>, vector<1x32xf32>
    %61 = vector.shape_cast %60 : vector<1x32xf32> to vector<32xf32>
    %62 = vector.shape_cast %61 : vector<32xf32> to vector<1x32xf32>
    %63 = vector.broadcast %62 : vector<1x32xf32> to vector<8x32xf32>
    %64 = arith.addf %59, %63 : vector<8x32xf32>
    %c0_23 = arith.constant 0 : index
    %c0_24 = arith.constant 0 : index
    %65 = vector.load %arg7[%c0_23, %c0_24] : memref<32x32xbf16, #tpu.memory_space<vmem>>, vector<32x32xbf16>
    %cst_25 = arith.constant dense<0.000000e+00> : vector<16x32xf32>
    %66 = tpu.matmul %57, %65, %cst_25 {dimension_numbers = #tpu.dot_dimension_numbers<[1], [0], [0], [1], [0, 0, 1, 1], [], []>} : vector<16x32xbf16>, vector<32x32xbf16>, vector<16x32xf32> -> vector<16x32xf32>
    %c0_26 = arith.constant 0 : index
    %c0_27 = arith.constant 0 : index
    %67 = vector.load %arg8[%c0_26, %c0_27] : memref<1x32xf32, #tpu.memory_space<vmem>>, vector<1x32xf32>
    %68 = vector.shape_cast %67 : vector<1x32xf32> to vector<32xf32>
    %69 = vector.shape_cast %68 : vector<32xf32> to vector<1x32xf32>
    %70 = vector.broadcast %69 : vector<1x32xf32> to vector<16x32xf32>
    %71 = arith.addf %66, %70 : vector<16x32xf32>
    %c0_28 = arith.constant 0 : index
    %c0_29 = arith.constant 0 : index
    %72 = vector.load %arg9[%c0_28, %c0_29] : memref<32x32xbf16, #tpu.memory_space<vmem>>, vector<32x32xbf16>
    %cst_30 = arith.constant dense<0.000000e+00> : vector<16x32xf32>
    %73 = tpu.matmul %57, %72, %cst_30 {dimension_numbers = #tpu.dot_dimension_numbers<[1], [0], [0], [1], [0, 0, 1, 1], [], []>} : vector<16x32xbf16>, vector<32x32xbf16>, vector<16x32xf32> -> vector<16x32xf32>
    %c0_31 = arith.constant 0 : index
    %c0_32 = arith.constant 0 : index
    %74 = vector.load %arg10[%c0_31, %c0_32] : memref<1x32xf32, #tpu.memory_space<vmem>>, vector<1x32xf32>
    %75 = vector.shape_cast %74 : vector<1x32xf32> to vector<32xf32>
    %76 = vector.shape_cast %75 : vector<32xf32> to vector<1x32xf32>
    %77 = vector.broadcast %76 : vector<1x32xf32> to vector<16x32xf32>
    %78 = arith.addf %73, %77 : vector<16x32xf32>
    %79 = vector.shape_cast %64 : vector<8x32xf32> to vector<1x8x32xf32>
    %80 = arith.truncf %79 : vector<1x8x32xf32> to vector<1x8x32xbf16>
    %81 = vector.shape_cast %71 : vector<16x32xf32> to vector<1x16x32xf32>
    %82 = arith.truncf %81 : vector<1x16x32xf32> to vector<1x16x32xbf16>
    %83 = vector.shape_cast %78 : vector<16x32xf32> to vector<1x16x32xf32>
    %84 = arith.truncf %83 : vector<1x16x32xf32> to vector<1x16x32xbf16>
    %c0_33 = arith.constant 0 : index
    %c0_34 = arith.constant 0 : index
    %85 = vector.load %arg12[%c0_33, %c0_34] : memref<1x32xf32, #tpu.memory_space<vmem>>, vector<1x32xf32>
    %86 = vector.shape_cast %85 : vector<1x32xf32> to vector<32xf32>
    %87 = vector.shape_cast %86 : vector<32xf32> to vector<1x32xf32>
    %88 = vector.broadcast %87 : vector<1x32xf32> to vector<8x32xf32>
    %89 = arith.addf %1, %88 : vector<8x32xf32>
    %90 = vector.extract_strided_slice %80 {offsets = [0, 0, 0], sizes = [1, 8, 4], strides = [1, 1, 1]} : vector<1x8x32xbf16> to vector<1x8x4xbf16>
    %91 = vector.extract_strided_slice %82 {offsets = [0, 0, 0], sizes = [1, 16, 4], strides = [1, 1, 1]} : vector<1x16x32xbf16> to vector<1x16x4xbf16>
    %92 = vector.extract_strided_slice %84 {offsets = [0, 0, 0], sizes = [1, 16, 4], strides = [1, 1, 1]} : vector<1x16x32xbf16> to vector<1x16x4xbf16>
    %cst_35 = arith.constant dense<0.000000e+00> : vector<1x8x16xf32>
    %93 = tpu.matmul %90, %91, %cst_35 {dimension_numbers = #tpu.dot_dimension_numbers<[2], [2], [1], [1], [0, 0, 0, 1, 1, 1], [0], [0]>} : vector<1x8x4xbf16>, vector<1x16x4xbf16>, vector<1x8x16xf32> -> vector<1x8x16xf32>
    %cst_36 = arith.constant dense<0xFF800000> : vector<1x16xf32>
    %94 = vector.multi_reduction <maximumf>, %93, %cst_36 [1] : vector<1x8x16xf32> to vector<1x16xf32>
    %95 = vector.shape_cast %94 : vector<1x16xf32> to vector<1x1x16xf32>
    %96 = vector.broadcast %95 : vector<1x1x16xf32> to vector<1x8x16xf32>
    %97 = arith.subf %93, %96 : vector<1x8x16xf32>
    %98 = math.exp %97 : vector<1x8x16xf32>
    %cst_37 = arith.constant dense<0.000000e+00> : vector<1x16xf32>
    %99 = vector.multi_reduction <add>, %98, %cst_37 [1] : vector<1x8x16xf32> to vector<1x16xf32>
    %100 = vector.shape_cast %99 : vector<1x16xf32> to vector<1x1x16xf32>
    %101 = tpu.reciprocal %100 {approx = true} : vector<1x1x16xf32> -> vector<1x1x16xf32>
    %102 = vector.broadcast %101 : vector<1x1x16xf32> to vector<1x8x16xf32>
    %103 = arith.mulf %98, %102 : vector<1x8x16xf32>
    %104 = arith.truncf %103 : vector<1x8x16xf32> to vector<1x8x16xbf16>
    %cst_38 = arith.constant dense<0.000000e+00> : vector<1x8x4xf32>
    %105 = tpu.matmul %104, %92, %cst_38 {dimension_numbers = #tpu.dot_dimension_numbers<[2], [1], [1], [2], [0, 0, 0, 1, 1, 2], [0], [0]>} : vector<1x8x16xbf16>, vector<1x16x4xbf16>, vector<1x8x4xf32> -> vector<1x8x4xf32>
    %106 = vector.shape_cast %105 : vector<1x8x4xf32> to vector<8x4xf32>
    %107 = arith.truncf %106 : vector<8x4xf32> to vector<8x4xbf16>
    %c0_39 = arith.constant 0 : index
    %c0_40 = arith.constant 0 : index
    %c0_41 = arith.constant 0 : index
    %108 = vector.load %arg11[%c0_39, %c0_40, %c0_41] : memref<8x4x32xbf16, #tpu.memory_space<vmem>>, vector<1x4x32xbf16>
    %109 = vector.shape_cast %108 : vector<1x4x32xbf16> to vector<4x32xbf16>
    %cst_42 = arith.constant dense<0.000000e+00> : vector<8x32xf32>
    %110 = tpu.matmul %107, %109, %cst_42 {dimension_numbers = #tpu.dot_dimension_numbers<[1], [0], [0], [1], [0, 0, 1, 1], [], []>} : vector<8x4xbf16>, vector<4x32xbf16>, vector<8x32xf32> -> vector<8x32xf32>
    %111 = arith.addf %89, %110 : vector<8x32xf32>
    %112 = vector.extract_strided_slice %80 {offsets = [0, 0, 4], sizes = [1, 8, 4], strides = [1, 1, 1]} : vector<1x8x32xbf16> to vector<1x8x4xbf16>
    %113 = vector.extract_strided_slice %82 {offsets = [0, 0, 4], sizes = [1, 16, 4], strides = [1, 1, 1]} : vector<1x16x32xbf16> to vector<1x16x4xbf16>
    %114 = vector.extract_strided_slice %84 {offsets = [0, 0, 4], sizes = [1, 16, 4], strides = [1, 1, 1]} : vector<1x16x32xbf16> to vector<1x16x4xbf16>
    %cst_43 = arith.constant dense<0.000000e+00> : vector<1x8x16xf32>
    %115 = tpu.matmul %112, %113, %cst_43 {dimension_numbers = #tpu.dot_dimension_numbers<[2], [2], [1], [1], [0, 0, 0, 1, 1, 1], [0], [0]>} : vector<1x8x4xbf16>, vector<1x16x4xbf16>, vector<1x8x16xf32> -> vector<1x8x16xf32>
    %cst_44 = arith.constant dense<0xFF800000> : vector<1x16xf32>
    %116 = vector.multi_reduction <maximumf>, %115, %cst_44 [1] : vector<1x8x16xf32> to vector<1x16xf32>
    %117 = vector.shape_cast %116 : vector<1x16xf32> to vector<1x1x16xf32>
    %118 = vector.broadcast %117 : vector<1x1x16xf32> to vector<1x8x16xf32>
    %119 = arith.subf %115, %118 : vector<1x8x16xf32>
    %120 = math.exp %119 : vector<1x8x16xf32>
    %cst_45 = arith.constant dense<0.000000e+00> : vector<1x16xf32>
    %121 = vector.multi_reduction <add>, %120, %cst_45 [1] : vector<1x8x16xf32> to vector<1x16xf32>
    %122 = vector.shape_cast %121 : vector<1x16xf32> to vector<1x1x16xf32>
    %123 = tpu.reciprocal %122 {approx = true} : vector<1x1x16xf32> -> vector<1x1x16xf32>
    %124 = vector.broadcast %123 : vector<1x1x16xf32> to vector<1x8x16xf32>
    %125 = arith.mulf %120, %124 : vector<1x8x16xf32>
    %126 = arith.truncf %125 : vector<1x8x16xf32> to vector<1x8x16xbf16>
    %cst_46 = arith.constant dense<0.000000e+00> : vector<1x8x4xf32>
    %127 = tpu.matmul %126, %114, %cst_46 {dimension_numbers = #tpu.dot_dimension_numbers<[2], [1], [1], [2], [0, 0, 0, 1, 1, 2], [0], [0]>} : vector<1x8x16xbf16>, vector<1x16x4xbf16>, vector<1x8x4xf32> -> vector<1x8x4xf32>
    %128 = vector.shape_cast %127 : vector<1x8x4xf32> to vector<8x4xf32>
    %129 = arith.truncf %128 : vector<8x4xf32> to vector<8x4xbf16>
    %c1 = arith.constant 1 : index
    %c0_47 = arith.constant 0 : index
    %c0_48 = arith.constant 0 : index
    %130 = vector.load %arg11[%c1, %c0_47, %c0_48] : memref<8x4x32xbf16, #tpu.memory_space<vmem>>, vector<1x4x32xbf16>
    %131 = vector.shape_cast %130 : vector<1x4x32xbf16> to vector<4x32xbf16>
    %cst_49 = arith.constant dense<0.000000e+00> : vector<8x32xf32>
    %132 = tpu.matmul %129, %131, %cst_49 {dimension_numbers = #tpu.dot_dimension_numbers<[1], [0], [0], [1], [0, 0, 1, 1], [], []>} : vector<8x4xbf16>, vector<4x32xbf16>, vector<8x32xf32> -> vector<8x32xf32>
    %133 = arith.addf %111, %132 : vector<8x32xf32>
    %134 = vector.extract_strided_slice %80 {offsets = [0, 0, 8], sizes = [1, 8, 4], strides = [1, 1, 1]} : vector<1x8x32xbf16> to vector<1x8x4xbf16>
    %135 = vector.extract_strided_slice %82 {offsets = [0, 0, 8], sizes = [1, 16, 4], strides = [1, 1, 1]} : vector<1x16x32xbf16> to vector<1x16x4xbf16>
    %136 = vector.extract_strided_slice %84 {offsets = [0, 0, 8], sizes = [1, 16, 4], strides = [1, 1, 1]} : vector<1x16x32xbf16> to vector<1x16x4xbf16>
    %cst_50 = arith.constant dense<0.000000e+00> : vector<1x8x16xf32>
    %137 = tpu.matmul %134, %135, %cst_50 {dimension_numbers = #tpu.dot_dimension_numbers<[2], [2], [1], [1], [0, 0, 0, 1, 1, 1], [0], [0]>} : vector<1x8x4xbf16>, vector<1x16x4xbf16>, vector<1x8x16xf32> -> vector<1x8x16xf32>
    %cst_51 = arith.constant dense<0xFF800000> : vector<1x16xf32>
    %138 = vector.multi_reduction <maximumf>, %137, %cst_51 [1] : vector<1x8x16xf32> to vector<1x16xf32>
    %139 = vector.shape_cast %138 : vector<1x16xf32> to vector<1x1x16xf32>
    %140 = vector.broadcast %139 : vector<1x1x16xf32> to vector<1x8x16xf32>
    %141 = arith.subf %137, %140 : vector<1x8x16xf32>
    %142 = math.exp %141 : vector<1x8x16xf32>
    %cst_52 = arith.constant dense<0.000000e+00> : vector<1x16xf32>
    %143 = vector.multi_reduction <add>, %142, %cst_52 [1] : vector<1x8x16xf32> to vector<1x16xf32>
    %144 = vector.shape_cast %143 : vector<1x16xf32> to vector<1x1x16xf32>
    %145 = tpu.reciprocal %144 {approx = true} : vector<1x1x16xf32> -> vector<1x1x16xf32>
    %146 = vector.broadcast %145 : vector<1x1x16xf32> to vector<1x8x16xf32>
    %147 = arith.mulf %142, %146 : vector<1x8x16xf32>
    %148 = arith.truncf %147 : vector<1x8x16xf32> to vector<1x8x16xbf16>
    %cst_53 = arith.constant dense<0.000000e+00> : vector<1x8x4xf32>
    %149 = tpu.matmul %148, %136, %cst_53 {dimension_numbers = #tpu.dot_dimension_numbers<[2], [1], [1], [2], [0, 0, 0, 1, 1, 2], [0], [0]>} : vector<1x8x16xbf16>, vector<1x16x4xbf16>, vector<1x8x4xf32> -> vector<1x8x4xf32>
    %150 = vector.shape_cast %149 : vector<1x8x4xf32> to vector<8x4xf32>
    %151 = arith.truncf %150 : vector<8x4xf32> to vector<8x4xbf16>
    %c2 = arith.constant 2 : index
    %c0_54 = arith.constant 0 : index
    %c0_55 = arith.constant 0 : index
    %152 = vector.load %arg11[%c2, %c0_54, %c0_55] : memref<8x4x32xbf16, #tpu.memory_space<vmem>>, vector<1x4x32xbf16>
    %153 = vector.shape_cast %152 : vector<1x4x32xbf16> to vector<4x32xbf16>
    %cst_56 = arith.constant dense<0.000000e+00> : vector<8x32xf32>
    %154 = tpu.matmul %151, %153, %cst_56 {dimension_numbers = #tpu.dot_dimension_numbers<[1], [0], [0], [1], [0, 0, 1, 1], [], []>} : vector<8x4xbf16>, vector<4x32xbf16>, vector<8x32xf32> -> vector<8x32xf32>
    %155 = arith.addf %133, %154 : vector<8x32xf32>
    %156 = vector.extract_strided_slice %80 {offsets = [0, 0, 12], sizes = [1, 8, 4], strides = [1, 1, 1]} : vector<1x8x32xbf16> to vector<1x8x4xbf16>
    %157 = vector.extract_strided_slice %82 {offsets = [0, 0, 12], sizes = [1, 16, 4], strides = [1, 1, 1]} : vector<1x16x32xbf16> to vector<1x16x4xbf16>
    %158 = vector.extract_strided_slice %84 {offsets = [0, 0, 12], sizes = [1, 16, 4], strides = [1, 1, 1]} : vector<1x16x32xbf16> to vector<1x16x4xbf16>
    %cst_57 = arith.constant dense<0.000000e+00> : vector<1x8x16xf32>
    %159 = tpu.matmul %156, %157, %cst_57 {dimension_numbers = #tpu.dot_dimension_numbers<[2], [2], [1], [1], [0, 0, 0, 1, 1, 1], [0], [0]>} : vector<1x8x4xbf16>, vector<1x16x4xbf16>, vector<1x8x16xf32> -> vector<1x8x16xf32>
    %cst_58 = arith.constant dense<0xFF800000> : vector<1x16xf32>
    %160 = vector.multi_reduction <maximumf>, %159, %cst_58 [1] : vector<1x8x16xf32> to vector<1x16xf32>
    %161 = vector.shape_cast %160 : vector<1x16xf32> to vector<1x1x16xf32>
    %162 = vector.broadcast %161 : vector<1x1x16xf32> to vector<1x8x16xf32>
    %163 = arith.subf %159, %162 : vector<1x8x16xf32>
    %164 = math.exp %163 : vector<1x8x16xf32>
    %cst_59 = arith.constant dense<0.000000e+00> : vector<1x16xf32>
    %165 = vector.multi_reduction <add>, %164, %cst_59 [1] : vector<1x8x16xf32> to vector<1x16xf32>
    %166 = vector.shape_cast %165 : vector<1x16xf32> to vector<1x1x16xf32>
    %167 = tpu.reciprocal %166 {approx = true} : vector<1x1x16xf32> -> vector<1x1x16xf32>
    %168 = vector.broadcast %167 : vector<1x1x16xf32> to vector<1x8x16xf32>
    %169 = arith.mulf %164, %168 : vector<1x8x16xf32>
    %170 = arith.truncf %169 : vector<1x8x16xf32> to vector<1x8x16xbf16>
    %cst_60 = arith.constant dense<0.000000e+00> : vector<1x8x4xf32>
    %171 = tpu.matmul %170, %158, %cst_60 {dimension_numbers = #tpu.dot_dimension_numbers<[2], [1], [1], [2], [0, 0, 0, 1, 1, 2], [0], [0]>} : vector<1x8x16xbf16>, vector<1x16x4xbf16>, vector<1x8x4xf32> -> vector<1x8x4xf32>
    %172 = vector.shape_cast %171 : vector<1x8x4xf32> to vector<8x4xf32>
    %173 = arith.truncf %172 : vector<8x4xf32> to vector<8x4xbf16>
    %c3 = arith.constant 3 : index
    %c0_61 = arith.constant 0 : index
    %c0_62 = arith.constant 0 : index
    %174 = vector.load %arg11[%c3, %c0_61, %c0_62] : memref<8x4x32xbf16, #tpu.memory_space<vmem>>, vector<1x4x32xbf16>
    %175 = vector.shape_cast %174 : vector<1x4x32xbf16> to vector<4x32xbf16>
    %cst_63 = arith.constant dense<0.000000e+00> : vector<8x32xf32>
    %176 = tpu.matmul %173, %175, %cst_63 {dimension_numbers = #tpu.dot_dimension_numbers<[1], [0], [0], [1], [0, 0, 1, 1], [], []>} : vector<8x4xbf16>, vector<4x32xbf16>, vector<8x32xf32> -> vector<8x32xf32>
    %177 = arith.addf %155, %176 : vector<8x32xf32>
    %178 = vector.extract_strided_slice %80 {offsets = [0, 0, 16], sizes = [1, 8, 4], strides = [1, 1, 1]} : vector<1x8x32xbf16> to vector<1x8x4xbf16>
    %179 = vector.extract_strided_slice %82 {offsets = [0, 0, 16], sizes = [1, 16, 4], strides = [1, 1, 1]} : vector<1x16x32xbf16> to vector<1x16x4xbf16>
    %180 = vector.extract_strided_slice %84 {offsets = [0, 0, 16], sizes = [1, 16, 4], strides = [1, 1, 1]} : vector<1x16x32xbf16> to vector<1x16x4xbf16>
    %cst_64 = arith.constant dense<0.000000e+00> : vector<1x8x16xf32>
    %181 = tpu.matmul %178, %179, %cst_64 {dimension_numbers = #tpu.dot_dimension_numbers<[2], [2], [1], [1], [0, 0, 0, 1, 1, 1], [0], [0]>} : vector<1x8x4xbf16>, vector<1x16x4xbf16>, vector<1x8x16xf32> -> vector<1x8x16xf32>
    %cst_65 = arith.constant dense<0xFF800000> : vector<1x16xf32>
    %182 = vector.multi_reduction <maximumf>, %181, %cst_65 [1] : vector<1x8x16xf32> to vector<1x16xf32>
    %183 = vector.shape_cast %182 : vector<1x16xf32> to vector<1x1x16xf32>
    %184 = vector.broadcast %183 : vector<1x1x16xf32> to vector<1x8x16xf32>
    %185 = arith.subf %181, %184 : vector<1x8x16xf32>
    %186 = math.exp %185 : vector<1x8x16xf32>
    %cst_66 = arith.constant dense<0.000000e+00> : vector<1x16xf32>
    %187 = vector.multi_reduction <add>, %186, %cst_66 [1] : vector<1x8x16xf32> to vector<1x16xf32>
    %188 = vector.shape_cast %187 : vector<1x16xf32> to vector<1x1x16xf32>
    %189 = tpu.reciprocal %188 {approx = true} : vector<1x1x16xf32> -> vector<1x1x16xf32>
    %190 = vector.broadcast %189 : vector<1x1x16xf32> to vector<1x8x16xf32>
    %191 = arith.mulf %186, %190 : vector<1x8x16xf32>
    %192 = arith.truncf %191 : vector<1x8x16xf32> to vector<1x8x16xbf16>
    %cst_67 = arith.constant dense<0.000000e+00> : vector<1x8x4xf32>
    %193 = tpu.matmul %192, %180, %cst_67 {dimension_numbers = #tpu.dot_dimension_numbers<[2], [1], [1], [2], [0, 0, 0, 1, 1, 2], [0], [0]>} : vector<1x8x16xbf16>, vector<1x16x4xbf16>, vector<1x8x4xf32> -> vector<1x8x4xf32>
    %194 = vector.shape_cast %193 : vector<1x8x4xf32> to vector<8x4xf32>
    %195 = arith.truncf %194 : vector<8x4xf32> to vector<8x4xbf16>
    %c4 = arith.constant 4 : index
    %c0_68 = arith.constant 0 : index
    %c0_69 = arith.constant 0 : index
    %196 = vector.load %arg11[%c4, %c0_68, %c0_69] : memref<8x4x32xbf16, #tpu.memory_space<vmem>>, vector<1x4x32xbf16>
    %197 = vector.shape_cast %196 : vector<1x4x32xbf16> to vector<4x32xbf16>
    %cst_70 = arith.constant dense<0.000000e+00> : vector<8x32xf32>
    %198 = tpu.matmul %195, %197, %cst_70 {dimension_numbers = #tpu.dot_dimension_numbers<[1], [0], [0], [1], [0, 0, 1, 1], [], []>} : vector<8x4xbf16>, vector<4x32xbf16>, vector<8x32xf32> -> vector<8x32xf32>
    %199 = arith.addf %177, %198 : vector<8x32xf32>
    %200 = vector.extract_strided_slice %80 {offsets = [0, 0, 20], sizes = [1, 8, 4], strides = [1, 1, 1]} : vector<1x8x32xbf16> to vector<1x8x4xbf16>
    %201 = vector.extract_strided_slice %82 {offsets = [0, 0, 20], sizes = [1, 16, 4], strides = [1, 1, 1]} : vector<1x16x32xbf16> to vector<1x16x4xbf16>
    %202 = vector.extract_strided_slice %84 {offsets = [0, 0, 20], sizes = [1, 16, 4], strides = [1, 1, 1]} : vector<1x16x32xbf16> to vector<1x16x4xbf16>
    %cst_71 = arith.constant dense<0.000000e+00> : vector<1x8x16xf32>
    %203 = tpu.matmul %200, %201, %cst_71 {dimension_numbers = #tpu.dot_dimension_numbers<[2], [2], [1], [1], [0, 0, 0, 1, 1, 1], [0], [0]>} : vector<1x8x4xbf16>, vector<1x16x4xbf16>, vector<1x8x16xf32> -> vector<1x8x16xf32>
    %cst_72 = arith.constant dense<0xFF800000> : vector<1x16xf32>
    %204 = vector.multi_reduction <maximumf>, %203, %cst_72 [1] : vector<1x8x16xf32> to vector<1x16xf32>
    %205 = vector.shape_cast %204 : vector<1x16xf32> to vector<1x1x16xf32>
    %206 = vector.broadcast %205 : vector<1x1x16xf32> to vector<1x8x16xf32>
    %207 = arith.subf %203, %206 : vector<1x8x16xf32>
    %208 = math.exp %207 : vector<1x8x16xf32>
    %cst_73 = arith.constant dense<0.000000e+00> : vector<1x16xf32>
    %209 = vector.multi_reduction <add>, %208, %cst_73 [1] : vector<1x8x16xf32> to vector<1x16xf32>
    %210 = vector.shape_cast %209 : vector<1x16xf32> to vector<1x1x16xf32>
    %211 = tpu.reciprocal %210 {approx = true} : vector<1x1x16xf32> -> vector<1x1x16xf32>
    %212 = vector.broadcast %211 : vector<1x1x16xf32> to vector<1x8x16xf32>
    %213 = arith.mulf %208, %212 : vector<1x8x16xf32>
    %214 = arith.truncf %213 : vector<1x8x16xf32> to vector<1x8x16xbf16>
    %cst_74 = arith.constant dense<0.000000e+00> : vector<1x8x4xf32>
    %215 = tpu.matmul %214, %202, %cst_74 {dimension_numbers = #tpu.dot_dimension_numbers<[2], [1], [1], [2], [0, 0, 0, 1, 1, 2], [0], [0]>} : vector<1x8x16xbf16>, vector<1x16x4xbf16>, vector<1x8x4xf32> -> vector<1x8x4xf32>
    %216 = vector.shape_cast %215 : vector<1x8x4xf32> to vector<8x4xf32>
    %217 = arith.truncf %216 : vector<8x4xf32> to vector<8x4xbf16>
    %c5 = arith.constant 5 : index
    %c0_75 = arith.constant 0 : index
    %c0_76 = arith.constant 0 : index
    %218 = vector.load %arg11[%c5, %c0_75, %c0_76] : memref<8x4x32xbf16, #tpu.memory_space<vmem>>, vector<1x4x32xbf16>
    %219 = vector.shape_cast %218 : vector<1x4x32xbf16> to vector<4x32xbf16>
    %cst_77 = arith.constant dense<0.000000e+00> : vector<8x32xf32>
    %220 = tpu.matmul %217, %219, %cst_77 {dimension_numbers = #tpu.dot_dimension_numbers<[1], [0], [0], [1], [0, 0, 1, 1], [], []>} : vector<8x4xbf16>, vector<4x32xbf16>, vector<8x32xf32> -> vector<8x32xf32>
    %221 = arith.addf %199, %220 : vector<8x32xf32>
    %222 = vector.extract_strided_slice %80 {offsets = [0, 0, 24], sizes = [1, 8, 4], strides = [1, 1, 1]} : vector<1x8x32xbf16> to vector<1x8x4xbf16>
    %223 = vector.extract_strided_slice %82 {offsets = [0, 0, 24], sizes = [1, 16, 4], strides = [1, 1, 1]} : vector<1x16x32xbf16> to vector<1x16x4xbf16>
    %224 = vector.extract_strided_slice %84 {offsets = [0, 0, 24], sizes = [1, 16, 4], strides = [1, 1, 1]} : vector<1x16x32xbf16> to vector<1x16x4xbf16>
    %cst_78 = arith.constant dense<0.000000e+00> : vector<1x8x16xf32>
    %225 = tpu.matmul %222, %223, %cst_78 {dimension_numbers = #tpu.dot_dimension_numbers<[2], [2], [1], [1], [0, 0, 0, 1, 1, 1], [0], [0]>} : vector<1x8x4xbf16>, vector<1x16x4xbf16>, vector<1x8x16xf32> -> vector<1x8x16xf32>
    %cst_79 = arith.constant dense<0xFF800000> : vector<1x16xf32>
    %226 = vector.multi_reduction <maximumf>, %225, %cst_79 [1] : vector<1x8x16xf32> to vector<1x16xf32>
    %227 = vector.shape_cast %226 : vector<1x16xf32> to vector<1x1x16xf32>
    %228 = vector.broadcast %227 : vector<1x1x16xf32> to vector<1x8x16xf32>
    %229 = arith.subf %225, %228 : vector<1x8x16xf32>
    %230 = math.exp %229 : vector<1x8x16xf32>
    %cst_80 = arith.constant dense<0.000000e+00> : vector<1x16xf32>
    %231 = vector.multi_reduction <add>, %230, %cst_80 [1] : vector<1x8x16xf32> to vector<1x16xf32>
    %232 = vector.shape_cast %231 : vector<1x16xf32> to vector<1x1x16xf32>
    %233 = tpu.reciprocal %232 {approx = true} : vector<1x1x16xf32> -> vector<1x1x16xf32>
    %234 = vector.broadcast %233 : vector<1x1x16xf32> to vector<1x8x16xf32>
    %235 = arith.mulf %230, %234 : vector<1x8x16xf32>
    %236 = arith.truncf %235 : vector<1x8x16xf32> to vector<1x8x16xbf16>
    %cst_81 = arith.constant dense<0.000000e+00> : vector<1x8x4xf32>
    %237 = tpu.matmul %236, %224, %cst_81 {dimension_numbers = #tpu.dot_dimension_numbers<[2], [1], [1], [2], [0, 0, 0, 1, 1, 2], [0], [0]>} : vector<1x8x16xbf16>, vector<1x16x4xbf16>, vector<1x8x4xf32> -> vector<1x8x4xf32>
    %238 = vector.shape_cast %237 : vector<1x8x4xf32> to vector<8x4xf32>
    %239 = arith.truncf %238 : vector<8x4xf32> to vector<8x4xbf16>
    %c6 = arith.constant 6 : index
    %c0_82 = arith.constant 0 : index
    %c0_83 = arith.constant 0 : index
    %240 = vector.load %arg11[%c6, %c0_82, %c0_83] : memref<8x4x32xbf16, #tpu.memory_space<vmem>>, vector<1x4x32xbf16>
    %241 = vector.shape_cast %240 : vector<1x4x32xbf16> to vector<4x32xbf16>
    %cst_84 = arith.constant dense<0.000000e+00> : vector<8x32xf32>
    %242 = tpu.matmul %239, %241, %cst_84 {dimension_numbers = #tpu.dot_dimension_numbers<[1], [0], [0], [1], [0, 0, 1, 1], [], []>} : vector<8x4xbf16>, vector<4x32xbf16>, vector<8x32xf32> -> vector<8x32xf32>
    %243 = arith.addf %221, %242 : vector<8x32xf32>
    %244 = vector.extract_strided_slice %80 {offsets = [0, 0, 28], sizes = [1, 8, 4], strides = [1, 1, 1]} : vector<1x8x32xbf16> to vector<1x8x4xbf16>
    %245 = vector.extract_strided_slice %82 {offsets = [0, 0, 28], sizes = [1, 16, 4], strides = [1, 1, 1]} : vector<1x16x32xbf16> to vector<1x16x4xbf16>
    %246 = vector.extract_strided_slice %84 {offsets = [0, 0, 28], sizes = [1, 16, 4], strides = [1, 1, 1]} : vector<1x16x32xbf16> to vector<1x16x4xbf16>
    %cst_85 = arith.constant dense<0.000000e+00> : vector<1x8x16xf32>
    %247 = tpu.matmul %244, %245, %cst_85 {dimension_numbers = #tpu.dot_dimension_numbers<[2], [2], [1], [1], [0, 0, 0, 1, 1, 1], [0], [0]>} : vector<1x8x4xbf16>, vector<1x16x4xbf16>, vector<1x8x16xf32> -> vector<1x8x16xf32>
    %cst_86 = arith.constant dense<0xFF800000> : vector<1x16xf32>
    %248 = vector.multi_reduction <maximumf>, %247, %cst_86 [1] : vector<1x8x16xf32> to vector<1x16xf32>
    %249 = vector.shape_cast %248 : vector<1x16xf32> to vector<1x1x16xf32>
    %250 = vector.broadcast %249 : vector<1x1x16xf32> to vector<1x8x16xf32>
    %251 = arith.subf %247, %250 : vector<1x8x16xf32>
    %252 = math.exp %251 : vector<1x8x16xf32>
    %cst_87 = arith.constant dense<0.000000e+00> : vector<1x16xf32>
    %253 = vector.multi_reduction <add>, %252, %cst_87 [1] : vector<1x8x16xf32> to vector<1x16xf32>
    %254 = vector.shape_cast %253 : vector<1x16xf32> to vector<1x1x16xf32>
    %255 = tpu.reciprocal %254 {approx = true} : vector<1x1x16xf32> -> vector<1x1x16xf32>
    %256 = vector.broadcast %255 : vector<1x1x16xf32> to vector<1x8x16xf32>
    %257 = arith.mulf %252, %256 : vector<1x8x16xf32>
    %258 = arith.truncf %257 : vector<1x8x16xf32> to vector<1x8x16xbf16>
    %cst_88 = arith.constant dense<0.000000e+00> : vector<1x8x4xf32>
    %259 = tpu.matmul %258, %246, %cst_88 {dimension_numbers = #tpu.dot_dimension_numbers<[2], [1], [1], [2], [0, 0, 0, 1, 1, 2], [0], [0]>} : vector<1x8x16xbf16>, vector<1x16x4xbf16>, vector<1x8x4xf32> -> vector<1x8x4xf32>
    %260 = vector.shape_cast %259 : vector<1x8x4xf32> to vector<8x4xf32>
    %261 = arith.truncf %260 : vector<8x4xf32> to vector<8x4xbf16>
    %c7 = arith.constant 7 : index
    %c0_89 = arith.constant 0 : index
    %c0_90 = arith.constant 0 : index
    %262 = vector.load %arg11[%c7, %c0_89, %c0_90] : memref<8x4x32xbf16, #tpu.memory_space<vmem>>, vector<1x4x32xbf16>
    %263 = vector.shape_cast %262 : vector<1x4x32xbf16> to vector<4x32xbf16>
    %cst_91 = arith.constant dense<0.000000e+00> : vector<8x32xf32>
    %264 = tpu.matmul %261, %263, %cst_91 {dimension_numbers = #tpu.dot_dimension_numbers<[1], [0], [0], [1], [0, 0, 1, 1], [], []>} : vector<8x4xbf16>, vector<4x32xbf16>, vector<8x32xf32> -> vector<8x32xf32>
    %265 = arith.addf %243, %264 : vector<8x32xf32>
    %c0_92 = arith.constant 0 : index
    %c0_93 = arith.constant 0 : index
    %266 = vector.load %arg13[%c0_92, %c0_93] : memref<1x32xf32, #tpu.memory_space<vmem>>, vector<1x32xf32>
    %267 = vector.shape_cast %266 : vector<1x32xf32> to vector<32xf32>
    %c0_94 = arith.constant 0 : index
    %c0_95 = arith.constant 0 : index
    %268 = vector.load %arg14[%c0_94, %c0_95] : memref<1x32xf32, #tpu.memory_space<vmem>>, vector<1x32xf32>
    %269 = vector.shape_cast %268 : vector<1x32xf32> to vector<32xf32>
    %cst_96 = arith.constant dense<0.000000e+00> : vector<8xf32>
    %270 = vector.multi_reduction <add>, %265, %cst_96 [1] : vector<8x32xf32> to vector<8xf32>
    %271 = vector.shape_cast %270 : vector<8xf32> to vector<8x1xf32>
    %cst_97 = arith.constant 3.200000e+01 : f32
    %272 = vector.broadcast %cst_97 : f32 to vector<8x1xf32>
    %273 = arith.divf %271, %272 : vector<8x1xf32>
    %274 = vector.broadcast %273 : vector<8x1xf32> to vector<8x32xf32>
    %275 = arith.subf %265, %274 : vector<8x32xf32>
    %276 = arith.mulf %275, %275 : vector<8x32xf32>
    %cst_98 = arith.constant dense<0.000000e+00> : vector<8xf32>
    %277 = vector.multi_reduction <add>, %276, %cst_98 [1] : vector<8x32xf32> to vector<8xf32>
    %278 = vector.shape_cast %277 : vector<8xf32> to vector<8x1xf32>
    %cst_99 = arith.constant 3.200000e+01 : f32
    %279 = vector.broadcast %cst_99 : f32 to vector<8x1xf32>
    %280 = arith.divf %278, %279 : vector<8x1xf32>
    %281 = vector.broadcast %273 : vector<8x1xf32> to vector<8x32xf32>
    %282 = arith.subf %265, %281 : vector<8x32xf32>
    %cst_100 = arith.constant 9.99999974E-6 : f32
    %283 = vector.broadcast %cst_100 : f32 to vector<8x1xf32>
    %284 = arith.addf %280, %283 : vector<8x1xf32>
    %285 = math.rsqrt %284 : vector<8x1xf32>
    %286 = vector.broadcast %285 : vector<8x1xf32> to vector<8x32xf32>
    %287 = arith.mulf %282, %286 : vector<8x32xf32>
    %288 = vector.shape_cast %267 : vector<32xf32> to vector<1x32xf32>
    %289 = vector.broadcast %288 : vector<1x32xf32> to vector<8x32xf32>
    %290 = arith.mulf %287, %289 : vector<8x32xf32>
    %291 = vector.shape_cast %269 : vector<32xf32> to vector<1x32xf32>
    %292 = vector.broadcast %291 : vector<1x32xf32> to vector<8x32xf32>
    %293 = arith.addf %290, %292 : vector<8x32xf32>
    %294 = arith.truncf %293 : vector<8x32xf32> to vector<8x32xbf16>
    %c0_101 = arith.constant 0 : index
    %c0_102 = arith.constant 0 : index
    %295 = vector.load %arg15[%c0_101, %c0_102] : memref<32x128xbf16, #tpu.memory_space<vmem>>, vector<32x128xbf16>
    %cst_103 = arith.constant dense<0.000000e+00> : vector<8x128xf32>
    %296 = tpu.matmul %294, %295, %cst_103 {dimension_numbers = #tpu.dot_dimension_numbers<[1], [0], [0], [1], [0, 0, 1, 1], [], []>} : vector<8x32xbf16>, vector<32x128xbf16>, vector<8x128xf32> -> vector<8x128xf32>
    %c0_104 = arith.constant 0 : index
    %c0_105 = arith.constant 0 : index
    %297 = vector.load %arg16[%c0_104, %c0_105] : memref<1x128xf32, #tpu.memory_space<vmem>>, vector<1x128xf32>
    %298 = vector.shape_cast %297 : vector<1x128xf32> to vector<128xf32>
    %299 = vector.shape_cast %298 : vector<128xf32> to vector<1x128xf32>
    %300 = vector.broadcast %299 : vector<1x128xf32> to vector<8x128xf32>
    %301 = arith.addf %296, %300 : vector<8x128xf32>
    %cst_106 = arith.constant 5.000000e-01 : f32
    %302 = vector.broadcast %cst_106 : f32 to vector<8x128xf32>
    %303 = arith.mulf %302, %301 : vector<8x128xf32>
    %cst_107 = arith.constant 4.471500e-02 : f32
    %304 = vector.broadcast %cst_107 : f32 to vector<8x128xf32>
    %305 = arith.mulf %304, %301 : vector<8x128xf32>
    %306 = arith.mulf %305, %301 : vector<8x128xf32>
    %307 = arith.mulf %306, %301 : vector<8x128xf32>
    %308 = arith.addf %301, %307 : vector<8x128xf32>
    %cst_108 = arith.constant 0.797884583 : f32
    %309 = vector.broadcast %cst_108 : f32 to vector<8x128xf32>
    %310 = arith.mulf %309, %308 : vector<8x128xf32>
    %311 = math.tanh %310 : vector<8x128xf32>
    %cst_109 = arith.constant 1.000000e+00 : f32
    %312 = vector.broadcast %cst_109 : f32 to vector<8x128xf32>
    %313 = arith.addf %312, %311 : vector<8x128xf32>
    %314 = arith.mulf %303, %313 : vector<8x128xf32>
    %315 = arith.truncf %314 : vector<8x128xf32> to vector<8x128xbf16>
    %c0_110 = arith.constant 0 : index
    %c0_111 = arith.constant 0 : index
    %316 = vector.load %arg17[%c0_110, %c0_111] : memref<128x32xbf16, #tpu.memory_space<vmem>>, vector<128x32xbf16>
    %cst_112 = arith.constant dense<0.000000e+00> : vector<8x32xf32>
    %317 = tpu.matmul %315, %316, %cst_112 {dimension_numbers = #tpu.dot_dimension_numbers<[1], [0], [0], [1], [0, 0, 1, 1], [], []>} : vector<8x128xbf16>, vector<128x32xbf16>, vector<8x32xf32> -> vector<8x32xf32>
    %c0_113 = arith.constant 0 : index
    %c0_114 = arith.constant 0 : index
    %318 = vector.load %arg18[%c0_113, %c0_114] : memref<1x32xf32, #tpu.memory_space<vmem>>, vector<1x32xf32>
    %319 = vector.shape_cast %318 : vector<1x32xf32> to vector<32xf32>
    %320 = vector.shape_cast %319 : vector<32xf32> to vector<1x32xf32>
    %321 = vector.broadcast %320 : vector<1x32xf32> to vector<8x32xf32>
    %322 = arith.addf %317, %321 : vector<8x32xf32>
    %323 = arith.addf %293, %322 : vector<8x32xf32>
    %324 = vector.shape_cast %323 : vector<8x32xf32> to vector<1x8x32xf32>
    %c0_115 = arith.constant 0 : index
    %c0_116 = arith.constant 0 : index
    %c0_117 = arith.constant 0 : index
    %325 = vector.load %arg19[%c0_115, %c0_116, %c0_117] : memref<1x8x32xf32, #tpu.memory_space<vmem>>, vector<1x8x32xf32>
    tpu.vector_store %arg19[%c0_115, %c0_116, %c0_117], %324 {strides = array<i32>} : memref<1x8x32xf32, #tpu.memory_space<vmem>>, vector<1x8x32xf32>,
    return
  }
  func.func @transform_0(%arg0: i32) -> (i32, i32, i32) {
    %c0_i32 = arith.constant 0 : i32
    %c0_i32_0 = arith.constant 0 : i32
    %c0_i32_1 = arith.constant 0 : i32
    return %arg0, %c0_i32, %c0_i32_0 : i32, i32, i32
  }
  func.func @transform_1(%arg0: i32) -> (i32, i32, i32) {
    %c0_i32 = arith.constant 0 : i32
    %c0_i32_0 = arith.constant 0 : i32
    %c0_i32_1 = arith.constant 0 : i32
    return %arg0, %c0_i32, %c0_i32_0 : i32, i32, i32
  }
  func.func @transform_2(%arg0: i32) -> (i32, i32) {
    %c0_i32 = arith.constant 0 : i32
    %c0_i32_0 = arith.constant 0 : i32
    %c0_i32_1 = arith.constant 0 : i32
    return %c0_i32, %c0_i32_0 : i32, i32
  }
  func.func @transform_3(%arg0: i32) -> (i32, i32) {
    %c0_i32 = arith.constant 0 : i32
    %c0_i32_0 = arith.constant 0 : i32
    %c0_i32_1 = arith.constant 0 : i32
    return %c0_i32, %c0_i32_0 : i32, i32
  }
  func.func @transform_4(%arg0: i32) -> (i32, i32) {
    %c0_i32 = arith.constant 0 : i32
    %c0_i32_0 = arith.constant 0 : i32
    %c0_i32_1 = arith.constant 0 : i32
    return %c0_i32, %c0_i32_0 : i32, i32
  }
  func.func @transform_5(%arg0: i32) -> (i32, i32) {
    %c0_i32 = arith.constant 0 : i32
    %c0_i32_0 = arith.constant 0 : i32
    %c0_i32_1 = arith.constant 0 : i32
    return %c0_i32, %c0_i32_0 : i32, i32
  }
  func.func @transform_6(%arg0: i32) -> (i32, i32) {
    %c0_i32 = arith.constant 0 : i32
    %c0_i32_0 = arith.constant 0 : i32
    %c0_i32_1 = arith.constant 0 : i32
    return %c0_i32, %c0_i32_0 : i32, i32
  }
  func.func @transform_7(%arg0: i32) -> (i32, i32) {
    %c0_i32 = arith.constant 0 : i32
    %c0_i32_0 = arith.constant 0 : i32
    %c0_i32_1 = arith.constant 0 : i32
    return %c0_i32, %c0_i32_0 : i32, i32
  }
  func.func @transform_8(%arg0: i32) -> (i32, i32) {
    %c0_i32 = arith.constant 0 : i32
    %c0_i32_0 = arith.constant 0 : i32
    %c0_i32_1 = arith.constant 0 : i32
    return %c0_i32, %c0_i32_0 : i32, i32
  }
  func.func @transform_9(%arg0: i32) -> (i32, i32) {
    %c0_i32 = arith.constant 0 : i32
    %c0_i32_0 = arith.constant 0 : i32
    %c0_i32_1 = arith.constant 0 : i32
    return %c0_i32, %c0_i32_0 : i32, i32
  }
  func.func @transform_10(%arg0: i32) -> (i32, i32, i32) {
    %c0_i32 = arith.constant 0 : i32
    %c0_i32_0 = arith.constant 0 : i32
    %c0_i32_1 = arith.constant 0 : i32
    %c0_i32_2 = arith.constant 0 : i32
    return %c0_i32, %c0_i32_0, %c0_i32_1 : i32, i32, i32
  }
  func.func @transform_11(%arg0: i32) -> (i32, i32) {
    %c0_i32 = arith.constant 0 : i32
    %c0_i32_0 = arith.constant 0 : i32
    %c0_i32_1 = arith.constant 0 : i32
    return %c0_i32, %c0_i32_0 : i32, i32
  }
  func.func @transform_12(%arg0: i32) -> (i32, i32) {
    %c0_i32 = arith.constant 0 : i32
    %c0_i32_0 = arith.constant 0 : i32
    %c0_i32_1 = arith.constant 0 : i32
    return %c0_i32, %c0_i32_0 : i32, i32
  }
  func.func @transform_13(%arg0: i32) -> (i32, i32) {
    %c0_i32 = arith.constant 0 : i32
    %c0_i32_0 = arith.constant 0 : i32
    %c0_i32_1 = arith.constant 0 : i32
    return %c0_i32, %c0_i32_0 : i32, i32
  }
  func.func @transform_14(%arg0: i32) -> (i32, i32) {
    %c0_i32 = arith.constant 0 : i32
    %c0_i32_0 = arith.constant 0 : i32
    %c0_i32_1 = arith.constant 0 : i32
    return %c0_i32, %c0_i32_0 : i32, i32
  }
  func.func @transform_15(%arg0: i32) -> (i32, i32) {
    %c0_i32 = arith.constant 0 : i32
    %c0_i32_0 = arith.constant 0 : i32
    %c0_i32_1 = arith.constant 0 : i32
    return %c0_i32, %c0_i32_0 : i32, i32
  }
  func.func @transform_16(%arg0: i32) -> (i32, i32) {
    %c0_i32 = arith.constant 0 : i32
    %c0_i32_0 = arith.constant 0 : i32
    %c0_i32_1 = arith.constant 0 : i32
    return %c0_i32, %c0_i32_0 : i32, i32
  }
  func.func @transform_17(%arg0: i32) -> (i32, i32) {
    %c0_i32 = arith.constant 0 : i32
    %c0_i32_0 = arith.constant 0 : i32
    %c0_i32_1 = arith.constant 0 : i32
    return %c0_i32, %c0_i32_0 : i32, i32
  }
  func.func @transform_18(%arg0: i32) -> (i32, i32, i32) {
    %c0_i32 = arith.constant 0 : i32
    %c0_i32_0 = arith.constant 0 : i32
    %c0_i32_1 = arith.constant 0 : i32
    return %arg0, %c0_i32, %c0_i32_0 : i32, i32, i32
  }
}

</mosaic_0001>

<llo_original>
// kernel: tpu_custom_call.1
$region0: #{tpu_custom_call.1}
  #allocation0 [shape = 'u32[]', space=smem, size = 0x4, offset = 0x4, fixed_abs, tag = 'smem constant byte address 0x4 - core index']
  #allocation1 [shape = 'u32[144,128]{1,0:T(1,128)}', space=vmem, size = 0x12000, scoped, tag = 'internal scratch']
  %s0 = inlined_call_operand.vmem [shape: f32[2,8,32], index: 0, kind: input, shape index: {}]
  %s1 = inlined_call_operand.vmem [shape: f32[2,16,32], index: 1, kind: input, shape index: {}]
  %s2 = inlined_call_operand.hbm [shape: f32[1,32], index: 2, kind: input, shape index: {}]
  %s3 = inlined_call_operand.hbm [shape: f32[1,32], index: 3, kind: input, shape index: {}]
  %s4 = inlined_call_operand.vmem [shape: bf16[32,32], index: 4, kind: input, shape index: {}]
  %s5 = inlined_call_operand.hbm [shape: f32[1,32], index: 5, kind: input, shape index: {}]
  %s6 = inlined_call_operand.vmem [shape: bf16[32,32], index: 6, kind: input, shape index: {}]
  %s7 = inlined_call_operand.hbm [shape: f32[1,32], index: 7, kind: input, shape index: {}]
  %s8 = inlined_call_operand.hbm [shape: bf16[32,32], index: 8, kind: input, shape index: {}]
  %s9 = inlined_call_operand.hbm [shape: f32[1,32], index: 9, kind: input, shape index: {}]
  %s10 = inlined_call_operand.vmem [shape: bf16[8,4,32], index: 10, kind: input, shape index: {}]
  %s11 = inlined_call_operand.vmem [shape: f32[1,32], index: 11, kind: input, shape index: {}]
  %s12 = inlined_call_operand.vmem [shape: f32[1,32], index: 12, kind: input, shape index: {}]
  %s13 = inlined_call_operand.vmem [shape: f32[1,32], index: 13, kind: input, shape index: {}]
  %s14 = inlined_call_operand.hbm [shape: bf16[32,128], index: 14, kind: input, shape index: {}]
  %s15 = inlined_call_operand.vmem [shape: f32[1,128], index: 15, kind: input, shape index: {}]
  %s16 = inlined_call_operand.vmem [shape: bf16[128,32], index: 16, kind: input, shape index: {}]
  %s17 = inlined_call_operand.vmem [shape: f32[1,32], index: 17, kind: input, shape index: {}]
  %s18 = inlined_call_operand.hbm [shape: f32[2,8,32], index: 18, kind: output, shape index: {}]
  %s19 = sld [smem:[#allocation0]]
  $region133: #{tpu_custom_call.1} parent=0
    _
  %s21 = ssub.s32 1, %s19
  %s22 = scalar_select 0, %s21, %s19
  $region1: #{tpu_custom_call.1} parent=0
    #allocation2 [shape = 'u8[512]{0}', space=vmem, size = 0x400, scoped, tag = 'input window, operand 2, single buffered']
    #allocation3 [shape = 's32[2]{0}', space=sflag, size = 0x8, scoped, tag = 'scoped memory for tpu_custom_call.1']
    #allocation4 [shape = 's32[2]{0}', space=sflag, size = 0x8, scoped, tag = 'scoped memory for tpu_custom_call.1']
    #allocation5 [shape = 'u8[512]{0}', space=vmem, size = 0x400, scoped, tag = 'input window, operand 3, single buffered']
    #allocation6 [shape = 's32[1]{0}', space=sflag, size = 0x4, scoped, tag = 'scoped memory for tpu_custom_call.1']
    #allocation7 [shape = 'u8[512]{0}', space=vmem, size = 0x400, scoped, tag = 'input window, operand 5, single buffered']
    #allocation8 [shape = 'u8[512]{0}', space=vmem, size = 0x400, scoped, tag = 'input window, operand 7, single buffered']
    #allocation9 [shape = 's32[1]{0}', space=sflag, size = 0x4, scoped, tag = 'scoped memory for tpu_custom_call.1']
    #allocation10 [shape = 'u8[8192]{0}', space=vmem, size = 0x2000, scoped, tag = 'input window, operand 8, single buffered']
    #allocation11 [shape = 'u8[512]{0}', space=vmem, size = 0x400, scoped, tag = 'input window, operand 9, single buffered']
    #allocation12 [shape = 's32[1]{0}', space=sflag, size = 0x4, scoped, tag = 'scoped memory for tpu_custom_call.1']
    #allocation13 [shape = 'u8[8192]{0}', space=vmem, size = 0x2000, scoped, tag = 'input window, operand 14, single buffered']
    #allocation14 [shape = 'u8[8192]{0}', space=vmem, size = 0x2000, scoped, tag = 'output window, operand 0']
    %23 = vsyncpa [#allocation3], 0
    %24 = vsyncpa [#allocation6], 0
    %25 = vsyncpa [#allocation9], 0
    %26 = vsyncpa [#allocation12], 0
    %27 = vsyncpa [#allocation4], 0
    %s28 = scalar_lea.sflag [#allocation4], 1
    %29 = vsyncpa %s28, 0
    loop: start=0, step=1, limit=4
    $region2: #{tpu_custom_call.1} parent=1 // loop_pre_header
      _
    $region3: #{tpu_custom_call.1} parent=1 // loop_header
      %s31 = sphi 0, %s35
      %p32 = scmp.ge.s32.totalorder %s31, 4
      %s41 = sphi 0, %s43
      %s44 = sphi 0, %s41
      %s45 = sphi 0, %s44
      %s61 = sphi 0, %s45
      %s67 = sphi 0, %s69
      %s70 = sphi 0, %s67
      %s71 = sphi 0, %s70
      %s87 = sphi 0, %s71
      %s91 = sphi 0, %s91
      %s93 = sphi 0, %s91
      %s94 = sphi 0, %s93
      %s108 = sphi 0, %s94
      %s112 = sphi 0, %s112
      %s114 = sphi 0, %s112
      %s115 = sphi 0, %s114
      %s129 = sphi 0, %s115
      %s133 = sphi 0, %s133
      %s135 = sphi 0, %s133
      %s136 = sphi 0, %s135
      %s150 = sphi 0, %s136
      %s154 = sphi 0, %s154
      %s156 = sphi 0, %s154
      %s157 = sphi 0, %s156
      %s171 = sphi 0, %s157
      %s175 = sphi 0, %s175
      %s177 = sphi 0, %s175
      %s178 = sphi 0, %s177
      %s192 = sphi 0, %s178
      %s196 = sphi 0, %s196
      %s198 = sphi 0, %s196
      %s199 = sphi 0, %s198
      %s213 = sphi 0, %s199
      %s217 = sphi 0, %s217
      %s219 = sphi 0, %s217
      %s220 = sphi 0, %s219
      %s234 = sphi 0, %s220
      %s238 = sphi 0, %s238
      %s240 = sphi 0, %s238
      %s241 = sphi 0, %s240
      %s255 = sphi 0, %s241
      %s259 = sphi 0, %s259
      %s261 = sphi 0, %s259
      %s262 = sphi 0, %s261
      %s276 = sphi 0, %s262
      %s280 = sphi 0, %s280
      %s282 = sphi 0, %s280
      %s283 = sphi 0, %s282
      %s297 = sphi 0, %s283
      %s301 = sphi 0, %s301
      %s303 = sphi 0, %s301
      %s304 = sphi 0, %s303
      %s318 = sphi 0, %s304
      %s322 = sphi 0, %s322
      %s324 = sphi 0, %s322
      %s325 = sphi 0, %s324
      %s339 = sphi 0, %s325
      %s343 = sphi 0, %s343
      %s345 = sphi 0, %s343
      %s346 = sphi 0, %s345
      %s360 = sphi 0, %s346
      %s364 = sphi 0, %s364
      %s366 = sphi 0, %s364
      %s367 = sphi 0, %s366
      %s381 = sphi 0, %s367
      %s385 = sphi 0, %s385
      %s387 = sphi 0, %s385
      %s388 = sphi 0, %s387
      %s402 = sphi 0, %s388
      %s406 = sphi 0, %s406
      %s408 = sphi 0, %s406
      %s409 = sphi 0, %s408
      %s423 = sphi 0, %s409
      %s429 = sphi 0, %s431
      %s432 = sphi 0, %s429
      %s433 = sphi 0, %s432
      %s449 = sphi 0, %s433
    $region4: #{tpu_custom_call.1} parent=1 // loop_header_branch
      %34 = sbr.rel (%p32) target = $region8
    $region5: #{tpu_custom_call.1} parent=1 // loop_body
      %s36 = ssub.s32 %s31, 1
      %s37 = ssub.s32 %s31, 2
      %s38 = sadd.s32 %s31, 1
      %s39 = ssub.s32 %s31, %s38
      %p40 = scmp.eq.s32.totalorder %s39, 0
      %s42 = sadd.s32 %s41, 1
      %s43 = scalar_select %p40, %s41, %s42
      %p46 = pneg %p40
      %p47 = scmp.eq.s32.totalorder %s31, 1
      %p48 = por %p46, %p47
      %p49 = scmp.ne.s32.totalorder %s41, %s44
      %p50 = scmp.eq.s32.totalorder %s31, 0
      %p51 = por %p49, %p50
      %p52 = scmp.ne.s32.totalorder %s41, %s44
      %p53 = scmp.eq.s32.totalorder %s36, 1
      %p54 = por %p52, %p53
      %p55 = scmp.ne.s32.totalorder %s44, %s45
      %p56 = scmp.eq.s32.totalorder %s36, 0
      %p57 = por %p55, %p56
      %p58 = scmp.ne.s32.totalorder %s44, %s45
      %p59 = scmp.eq.s32.totalorder %s37, 1
      %p60 = por %p58, %p59
      %p62 = scmp.ne.s32.totalorder %s45, %s61
      %p63 = scmp.eq.s32.totalorder %s37, 0
      %p64 = por %p62, %p63
      %s65 = ssub.s32 %s31, %s38
      %p66 = scmp.eq.s32.totalorder %s65, 0
      %s68 = sadd.s32 %s67, 1
      %s69 = scalar_select %p66, %s67, %s68
      %p72 = pneg %p66
      %p73 = scmp.eq.s32.totalorder %s31, 1
      %p74 = por %p72, %p73
      %p75 = scmp.ne.s32.totalorder %s67, %s70
      %p76 = scmp.eq.s32.totalorder %s31, 0
      %p77 = por %p75, %p76
      %p78 = scmp.ne.s32.totalorder %s67, %s70
      %p79 = scmp.eq.s32.totalorder %s36, 1
      %p80 = por %p78, %p79
      %p81 = scmp.ne.s32.totalorder %s70, %s71
      %p82 = scmp.eq.s32.totalorder %s36, 0
      %p83 = por %p81, %p82
      %p84 = scmp.ne.s32.totalorder %s70, %s71
      %p85 = scmp.eq.s32.totalorder %s37, 1
      %p86 = por %p84, %p85
      %p88 = scmp.ne.s32.totalorder %s71, %s87
      %p89 = scmp.eq.s32.totalorder %s37, 0
      %p90 = por %p88, %p89
      %s92 = sadd.s32 %s91, 1
      %p95 = scmp.eq.s32.totalorder %s31, 1
      %p96 = scmp.ne.s32.totalorder %s91, %s93
      %p97 = scmp.eq.s32.totalorder %s31, 0
      %p98 = por %p96, %p97
      %p99 = scmp.ne.s32.totalorder %s91, %s93
      %p100 = scmp.eq.s32.totalorder %s36, 1
      %p101 = por %p99, %p100
      %p102 = scmp.ne.s32.totalorder %s93, %s94
      %p103 = scmp.eq.s32.totalorder %s36, 0
      %p104 = por %p102, %p103
      %p105 = scmp.ne.s32.totalorder %s93, %s94
      %p106 = scmp.eq.s32.totalorder %s37, 1
      %p107 = por %p105, %p106
      %p109 = scmp.ne.s32.totalorder %s94, %s108
      %p110 = scmp.eq.s32.totalorder %s37, 0
      %p111 = por %p109, %p110
      %s113 = sadd.s32 %s112, 1
      %p116 = scmp.eq.s32.totalorder %s31, 1
      %p117 = scmp.ne.s32.totalorder %s112, %s114
      %p118 = scmp.eq.s32.totalorder %s31, 0
      %p119 = por %p117, %p118
      %p120 = scmp.ne.s32.totalorder %s112, %s114
      %p121 = scmp.eq.s32.totalorder %s36, 1
      %p122 = por %p120, %p121
      %p123 = scmp.ne.s32.totalorder %s114, %s115
      %p124 = scmp.eq.s32.totalorder %s36, 0
      %p125 = por %p123, %p124
      %p126 = scmp.ne.s32.totalorder %s114, %s115
      %p127 = scmp.eq.s32.totalorder %s37, 1
      %p128 = por %p126, %p127
      %p130 = scmp.ne.s32.totalorder %s115, %s129
      %p131 = scmp.eq.s32.totalorder %s37, 0
      %p132 = por %p130, %p131
      %s134 = sadd.s32 %s133, 1
      %p137 = scmp.eq.s32.totalorder %s31, 1
      %p138 = scmp.ne.s32.totalorder %s133, %s135
      %p139 = scmp.eq.s32.totalorder %s31, 0
      %p140 = por %p138, %p139
      %p141 = scmp.ne.s32.totalorder %s133, %s135
      %p142 = scmp.eq.s32.totalorder %s36, 1
      %p143 = por %p141, %p142
      %p144 = scmp.ne.s32.totalorder %s135, %s136
      %p145 = scmp.eq.s32.totalorder %s36, 0
      %p146 = por %p144, %p145
      %p147 = scmp.ne.s32.totalorder %s135, %s136
      %p148 = scmp.eq.s32.totalorder %s37, 1
      %p149 = por %p147, %p148
      %p151 = scmp.ne.s32.totalorder %s136, %s150
      %p152 = scmp.eq.s32.totalorder %s37, 0
      %p153 = por %p151, %p152
      %s155 = sadd.s32 %s154, 1
      %p158 = scmp.eq.s32.totalorder %s31, 1
      %p159 = scmp.ne.s32.totalorder %s154, %s156
      %p160 = scmp.eq.s32.totalorder %s31, 0
      %p161 = por %p159, %p160
      %p162 = scmp.ne.s32.totalorder %s154, %s156
      %p163 = scmp.eq.s32.totalorder %s36, 1
      %p164 = por %p162, %p163
      %p165 = scmp.ne.s32.totalorder %s156, %s157
      %p166 = scmp.eq.s32.totalorder %s36, 0
      %p167 = por %p165, %p166
      %p168 = scmp.ne.s32.totalorder %s156, %s157
      %p169 = scmp.eq.s32.totalorder %s37, 1
      %p170 = por %p168, %p169
      %p172 = scmp.ne.s32.totalorder %s157, %s171
      %p173 = scmp.eq.s32.totalorder %s37, 0
      %p174 = por %p172, %p173
      %s176 = sadd.s32 %s175, 1
      %p179 = scmp.eq.s32.totalorder %s31, 1
      %p180 = scmp.ne.s32.totalorder %s175, %s177
      %p181 = scmp.eq.s32.totalorder %s31, 0
      %p182 = por %p180, %p181
      %p183 = scmp.ne.s32.totalorder %s175, %s177
      %p184 = scmp.eq.s32.totalorder %s36, 1
      %p185 = por %p183, %p184
      %p186 = scmp.ne.s32.totalorder %s177, %s178
      %p187 = scmp.eq.s32.totalorder %s36, 0
      %p188 = por %p186, %p187
      %p189 = scmp.ne.s32.totalorder %s177, %s178
      %p190 = scmp.eq.s32.totalorder %s37, 1
      %p191 = por %p189, %p190
      %p193 = scmp.ne.s32.totalorder %s178, %s192
      %p194 = scmp.eq.s32.totalorder %s37, 0
      %p195 = por %p193, %p194
      %s197 = sadd.s32 %s196, 1
      %p200 = scmp.eq.s32.totalorder %s31, 1
      %p201 = scmp.ne.s32.totalorder %s196, %s198
      %p202 = scmp.eq.s32.totalorder %s31, 0
      %p203 = por %p201, %p202
      %p204 = scmp.ne.s32.totalorder %s196, %s198
      %p205 = scmp.eq.s32.totalorder %s36, 1
      %p206 = por %p204, %p205
      %p207 = scmp.ne.s32.totalorder %s198, %s199
      %p208 = scmp.eq.s32.totalorder %s36, 0
      %p209 = por %p207, %p208
      %p210 = scmp.ne.s32.totalorder %s198, %s199
      %p211 = scmp.eq.s32.totalorder %s37, 1
      %p212 = por %p210, %p211
      %p214 = scmp.ne.s32.totalorder %s199, %s213
      %p215 = scmp.eq.s32.totalorder %s37, 0
      %p216 = por %p214, %p215
      %s218 = sadd.s32 %s217, 1
      %p221 = scmp.eq.s32.totalorder %s31, 1
      %p222 = scmp.ne.s32.totalorder %s217, %s219
      %p223 = scmp.eq.s32.totalorder %s31, 0
      %p224 = por %p222, %p223
      %p225 = scmp.ne.s32.totalorder %s217, %s219
      %p226 = scmp.eq.s32.totalorder %s36, 1
      %p227 = por %p225, %p226
      %p228 = scmp.ne.s32.totalorder %s219, %s220
      %p229 = scmp.eq.s32.totalorder %s36, 0
      %p230 = por %p228, %p229
      %p231 = scmp.ne.s32.totalorder %s219, %s220
      %p232 = scmp.eq.s32.totalorder %s37, 1
      %p233 = por %p231, %p232
      %p235 = scmp.ne.s32.totalorder %s220, %s234
      %p236 = scmp.eq.s32.totalorder %s37, 0
      %p237 = por %p235, %p236
      %s239 = sadd.s32 %s238, 1
      %p242 = scmp.eq.s32.totalorder %s31, 1
      %p243 = scmp.ne.s32.totalorder %s238, %s240
      %p244 = scmp.eq.s32.totalorder %s31, 0
      %p245 = por %p243, %p244
      %p246 = scmp.ne.s32.totalorder %s238, %s240
      %p247 = scmp.eq.s32.totalorder %s36, 1
      %p248 = por %p246, %p247
      %p249 = scmp.ne.s32.totalorder %s240, %s241
      %p250 = scmp.eq.s32.totalorder %s36, 0
      %p251 = por %p249, %p250
      %p252 = scmp.ne.s32.totalorder %s240, %s241
      %p253 = scmp.eq.s32.totalorder %s37, 1
      %p254 = por %p252, %p253
      %p256 = scmp.ne.s32.totalorder %s241, %s255
      %p257 = scmp.eq.s32.totalorder %s37, 0
      %p258 = por %p256, %p257
      %s260 = sadd.s32 %s259, 1
      %p263 = scmp.eq.s32.totalorder %s31, 1
      %p264 = scmp.ne.s32.totalorder %s259, %s261
      %p265 = scmp.eq.s32.totalorder %s31, 0
      %p266 = por %p264, %p265
      %p267 = scmp.ne.s32.totalorder %s259, %s261
      %p268 = scmp.eq.s32.totalorder %s36, 1
      %p269 = por %p267, %p268
      %p270 = scmp.ne.s32.totalorder %s261, %s262
      %p271 = scmp.eq.s32.totalorder %s36, 0
      %p272 = por %p270, %p271
      %p273 = scmp.ne.s32.totalorder %s261, %s262
      %p274 = scmp.eq.s32.totalorder %s37, 1
      %p275 = por %p273, %p274
      %p277 = scmp.ne.s32.totalorder %s262, %s276
      %p278 = scmp.eq.s32.totalorder %s37, 0
      %p279 = por %p277, %p278
      %s281 = sadd.s32 %s280, 1
      %p284 = scmp.eq.s32.totalorder %s31, 1
      %p285 = scmp.ne.s32.totalorder %s280, %s282
      %p286 = scmp.eq.s32.totalorder %s31, 0
      %p287 = por %p285, %p286
      %p288 = scmp.ne.s32.totalorder %s280, %s282
      %p289 = scmp.eq.s32.totalorder %s36, 1
      %p290 = por %p288, %p289
      %p291 = scmp.ne.s32.totalorder %s282, %s283
      %p292 = scmp.eq.s32.totalorder %s36, 0
      %p293 = por %p291, %p292
      %p294 = scmp.ne.s32.totalorder %s282, %s283
      %p295 = scmp.eq.s32.totalorder %s37, 1
      %p296 = por %p294, %p295
      %p298 = scmp.ne.s32.totalorder %s283, %s297
      %p299 = scmp.eq.s32.totalorder %s37, 0
      %p300 = por %p298, %p299
      %s302 = sadd.s32 %s301, 1
      %p305 = scmp.eq.s32.totalorder %s31, 1
      %p306 = scmp.ne.s32.totalorder %s301, %s303
      %p307 = scmp.eq.s32.totalorder %s31, 0
      %p308 = por %p306, %p307
      %p309 = scmp.ne.s32.totalorder %s301, %s303
      %p310 = scmp.eq.s32.totalorder %s36, 1
      %p311 = por %p309, %p310
      %p312 = scmp.ne.s32.totalorder %s303, %s304
      %p313 = scmp.eq.s32.totalorder %s36, 0
      %p314 = por %p312, %p313
      %p315 = scmp.ne.s32.totalorder %s303, %s304
      %p316 = scmp.eq.s32.totalorder %s37, 1
      %p317 = por %p315, %p316
      %p319 = scmp.ne.s32.totalorder %s304, %s318
      %p320 = scmp.eq.s32.totalorder %s37, 0
      %p321 = por %p319, %p320
      %s323 = sadd.s32 %s322, 1
      %p326 = scmp.eq.s32.totalorder %s31, 1
      %p327 = scmp.ne.s32.totalorder %s322, %s324
      %p328 = scmp.eq.s32.totalorder %s31, 0
      %p329 = por %p327, %p328
      %p330 = scmp.ne.s32.totalorder %s322, %s324
      %p331 = scmp.eq.s32.totalorder %s36, 1
      %p332 = por %p330, %p331
      %p333 = scmp.ne.s32.totalorder %s324, %s325
      %p334 = scmp.eq.s32.totalorder %s36, 0
      %p335 = por %p333, %p334
      %p336 = scmp.ne.s32.totalorder %s324, %s325
      %p337 = scmp.eq.s32.totalorder %s37, 1
      %p338 = por %p336, %p337
      %p340 = scmp.ne.s32.totalorder %s325, %s339
      %p341 = scmp.eq.s32.totalorder %s37, 0
      %p342 = por %p340, %p341
      %s344 = sadd.s32 %s343, 1
      %p347 = scmp.eq.s32.totalorder %s31, 1
      %p348 = scmp.ne.s32.totalorder %s343, %s345
      %p349 = scmp.eq.s32.totalorder %s31, 0
      %p350 = por %p348, %p349
      %p351 = scmp.ne.s32.totalorder %s343, %s345
      %p352 = scmp.eq.s32.totalorder %s36, 1
      %p353 = por %p351, %p352
      %p354 = scmp.ne.s32.totalorder %s345, %s346
      %p355 = scmp.eq.s32.totalorder %s36, 0
      %p356 = por %p354, %p355
      %p357 = scmp.ne.s32.totalorder %s345, %s346
      %p358 = scmp.eq.s32.totalorder %s37, 1
      %p359 = por %p357, %p358
      %p361 = scmp.ne.s32.totalorder %s346, %s360
      %p362 = scmp.eq.s32.totalorder %s37, 0
      %p363 = por %p361, %p362
      %s365 = sadd.s32 %s364, 1
      %p368 = scmp.eq.s32.totalorder %s31, 1
      %p369 = scmp.ne.s32.totalorder %s364, %s366
      %p370 = scmp.eq.s32.totalorder %s31, 0
      %p371 = por %p369, %p370
      %p372 = scmp.ne.s32.totalorder %s364, %s366
      %p373 = scmp.eq.s32.totalorder %s36, 1
      %p374 = por %p372, %p373
      %p375 = scmp.ne.s32.totalorder %s366, %s367
      %p376 = scmp.eq.s32.totalorder %s36, 0
      %p377 = por %p375, %p376
      %p378 = scmp.ne.s32.totalorder %s366, %s367
      %p379 = scmp.eq.s32.totalorder %s37, 1
      %p380 = por %p378, %p379
      %p382 = scmp.ne.s32.totalorder %s367, %s381
      %p383 = scmp.eq.s32.totalorder %s37, 0
      %p384 = por %p382, %p383
      %s386 = sadd.s32 %s385, 1
      %p389 = scmp.eq.s32.totalorder %s31, 1
      %p390 = scmp.ne.s32.totalorder %s385, %s387
      %p391 = scmp.eq.s32.totalorder %s31, 0
      %p392 = por %p390, %p391
      %p393 = scmp.ne.s32.totalorder %s385, %s387
      %p394 = scmp.eq.s32.totalorder %s36, 1
      %p395 = por %p393, %p394
      %p396 = scmp.ne.s32.totalorder %s387, %s388
      %p397 = scmp.eq.s32.totalorder %s36, 0
      %p398 = por %p396, %p397
      %p399 = scmp.ne.s32.totalorder %s387, %s388
      %p400 = scmp.eq.s32.totalorder %s37, 1
      %p401 = por %p399, %p400
      %p403 = scmp.ne.s32.totalorder %s388, %s402
      %p404 = scmp.eq.s32.totalorder %s37, 0
      %p405 = por %p403, %p404
      %s407 = sadd.s32 %s406, 1
      %p410 = scmp.eq.s32.totalorder %s31, 1
      %p411 = scmp.ne.s32.totalorder %s406, %s408
      %p412 = scmp.eq.s32.totalorder %s31, 0
      %p413 = por %p411, %p412
      %p414 = scmp.ne.s32.totalorder %s406, %s408
      %p415 = scmp.eq.s32.totalorder %s36, 1
      %p416 = por %p414, %p415
      %p417 = scmp.ne.s32.totalorder %s408, %s409
      %p418 = scmp.eq.s32.totalorder %s36, 0
      %p419 = por %p417, %p418
      %p420 = scmp.ne.s32.totalorder %s408, %s409
      %p421 = scmp.eq.s32.totalorder %s37, 1
      %p422 = por %p420, %p421
      %p424 = scmp.ne.s32.totalorder %s409, %s423
      %p425 = scmp.eq.s32.totalorder %s37, 0
      %p426 = por %p424, %p425
      %s427 = ssub.s32 %s31, %s38
      %p428 = scmp.eq.s32.totalorder %s427, 0
      %s430 = sadd.s32 %s429, 1
      %s431 = scalar_select %p428, %s429, %s430
      %p434 = pneg %p428
      %p435 = scmp.eq.s32.totalorder %s31, 1
      %p436 = por %p434, %p435
      %p437 = scmp.ne.s32.totalorder %s429, %s432
      %p438 = scmp.eq.s32.totalorder %s31, 0
      %p439 = por %p437, %p438
      %p440 = scmp.ne.s32.totalorder %s429, %s432
      %p441 = scmp.eq.s32.totalorder %s36, 1
      %p442 = por %p440, %p441
      %p443 = scmp.ne.s32.totalorder %s432, %s433
      %p444 = scmp.eq.s32.totalorder %s36, 0
      %p445 = por %p443, %p444
      %p446 = scmp.ne.s32.totalorder %s432, %s433
      %p447 = scmp.eq.s32.totalorder %s37, 1
      %p448 = por %p446, %p447
      %p450 = scmp.ne.s32.totalorder %s433, %s449
      %p451 = scmp.eq.s32.totalorder %s37, 0
      %p452 = por %p450, %p451
      %p453 = scmp.le.s32.totalorder 1, %s31
      %p454 = scmp.lt.s32.totalorder %s31, 3
      %p455 = pnand %p453, %p454
      %p456 = pneg %p455
      // Predicated region
      $region9: #{tpu_custom_call.1} parent=5 // pred_check
        _
      $region10: #{tpu_custom_call.1} parent=5 // pred_check_branch
        %458 = sbr.rel (%p455) target = $region12
      $region11: #{tpu_custom_call.1} parent=5 // pred_region
        %s459 = ssub.s32 %s31, 1
        // Predicated region
        $region13: #{tpu_custom_call.1} parent=11 // pred_check
          %p460 = pneg %p104
        $region14: #{tpu_custom_call.1} parent=11 // pred_check_branch
          %462 = sbr.rel (%p460) target = $region16
        $region15: #{tpu_custom_call.1} parent=11 // pred_region
          %s464 = ssub.s32 16, 16
          %465 = vsyncadd [#allocation3], %s464
          %s467 = sshll.u32 [#allocation2], 4
          %s468 = int_to_ptr.vmem [resolvable:$true] %s467
          %470 = dma.hbm_to_vmem [thread:$0]  %s2, 16, %s468, [#allocation3]
        $region16: #{tpu_custom_call.1} parent=11 // pred_fallthru
          _
        // Predicated region
        $region17: #{tpu_custom_call.1} parent=11 // pred_check
          %p471 = pneg %p125
        $region18: #{tpu_custom_call.1} parent=11 // pred_check_branch
          %473 = sbr.rel (%p471) target = $region20
        $region19: #{tpu_custom_call.1} parent=11 // pred_region
          %s475 = ssub.s32 16, 16
          %476 = vsyncadd [#allocation6], %s475
          %s478 = sshll.u32 [#allocation5], 4
          %s479 = int_to_ptr.vmem [resolvable:$true] %s478
          %481 = dma.hbm_to_vmem [thread:$0]  %s3, 16, %s479, [#allocation6]
        $region20: #{tpu_custom_call.1} parent=11 // pred_fallthru
          _
        // Predicated region
        $region21: #{tpu_custom_call.1} parent=11 // pred_check
          %p482 = pneg %p146
        $region22: #{tpu_custom_call.1} parent=11 // pred_check_branch
          %484 = sbr.rel (%p482) target = $region24
        $region23: #{tpu_custom_call.1} parent=11 // pred_region
          _
        $region24: #{tpu_custom_call.1} parent=11 // pred_fallthru
          _
        // Predicated region
        $region25: #{tpu_custom_call.1} parent=11 // pred_check
          %p485 = pneg %p167
        $region26: #{tpu_custom_call.1} parent=11 // pred_check_branch
          %487 = sbr.rel (%p485) target = $region28
        $region27: #{tpu_custom_call.1} parent=11 // pred_region
          %s489 = ssub.s32 16, 16
          %490 = vsyncadd [#allocation6], %s489
          %s492 = sshll.u32 [#allocation7], 4
          %s493 = int_to_ptr.vmem [resolvable:$true] %s492
          %495 = dma.hbm_to_vmem [thread:$0]  %s5, 16, %s493, [#allocation6]
        $region28: #{tpu_custom_call.1} parent=11 // pred_fallthru
          _
        // Predicated region
        $region29: #{tpu_custom_call.1} parent=11 // pred_check
          %p496 = pneg %p188
        $region30: #{tpu_custom_call.1} parent=11 // pred_check_branch
          %498 = sbr.rel (%p496) target = $region32
        $region31: #{tpu_custom_call.1} parent=11 // pred_region
          _
        $region32: #{tpu_custom_call.1} parent=11 // pred_fallthru
          _
        // Predicated region
        $region33: #{tpu_custom_call.1} parent=11 // pred_check
          %p499 = pneg %p209
        $region34: #{tpu_custom_call.1} parent=11 // pred_check_branch
          %501 = sbr.rel (%p499) target = $region36
        $region35: #{tpu_custom_call.1} parent=11 // pred_region
          %s503 = ssub.s32 16, 16
          %504 = vsyncadd [#allocation9], %s503
          %s506 = sshll.u32 [#allocation8], 4
          %s507 = int_to_ptr.vmem [resolvable:$true] %s506
          %509 = dma.hbm_to_vmem [thread:$0]  %s7, 16, %s507, [#allocation9]
        $region36: #{tpu_custom_call.1} parent=11 // pred_fallthru
          _
        // Predicated region
        $region37: #{tpu_custom_call.1} parent=11 // pred_check
          %p510 = pneg %p230
        $region38: #{tpu_custom_call.1} parent=11 // pred_check_branch
          %512 = sbr.rel (%p510) target = $region40
        $region39: #{tpu_custom_call.1} parent=11 // pred_region
          %s514 = ssub.s32 256, 256
          %515 = vsyncadd [#allocation9], %s514
          %s516 = sshll.u32 [#allocation10], 4
          %s517 = int_to_ptr.vmem [resolvable:$true] %s516
          %522 = dma.hbm_to_vmem [thread:$0]  %s8, 256, %s517, [#allocation9], 64, 64, 4
        $region40: #{tpu_custom_call.1} parent=11 // pred_fallthru
          _
        // Predicated region
        $region41: #{tpu_custom_call.1} parent=11 // pred_check
          %p523 = pneg %p251
        $region42: #{tpu_custom_call.1} parent=11 // pred_check_branch
          %525 = sbr.rel (%p523) target = $region44
        $region43: #{tpu_custom_call.1} parent=11 // pred_region
          %s527 = ssub.s32 16, 16
          %528 = vsyncadd [#allocation12], %s527
          %s530 = sshll.u32 [#allocation11], 4
          %s531 = int_to_ptr.vmem [resolvable:$true] %s530
          %533 = dma.hbm_to_vmem [thread:$0]  %s9, 16, %s531, [#allocation12]
        $region44: #{tpu_custom_call.1} parent=11 // pred_fallthru
          _
        // Predicated region
        $region45: #{tpu_custom_call.1} parent=11 // pred_check
          %p534 = pneg %p272
        $region46: #{tpu_custom_call.1} parent=11 // pred_check_branch
          %536 = sbr.rel (%p534) target = $region48
        $region47: #{tpu_custom_call.1} parent=11 // pred_region
          _
        $region48: #{tpu_custom_call.1} parent=11 // pred_fallthru
          _
        // Predicated region
        $region49: #{tpu_custom_call.1} parent=11 // pred_check
          %p537 = pneg %p293
        $region50: #{tpu_custom_call.1} parent=11 // pred_check_branch
          %539 = sbr.rel (%p537) target = $region52
        $region51: #{tpu_custom_call.1} parent=11 // pred_region
          _
        $region52: #{tpu_custom_call.1} parent=11 // pred_fallthru
          _
        // Predicated region
        $region53: #{tpu_custom_call.1} parent=11 // pred_check
          %p540 = pneg %p314
        $region54: #{tpu_custom_call.1} parent=11 // pred_check_branch
          %542 = sbr.rel (%p540) target = $region56
        $region55: #{tpu_custom_call.1} parent=11 // pred_region
          _
        $region56: #{tpu_custom_call.1} parent=11 // pred_fallthru
          _
        // Predicated region
        $region57: #{tpu_custom_call.1} parent=11 // pred_check
          %p543 = pneg %p335
        $region58: #{tpu_custom_call.1} parent=11 // pred_check_branch
          %545 = sbr.rel (%p543) target = $region60
        $region59: #{tpu_custom_call.1} parent=11 // pred_region
          _
        $region60: #{tpu_custom_call.1} parent=11 // pred_fallthru
          _
        // Predicated region
        $region61: #{tpu_custom_call.1} parent=11 // pred_check
          %p546 = pneg %p356
        $region62: #{tpu_custom_call.1} parent=11 // pred_check_branch
          %548 = sbr.rel (%p546) target = $region64
        $region63: #{tpu_custom_call.1} parent=11 // pred_region
          %s550 = ssub.s32 256, 256
          %551 = vsyncadd [#allocation12], %s550
          %s552 = sshll.u32 [#allocation13], 4
          %s553 = int_to_ptr.vmem [resolvable:$true] %s552
          %558 = dma.hbm_to_vmem [thread:$0]  %s14, 256, %s553, [#allocation12], 64, 64, 4
        $region64: #{tpu_custom_call.1} parent=11 // pred_fallthru
          _
        // Predicated region
        $region65: #{tpu_custom_call.1} parent=11 // pred_check
          %p559 = pneg %p377
        $region66: #{tpu_custom_call.1} parent=11 // pred_check_branch
          %561 = sbr.rel (%p559) target = $region68
        $region67: #{tpu_custom_call.1} parent=11 // pred_region
          _
        $region68: #{tpu_custom_call.1} parent=11 // pred_fallthru
          _
        // Predicated region
        $region69: #{tpu_custom_call.1} parent=11 // pred_check
          %p562 = pneg %p398
        $region70: #{tpu_custom_call.1} parent=11 // pred_check_branch
          %564 = sbr.rel (%p562) target = $region72
        $region71: #{tpu_custom_call.1} parent=11 // pred_region
          _
        $region72: #{tpu_custom_call.1} parent=11 // pred_fallthru
          _
        // Predicated region
        $region73: #{tpu_custom_call.1} parent=11 // pred_check
          %p565 = pneg %p419
        $region74: #{tpu_custom_call.1} parent=11 // pred_check_branch
          %567 = sbr.rel (%p565) target = $region76
        $region75: #{tpu_custom_call.1} parent=11 // pred_region
          _
        $region76: #{tpu_custom_call.1} parent=11 // pred_fallthru
          _
      $region12: #{tpu_custom_call.1} parent=5 // pred_fallthru
        _
      %p568 = scmp.lt.s32.totalorder %s31, 2
      // Predicated region
      $region77: #{tpu_custom_call.1} parent=5 // pred_check
        %p569 = pneg %p568
      $region78: #{tpu_custom_call.1} parent=5 // pred_check_branch
        %571 = sbr.rel (%p569) target = $region80
      $region79: #{tpu_custom_call.1} parent=5 // pred_region
        // Predicated region
        $region81: #{tpu_custom_call.1} parent=79 // pred_check
          %p572 = pneg %p51
        $region82: #{tpu_custom_call.1} parent=79 // pred_check_branch
          %574 = sbr.rel (%p572) target = $region84
        $region83: #{tpu_custom_call.1} parent=79 // pred_region
          %p575 = scmp.lt.s32.totalorder %s31, 1
          %s576 = scalar_select %p575, %s31, 1
          %s577 = smul.addr %s576, 8
          %s578 = scalar_lea.vmem %s0, %s577
        $region84: #{tpu_custom_call.1} parent=79 // pred_fallthru
          _
        // Predicated region
        $region85: #{tpu_custom_call.1} parent=79 // pred_check
          %p579 = pneg %p77
        $region86: #{tpu_custom_call.1} parent=79 // pred_check_branch
          %581 = sbr.rel (%p579) target = $region88
        $region87: #{tpu_custom_call.1} parent=79 // pred_region
          %p582 = scmp.lt.s32.totalorder %s31, 1
          %s583 = scalar_select %p582, %s31, 1
          %s584 = smul.addr %s583, 2
          %s585 = smul.addr %s584, 8
          %s586 = scalar_lea.vmem %s1, %s585
        $region88: #{tpu_custom_call.1} parent=79 // pred_fallthru
          _
      $region80: #{tpu_custom_call.1} parent=5 // pred_fallthru
        _
      %p587 = scmp.le.s32.totalorder 1, %s31
      %p588 = scmp.lt.s32.totalorder %s31, 3
      %p589 = pnand %p587, %p588
      %p590 = pneg %p589
      // Predicated region
      $region89: #{tpu_custom_call.1} parent=5 // pred_check
        _
      $region90: #{tpu_custom_call.1} parent=5 // pred_check_branch
        %592 = sbr.rel (%p589) target = $region92
      $region91: #{tpu_custom_call.1} parent=5 // pred_region
        %s593 = ssub.s32 %s31, 1
        // Predicated region
        $region93: #{tpu_custom_call.1} parent=91 // pred_check
          %p594 = pneg %p104
        $region94: #{tpu_custom_call.1} parent=91 // pred_check_branch
          %596 = sbr.rel (%p594) target = $region96
        $region95: #{tpu_custom_call.1} parent=91 // pred_region
          %597 = dma.done [#allocation3], 16
        $region96: #{tpu_custom_call.1} parent=91 // pred_fallthru
          _
        // Predicated region
        $region97: #{tpu_custom_call.1} parent=91 // pred_check
          %p598 = pneg %p125
        $region98: #{tpu_custom_call.1} parent=91 // pred_check_branch
          %600 = sbr.rel (%p598) target = $region100
        $region99: #{tpu_custom_call.1} parent=91 // pred_region
          %601 = dma.done [#allocation6], 16
        $region100: #{tpu_custom_call.1} parent=91 // pred_fallthru
          _
        // Predicated region
        $region101: #{tpu_custom_call.1} parent=91 // pred_check
          %p602 = pneg %p167
        $region102: #{tpu_custom_call.1} parent=91 // pred_check_branch
          %604 = sbr.rel (%p602) target = $region104
        $region103: #{tpu_custom_call.1} parent=91 // pred_region
          %605 = dma.done [#allocation6], 16
        $region104: #{tpu_custom_call.1} parent=91 // pred_fallthru
          _
        // Predicated region
        $region105: #{tpu_custom_call.1} parent=91 // pred_check
          %p606 = pneg %p209
        $region106: #{tpu_custom_call.1} parent=91 // pred_check_branch
          %608 = sbr.rel (%p606) target = $region108
        $region107: #{tpu_custom_call.1} parent=91 // pred_region
          %609 = dma.done [#allocation9], 16
        $region108: #{tpu_custom_call.1} parent=91 // pred_fallthru
          _
        // Predicated region
        $region109: #{tpu_custom_call.1} parent=91 // pred_check
          %p610 = pneg %p230
        $region110: #{tpu_custom_call.1} parent=91 // pred_check_branch
          %612 = sbr.rel (%p610) target = $region112
        $region111: #{tpu_custom_call.1} parent=91 // pred_region
          %613 = dma.done [#allocation9], 256
        $region112: #{tpu_custom_call.1} parent=91 // pred_fallthru
          _
        // Predicated region
        $region113: #{tpu_custom_call.1} parent=91 // pred_check
          %p614 = pneg %p251
        $region114: #{tpu_custom_call.1} parent=91 // pred_check_branch
          %616 = sbr.rel (%p614) target = $region116
        $region115: #{tpu_custom_call.1} parent=91 // pred_region
          %617 = dma.done [#allocation12], 16
        $region116: #{tpu_custom_call.1} parent=91 // pred_fallthru
          _
        // Predicated region
        $region117: #{tpu_custom_call.1} parent=91 // pred_check
          %p618 = pneg %p356
        $region118: #{tpu_custom_call.1} parent=91 // pred_check_branch
          %620 = sbr.rel (%p618) target = $region120
        $region119: #{tpu_custom_call.1} parent=91 // pred_region
          %621 = dma.done [#allocation12], 256
        $region120: #{tpu_custom_call.1} parent=91 // pred_fallthru
          _
        %p622 = scmp.lt.s32.totalorder %s36, 1
        %s623 = scalar_select %p622, %s36, 1
        %s624 = smul.addr %s623, 8
        %s625 = scalar_lea.vmem %s0, %s624
        %p626 = pneg %p57
        %p627 = pneg %p54
        %p628 = scmp.lt.s32.totalorder %s36, 1
        %s629 = scalar_select %p628, %s36, 1
        %s630 = smul.addr %s629, 2
        %s631 = smul.addr %s630, 8
        %s632 = scalar_lea.vmem %s1, %s631
        %p633 = pneg %p83
        %p634 = pneg %p80
        %p635 = pneg %p104
        %p636 = pneg %p101
        %p637 = pneg %p125
        %p638 = pneg %p122
        %p639 = pneg %p146
        %p640 = pneg %p143
        %p641 = pneg %p167
        %p642 = pneg %p164
        %p643 = pneg %p188
        %p644 = pneg %p185
        %p645 = pneg %p209
        %p646 = pneg %p206
        %p647 = pneg %p230
        %p648 = pneg %p227
        %p649 = pneg %p251
        %p650 = pneg %p248
        %p651 = pneg %p272
        %p652 = pneg %p269
        %p653 = pneg %p293
        %p654 = pneg %p290
        %p655 = pneg %p314
        %p656 = pneg %p311
        %p657 = pneg %p335
        %p658 = pneg %p332
        %p659 = pneg %p356
        %p660 = pneg %p353
        %p661 = pneg %p377
        %p662 = pneg %p374
        %p663 = pneg %p398
        %p664 = pneg %p395
        %p665 = pneg %p419
        %p666 = pneg %p416
        %p667 = pneg %p445
        %p668 = pneg %p442
        %s669 = sand.u32 %s432, 1
        %s670 = scalar_lea.sflag [#allocation4], %s669
        %s671 = sand.u32 %s432, 1
        %s672 = smul.addr %s671, 8
        %s673 = scalar_lea.vmem [#allocation14], %s672
        %p674 = scmp.lt.s32.totalorder %s36, 1
        %s675 = scalar_select %p674, %s36, 1
        %s676 = smul.addr %s675, 8
        %s677 = scalar_lea.vmem %s0, %s676
        %p678 = scmp.lt.s32.totalorder %s36, 1
        %s679 = scalar_select %p678, %s36, 1
        %s680 = smul.addr %s679, 2
        %s681 = smul.addr %s680, 8
        %s682 = scalar_lea.vmem %s1, %s681
        %v684 = vld [vmem:[%s677] sm:$0xff]
        %v685 = vld [vmem:[%s682] sm:$0xff]
        %v686 = vld [vmem:[%s682 + $0x8] sm:$0xff]
        %v687 = vld [vmem:[#allocation2] sm:$0x1]
        %v688 = vld [vmem:[#allocation5] sm:$0x1]
        %vm689 = vcmask 261120
        %v690 = vsel %vm689, %v684, 0.0
        %691 = vadd.xlane.f32.xlu0 %v690
        %v692 = vpop.xlane.xlu0 %691
        %v693 = vrcp.pop 32.0
        %v694 = vmul.f32 %v692, %v693
        %v695 = vsub.f32 %v684, %v694
        %v696 = vmul.f32 %v695, %v695
        %v697 = vsel %vm689, %v696, 0.0
        %698 = vadd.xlane.f32.xlu0 %v697
        %v699 = vpop.xlane.xlu0 %698
        %v700 = vmul.f32 %v699, %v693
        %v701 = vadd.f32 %v700, 1e-05
        %v702 = vrsqrt.pop %v701
        %v703 = vmul.f32 %v695, %v702
        %v705 = vlaneseq
        %v706 = vshrl.u32 %v705, 7
        %v707 = vsub.s32 0, %v706
        %v708 = vrot.slane %v687, %v707
        %v710 = vmul.f32 %v703, %v708
        %v712 = vlaneseq
        %v713 = vshrl.u32 %v712, 7
        %v714 = vsub.s32 0, %v713
        %v715 = vrot.slane %v688, %v714
        %v717 = vadd.f32 %v710, %v715
        %v718 = vpack.c.bf16 %v717, %v717
        %v719 = vsel %vm689, %v685, 0.0
        %720 = vadd.xlane.f32.xlu0 %v719
        %v721 = vpop.xlane.xlu0 %720
        %v722 = vsel %vm689, %v686, 0.0
        %723 = vadd.xlane.f32.xlu0 %v722
        %v724 = vpop.xlane.xlu0 %723
        %v725 = vmul.f32 %v721, %v693
        %v726 = vmul.f32 %v724, %v693
        %v727 = vsub.f32 %v685, %v725
        %v728 = vsub.f32 %v686, %v726
        %v729 = vmul.f32 %v727, %v727
        %v730 = vmul.f32 %v728, %v728
        %v731 = vsel %vm689, %v729, 0.0
        %732 = vadd.xlane.f32.xlu0 %v731
        %v733 = vpop.xlane.xlu0 %732
        %v734 = vsel %vm689, %v730, 0.0
        %735 = vadd.xlane.f32.xlu0 %v734
        %v736 = vpop.xlane.xlu0 %735
        %v737 = vmul.f32 %v733, %v693
        %v738 = vmul.f32 %v736, %v693
        %v739 = vadd.f32 %v737, 1e-05
        %v740 = vadd.f32 %v738, 1e-05
        %v741 = vrsqrt.pop %v739
        %v742 = vrsqrt.pop %v740
        %v743 = vmul.f32 %v727, %v741
        %v744 = vmul.f32 %v728, %v742
        %v745 = vmul.f32 %v743, %v708
        %v746 = vmul.f32 %v744, %v708
        %v747 = vadd.f32 %v745, %v715
        %v748 = vadd.f32 %v746, %v715
        %v749 = vpack.c.bf16 %v748, %v747
        %v750 = vld [vmem:[%s4] sm:$0xf]
        %v751 = vld [vmem:[%s4 + $0x4] sm:$0xf]
        %v752 = vld [vmem:[%s4 + $0x8] sm:$0xf]
        %v753 = vld [vmem:[%s4 + $0xc] sm:$0xf]
        %v754 = vld [vmem:[#allocation7] sm:$0x1]
        %v756 = vlaneseq
        %v757 = vshrl.u32 %v756, 7
        %v758 = vsub.s32 0, %v757
        %v759 = vrot.slane %v754, %v758
        %v765 = vunpack.c.l.b16 %v750
        %v766 = vunpack.c.l.b16 %v751
        %v767 = vunpack.c.l.b16 %v752
        %v768 = vunpack.c.l.b16 %v753
        %v769 = vpack.c.b16 %v766, %v765
        %v770 = vpack.c.b16 %v768, %v767
        %v774 = vsel %vm689, %v718, 0
        %776 = vmatprep.subr.bf16.mxu0 0
        %777 = vmatpush1.bf16.msra.mxu0 0
        %778 = vmatprep.subr.bf16.mxu0 0
        %779 = vmatpush1.bf16.msra.mxu0 0
        %780 = vmatprep.subr.bf16.mxu0 0
        %781 = vmatpush1.bf16.msra.mxu0 0
        %782 = vmatprep.subr.bf16.mxu0 0
        %783 = vmatpush1.bf16.msra.mxu0 0
        %784 = vmatprep.subr.bf16.mxu0 0
        %785 = vmatpush1.bf16.msra.mxu0 0
        %786 = vmatprep.subr.bf16.mxu0 0
        %787 = vmatpush1.bf16.msra.mxu0 0
        %788 = vmatprep.subr.bf16.mxu0 0
        %789 = vmatpush1.bf16.msra.mxu0 %v770
        %790 = vmatprep.subr.bf16.mxu0 0
        %791 = vmatpush1.bf16.msra.mxu0 %v769
        %792 = vmatprep.subr.bf16.mxu0 0
        %793 = vmatpush2.bf16.msra.mxu0 0
        %794 = vmatprep.subr.bf16.mxu0 0
        %795 = vmatpush2.bf16.msra.mxu0 0
        %796 = vmatprep.subr.bf16.mxu0 0
        %797 = vmatpush2.bf16.msra.mxu0 0
        %798 = vmatprep.subr.bf16.mxu0 0
        %799 = vmatpush2.bf16.msra.mxu0 0
        %800 = vmatprep.subr.bf16.mxu0 0
        %801 = vmatpush2.bf16.msra.mxu0 0
        %802 = vmatprep.subr.bf16.mxu0 0
        %803 = vmatpush2.bf16.msra.mxu0 0
        %804 = vmatprep.subr.bf16.mxu0 0
        %805 = vmatpush2.bf16.msra.mxu0 0
        %806 = vmatprep.subr.bf16.mxu0 0
        %807 = vmatpush2.bf16.msra.mxu0 0
        %808 = vmatprep.mubr.bf16.mxu0 0
        %809 = vmatmul.mubr.bf16.gmra.mxu0 %v774
        %v810 = vpop.f32.mrf.mxu0
        %v811 = vadd.f32 %v759, %v810
        %v812 = vpop.f32.mrf.mxu0
        %v813 = vpop.f32.mrf.mxu0
        %v814 = vpop.f32.mrf.mxu0
        %815 = vdwg.mxu0
        %v816 = vld [vmem:[%s6] sm:$0xf]
        %v817 = vld [vmem:[%s6 + $0x4] sm:$0xf]
        %v818 = vld [vmem:[%s6 + $0x8] sm:$0xf]
        %v819 = vld [vmem:[%s6 + $0xc] sm:$0xf]
        %v820 = vld [vmem:[#allocation8] sm:$0x1]
        %v822 = vlaneseq
        %v823 = vshrl.u32 %v822, 7
        %v824 = vsub.s32 0, %v823
        %v825 = vrot.slane %v820, %v824
        %v831 = vunpack.c.l.b16 %v816
        %v832 = vunpack.c.l.b16 %v817
        %v833 = vunpack.c.l.b16 %v818
        %v834 = vunpack.c.l.b16 %v819
        %v835 = vpack.c.b16 %v832, %v831
        %v836 = vpack.c.b16 %v834, %v833
        %v840 = vsel %vm689, %v749, 0
        %842 = vmatprep.subr.bf16.mxu0 0
        %843 = vmatpush1.bf16.msra.mxu0 0
        %844 = vmatprep.subr.bf16.mxu0 0
        %845 = vmatpush1.bf16.msra.mxu0 0
        %846 = vmatprep.subr.bf16.mxu0 0
        %847 = vmatpush1.bf16.msra.mxu0 0
        %848 = vmatprep.subr.bf16.mxu0 0
        %849 = vmatpush1.bf16.msra.mxu0 0
        %850 = vmatprep.subr.bf16.mxu0 0
        %851 = vmatpush1.bf16.msra.mxu0 0
        %852 = vmatprep.subr.bf16.mxu0 0
        %853 = vmatpush1.bf16.msra.mxu0 0
        %854 = vmatprep.subr.bf16.mxu0 0
        %855 = vmatpush1.bf16.msra.mxu0 %v836
        %856 = vmatprep.subr.bf16.mxu0 0
        %857 = vmatpush1.bf16.msra.mxu0 %v835
        %858 = vmatprep.subr.bf16.mxu0 0
        %859 = vmatpush2.bf16.msra.mxu0 0
        %860 = vmatprep.subr.bf16.mxu0 0
        %861 = vmatpush2.bf16.msra.mxu0 0
        %862 = vmatprep.subr.bf16.mxu0 0
        %863 = vmatpush2.bf16.msra.mxu0 0
        %864 = vmatprep.subr.bf16.mxu0 0
        %865 = vmatpush2.bf16.msra.mxu0 0
        %866 = vmatprep.subr.bf16.mxu0 0
        %867 = vmatpush2.bf16.msra.mxu0 0
        %868 = vmatprep.subr.bf16.mxu0 0
        %869 = vmatpush2.bf16.msra.mxu0 0
        %870 = vmatprep.subr.bf16.mxu0 0
        %871 = vmatpush2.bf16.msra.mxu0 0
        %872 = vmatprep.subr.bf16.mxu0 0
        %873 = vmatpush2.bf16.msra.mxu0 0
        %874 = vmatprep.mubr.bf16.mxu0 0
        %875 = vmatmul.mubr.bf16.gmra.mxu0 %v840
        %v876 = vpop.f32.mrf.mxu0
        %v877 = vadd.f32 %v825, %v876
        %v878 = vpop.f32.mrf.mxu0
        %v879 = vpop.f32.mrf.mxu0
        %v880 = vadd.f32 %v825, %v879
        %v881 = vpop.f32.mrf.mxu0
        %882 = vdwg.mxu0
        %v883 = vld [vmem:[#allocation10] sm:$0xf]
        %v884 = vld [vmem:[#allocation10 + $0x4] sm:$0xf]
        %v885 = vld [vmem:[#allocation10 + $0x8] sm:$0xf]
        %v886 = vld [vmem:[#allocation10 + $0xc] sm:$0xf]
        %v887 = vld [vmem:[#allocation11] sm:$0x1]
        %v889 = vlaneseq
        %v890 = vshrl.u32 %v889, 7
        %v891 = vsub.s32 0, %v890
        %v892 = vrot.slane %v887, %v891
        %v898 = vunpack.c.l.b16 %v883
        %v899 = vunpack.c.l.b16 %v884
        %v900 = vunpack.c.l.b16 %v885
        %v901 = vunpack.c.l.b16 %v886
        %v902 = vpack.c.b16 %v899, %v898
        %v903 = vpack.c.b16 %v901, %v900
        %906 = vmatprep.subr.bf16.mxu0 0
        %907 = vmatpush1.bf16.msra.mxu0 0
        %908 = vmatprep.subr.bf16.mxu0 0
        %909 = vmatpush1.bf16.msra.mxu0 0
        %910 = vmatprep.subr.bf16.mxu0 0
        %911 = vmatpush1.bf16.msra.mxu0 0
        %912 = vmatprep.subr.bf16.mxu0 0
        %913 = vmatpush1.bf16.msra.mxu0 0
        %914 = vmatprep.subr.bf16.mxu0 0
        %915 = vmatpush1.bf16.msra.mxu0 0
        %916 = vmatprep.subr.bf16.mxu0 0
        %917 = vmatpush1.bf16.msra.mxu0 0
        %918 = vmatprep.subr.bf16.mxu0 0
        %919 = vmatpush1.bf16.msra.mxu0 %v903
        %920 = vmatprep.subr.bf16.mxu0 0
        %921 = vmatpush1.bf16.msra.mxu0 %v902
        %922 = vmatprep.subr.bf16.mxu0 0
        %923 = vmatpush2.bf16.msra.mxu0 0
        %924 = vmatprep.subr.bf16.mxu0 0
        %925 = vmatpush2.bf16.msra.mxu0 0
        %926 = vmatprep.subr.bf16.mxu0 0
        %927 = vmatpush2.bf16.msra.mxu0 0
        %928 = vmatprep.subr.bf16.mxu0 0
        %929 = vmatpush2.bf16.msra.mxu0 0
        %930 = vmatprep.subr.bf16.mxu0 0
        %931 = vmatpush2.bf16.msra.mxu0 0
        %932 = vmatprep.subr.bf16.mxu0 0
        %933 = vmatpush2.bf16.msra.mxu0 0
        %934 = vmatprep.subr.bf16.mxu0 0
        %935 = vmatpush2.bf16.msra.mxu0 0
        %936 = vmatprep.subr.bf16.mxu0 0
        %937 = vmatpush2.bf16.msra.mxu0 0
        %938 = vmatprep.mubr.bf16.mxu0 0
        %939 = vmatmul.mubr.bf16.gmra.mxu0 %v840
        %v940 = vpop.f32.mrf.mxu0
        %v941 = vadd.f32 %v892, %v940
        %v942 = vpop.f32.mrf.mxu0
        %v943 = vpop.f32.mrf.mxu0
        %v944 = vadd.f32 %v892, %v943
        %v945 = vpop.f32.mrf.mxu0
        %946 = vdwg.mxu0
        %v947 = vpack.c.bf16 %v811, %v811
        %v948 = vpack.c.bf16 %v880, %v877
        %v949 = vpack.c.bf16 %v944, %v941
        %v950 = vld [vmem:[%s11] sm:$0x1]
        %v952 = vlaneseq
        %v953 = vshrl.u32 %v952, 7
        %v954 = vsub.s32 0, %v953
        %v955 = vrot.slane %v950, %v954
        %v957 = vadd.f32 %v684, %v955
        %vm958 = vcmask 31744
        %v960 = vsel %vm958, %v947, 0
        %v963 = vsel %vm958, %v948, 0
        %965 = vmatprep.subr.bf16.mxu0 0
        %966 = vmatpush1.bf16.xpose.msra.mxu0 0
        %967 = vmatprep.subr.bf16.mxu0 0
        %968 = vmatpush1.bf16.xpose.msra.mxu0 0
        %969 = vmatprep.subr.bf16.mxu0 0
        %970 = vmatpush1.bf16.xpose.msra.mxu0 0
        %971 = vmatprep.subr.bf16.mxu0 0
        %972 = vmatpush1.bf16.xpose.msra.mxu0 0
        %973 = vmatprep.subr.bf16.mxu0 0
        %974 = vmatpush1.bf16.xpose.msra.mxu0 0
        %975 = vmatprep.subr.bf16.mxu0 0
        %976 = vmatpush1.bf16.xpose.msra.mxu0 0
        %977 = vmatprep.subr.bf16.mxu0 0
        %978 = vmatpush1.bf16.xpose.msra.mxu0 0
        %979 = vmatprep.subr.bf16.mxu0 0
        %980 = vmatpush1.bf16.xpose.msra.mxu0 %v963
        %981 = vmatprep.subr.bf16.mxu0 0
        %982 = vmatpush2.bf16.xpose.msra.mxu0 0
        %983 = vmatprep.subr.bf16.mxu0 0
        %984 = vmatpush2.bf16.xpose.msra.mxu0 0
        %985 = vmatprep.subr.bf16.mxu0 0
        %986 = vmatpush2.bf16.xpose.msra.mxu0 0
        %987 = vmatprep.subr.bf16.mxu0 0
        %988 = vmatpush2.bf16.xpose.msra.mxu0 0
        %989 = vmatprep.subr.bf16.mxu0 0
        %990 = vmatpush2.bf16.xpose.msra.mxu0 0
        %991 = vmatprep.subr.bf16.mxu0 0
        %992 = vmatpush2.bf16.xpose.msra.mxu0 0
        %993 = vmatprep.subr.bf16.mxu0 0
        %994 = vmatpush2.bf16.xpose.msra.mxu0 0
        %995 = vmatprep.subr.bf16.mxu0 0
        %996 = vmatpush2.bf16.xpose.msra.mxu0 0
        %997 = vmatprep.mubr.bf16.mxu0 0
        %998 = vmatmul.mubr.bf16.gmra.mxu0 %v960
        %v999 = vpop.f32.mrf.mxu0
        %v1000 = vadd.f32 0.0, %v999
        %v1001 = vpop.f32.mrf.mxu0
        %v1002 = vpop.f32.mrf.mxu0
        %v1003 = vpop.f32.mrf.mxu0
        %1004 = vdwg.mxu0
        %vm1005 = vcmask 130048
        %v1006 = vsel %vm1005, %v1000, -inf
        %v1007 = vrot.slane %v1006, 4
        %v1008 = vmax.f32 %v1006, %v1007
        %v1009 = vrot.slane %v1008, 2
        %v1010 = vmax.f32 %v1008, %v1009
        %v1011 = vrot.slane %v1010, 1
        %v1012 = vmax.f32 %v1010, %v1011
        %v1013 = vsub.f32 %v1000, %v1012
        %v1014 = vmul.f32 %v1013, 1.442695
        %v1015 = vpow.pop %v1014
        %v1016 = vsel %vm1005, %v1015, 0.0
        %v1017 = vrot.slane %v1016, 4
        %v1018 = vadd.f32 %v1016, %v1017
        %v1019 = vrot.slane %v1018, 2
        %v1020 = vadd.f32 %v1018, %v1019
        %v1021 = vrot.slane %v1020, 1
        %v1022 = vadd.f32 %v1020, %v1021
        %v1023 = vrcp.pop %v1022
        %v1024 = vmul.f32 %v1015, %v1023
        %v1025 = vpack.c.bf16 %v1024, %v1024
        %v1027 = vsel %vm1005, %v1025, 0
        %1029 = vmatprep.subr.bf16.mxu0 0
        %1030 = vmatpush1.bf16.msra.mxu0 0
        %1031 = vmatprep.subr.bf16.mxu0 0
        %1032 = vmatpush1.bf16.msra.mxu0 0
        %1033 = vmatprep.subr.bf16.mxu0 0
        %1034 = vmatpush1.bf16.msra.mxu0 0
        %1035 = vmatprep.subr.bf16.mxu0 0
        %1036 = vmatpush1.bf16.msra.mxu0 0
        %1037 = vmatprep.subr.bf16.mxu0 0
        %1038 = vmatpush1.bf16.msra.mxu0 0
        %1039 = vmatprep.subr.bf16.mxu0 0
        %1040 = vmatpush1.bf16.msra.mxu0 0
        %1041 = vmatprep.subr.bf16.mxu0 0
        %1042 = vmatpush1.bf16.msra.mxu0 0
        %1043 = vmatprep.subr.bf16.mxu0 0
        %1044 = vmatpush1.bf16.msra.mxu0 %v949
        %1045 = vmatprep.subr.bf16.mxu0 0
        %1046 = vmatpush2.bf16.msra.mxu0 0
        %1047 = vmatprep.subr.bf16.mxu0 0
        %1048 = vmatpush2.bf16.msra.mxu0 0
        %1049 = vmatprep.subr.bf16.mxu0 0
        %1050 = vmatpush2.bf16.msra.mxu0 0
        %1051 = vmatprep.subr.bf16.mxu0 0
        %1052 = vmatpush2.bf16.msra.mxu0 0
        %1053 = vmatprep.subr.bf16.mxu0 0
        %1054 = vmatpush2.bf16.msra.mxu0 0
        %1055 = vmatprep.subr.bf16.mxu0 0
        %1056 = vmatpush2.bf16.msra.mxu0 0
        %1057 = vmatprep.subr.bf16.mxu0 0
        %1058 = vmatpush2.bf16.msra.mxu0 0
        %1059 = vmatprep.subr.bf16.mxu0 0
        %1060 = vmatpush2.bf16.msra.mxu0 0
        %1061 = vmatprep.mubr.bf16.mxu0 0
        %1062 = vmatmul.mubr.bf16.gmra.mxu0 %v1027
        %v1063 = vpop.f32.mrf.mxu0
        %v1064 = vadd.f32 0.0, %v1063
        %v1065 = vpop.f32.mrf.mxu0
        %v1066 = vpop.f32.mrf.mxu0
        %v1067 = vpop.f32.mrf.mxu0
        %1068 = vdwg.mxu0
        %v1069 = vpack.c.bf16 %v1064, %v1064
        %v1070 = vld [vmem:[%s10] sm:$0x3]
        %v1072 = vsel %vm958, %v1069, 0
        %vm1074 = vcmask 1041408
        %v1076 = vsel %vm1074, %v1070, 0
        %1078 = vmatprep.subr.bf16.mxu0 0
        %1079 = vmatpush1.bf16.msra.mxu0 0
        %1080 = vmatprep.subr.bf16.mxu0 0
        %1081 = vmatpush1.bf16.msra.mxu0 0
        %1082 = vmatprep.subr.bf16.mxu0 0
        %1083 = vmatpush1.bf16.msra.mxu0 0
        %1084 = vmatprep.subr.bf16.mxu0 0
        %1085 = vmatpush1.bf16.msra.mxu0 0
        %1086 = vmatprep.subr.bf16.mxu0 0
        %1087 = vmatpush1.bf16.msra.mxu0 0
        %1088 = vmatprep.subr.bf16.mxu0 0
        %1089 = vmatpush1.bf16.msra.mxu0 0
        %1090 = vmatprep.subr.bf16.mxu0 0
        %1091 = vmatpush1.bf16.msra.mxu0 0
        %1092 = vmatprep.subr.bf16.mxu0 0
        %1093 = vmatpush1.bf16.msra.mxu0 %v1076
        %1094 = vmatprep.subr.bf16.mxu0 0
        %1095 = vmatpush2.bf16.msra.mxu0 0
        %1096 = vmatprep.subr.bf16.mxu0 0
        %1097 = vmatpush2.bf16.msra.mxu0 0
        %1098 = vmatprep.subr.bf16.mxu0 0
        %1099 = vmatpush2.bf16.msra.mxu0 0
        %1100 = vmatprep.subr.bf16.mxu0 0
        %1101 = vmatpush2.bf16.msra.mxu0 0
        %1102 = vmatprep.subr.bf16.mxu0 0
        %1103 = vmatpush2.bf16.msra.mxu0 0
        %1104 = vmatprep.subr.bf16.mxu0 0
        %1105 = vmatpush2.bf16.msra.mxu0 0
        %1106 = vmatprep.subr.bf16.mxu0 0
        %1107 = vmatpush2.bf16.msra.mxu0 0
        %1108 = vmatprep.subr.bf16.mxu0 0
        %1109 = vmatpush2.bf16.msra.mxu0 0
        %1110 = vmatprep.mubr.bf16.mxu0 0
        %1111 = vmatmul.mubr.bf16.gmra.mxu0 %v1072
        %v1112 = vpop.f32.mrf.mxu0
        %v1113 = vadd.f32 0.0, %v1112
        %v1114 = vpop.f32.mrf.mxu0
        %v1115 = vpop.f32.mrf.mxu0
        %v1116 = vpop.f32.mrf.mxu0
        %1117 = vdwg.mxu0
        %v1118 = vadd.f32 %v957, %v1113
        %1120 = vrot.lane.b32.xlu0 %v947, 124
        %v1121 = vpop.permute.xlu0 %1120
        %1123 = vrot.lane.b32.xlu0 %v948, 124
        %v1124 = vpop.permute.xlu0 %1123
        %v1126 = vsel %vm958, %v1121, 0
        %v1129 = vsel %vm958, %v1124, 0
        %1131 = vmatprep.subr.bf16.mxu0 0
        %1132 = vmatpush1.bf16.xpose.msra.mxu0 0
        %1133 = vmatprep.subr.bf16.mxu0 0
        %1134 = vmatpush1.bf16.xpose.msra.mxu0 0
        %1135 = vmatprep.subr.bf16.mxu0 0
        %1136 = vmatpush1.bf16.xpose.msra.mxu0 0
        %1137 = vmatprep.subr.bf16.mxu0 0
        %1138 = vmatpush1.bf16.xpose.msra.mxu0 0
        %1139 = vmatprep.subr.bf16.mxu0 0
        %1140 = vmatpush1.bf16.xpose.msra.mxu0 0
        %1141 = vmatprep.subr.bf16.mxu0 0
        %1142 = vmatpush1.bf16.xpose.msra.mxu0 0
        %1143 = vmatprep.subr.bf16.mxu0 0
        %1144 = vmatpush1.bf16.xpose.msra.mxu0 0
        %1145 = vmatprep.subr.bf16.mxu0 0
        %1146 = vmatpush1.bf16.xpose.msra.mxu0 %v1129
        %1147 = vmatprep.subr.bf16.mxu0 0
        %1148 = vmatpush2.bf16.xpose.msra.mxu0 0
        %1149 = vmatprep.subr.bf16.mxu0 0
        %1150 = vmatpush2.bf16.xpose.msra.mxu0 0
        %1151 = vmatprep.subr.bf16.mxu0 0
        %1152 = vmatpush2.bf16.xpose.msra.mxu0 0
        %1153 = vmatprep.subr.bf16.mxu0 0
        %1154 = vmatpush2.bf16.xpose.msra.mxu0 0
        %1155 = vmatprep.subr.bf16.mxu0 0
        %1156 = vmatpush2.bf16.xpose.msra.mxu0 0
        %1157 = vmatprep.subr.bf16.mxu0 0
        %1158 = vmatpush2.bf16.xpose.msra.mxu0 0
        %1159 = vmatprep.subr.bf16.mxu0 0
        %1160 = vmatpush2.bf16.xpose.msra.mxu0 0
        %1161 = vmatprep.subr.bf16.mxu0 0
        %1162 = vmatpush2.bf16.xpose.msra.mxu0 0
        %1163 = vmatprep.mubr.bf16.mxu0 0
        %1164 = vmatmul.mubr.bf16.gmra.mxu0 %v1126
        %v1165 = vpop.f32.mrf.mxu0
        %v1166 = vadd.f32 0.0, %v1165
        %v1167 = vpop.f32.mrf.mxu0
        %v1168 = vpop.f32.mrf.mxu0
        %v1169 = vpop.f32.mrf.mxu0
        %1170 = vdwg.mxu0
        %v1171 = vsel %vm1005, %v1166, -inf
        %v1172 = vrot.slane %v1171, 4
        %v1173 = vmax.f32 %v1171, %v1172
        %v1174 = vrot.slane %v1173, 2
        %v1175 = vmax.f32 %v1173, %v1174
        %v1176 = vrot.slane %v1175, 1
        %v1177 = vmax.f32 %v1175, %v1176
        %v1178 = vsub.f32 %v1166, %v1177
        %v1179 = vmul.f32 %v1178, 1.442695
        %v1180 = vpow.pop %v1179
        %v1181 = vsel %vm1005, %v1180, 0.0
        %v1182 = vrot.slane %v1181, 4
        %v1183 = vadd.f32 %v1181, %v1182
        %v1184 = vrot.slane %v1183, 2
        %v1185 = vadd.f32 %v1183, %v1184
        %v1186 = vrot.slane %v1185, 1
        %v1187 = vadd.f32 %v1185, %v1186
        %v1188 = vrcp.pop %v1187
        %v1189 = vmul.f32 %v1180, %v1188
        %v1190 = vpack.c.bf16 %v1189, %v1189
        %1192 = vrot.lane.b32.xlu0 %v949, 124
        %v1193 = vpop.permute.xlu0 %1192
        %v1196 = vsel %vm1005, %v1190, 0
        %1198 = vmatprep.subr.bf16.mxu0 0
        %1199 = vmatpush1.bf16.msra.mxu0 0
        %1200 = vmatprep.subr.bf16.mxu0 0
        %1201 = vmatpush1.bf16.msra.mxu0 0
        %1202 = vmatprep.subr.bf16.mxu0 0
        %1203 = vmatpush1.bf16.msra.mxu0 0
        %1204 = vmatprep.subr.bf16.mxu0 0
        %1205 = vmatpush1.bf16.msra.mxu0 0
        %1206 = vmatprep.subr.bf16.mxu0 0
        %1207 = vmatpush1.bf16.msra.mxu0 0
        %1208 = vmatprep.subr.bf16.mxu0 0
        %1209 = vmatpush1.bf16.msra.mxu0 0
        %1210 = vmatprep.subr.bf16.mxu0 0
        %1211 = vmatpush1.bf16.msra.mxu0 0
        %1212 = vmatprep.subr.bf16.mxu0 0
        %1213 = vmatpush1.bf16.msra.mxu0 %v1193
        %1214 = vmatprep.subr.bf16.mxu0 0
        %1215 = vmatpush2.bf16.msra.mxu0 0
        %1216 = vmatprep.subr.bf16.mxu0 0
        %1217 = vmatpush2.bf16.msra.mxu0 0
        %1218 = vmatprep.subr.bf16.mxu0 0
        %1219 = vmatpush2.bf16.msra.mxu0 0
        %1220 = vmatprep.subr.bf16.mxu0 0
        %1221 = vmatpush2.bf16.msra.mxu0 0
        %1222 = vmatprep.subr.bf16.mxu0 0
        %1223 = vmatpush2.bf16.msra.mxu0 0
        %1224 = vmatprep.subr.bf16.mxu0 0
        %1225 = vmatpush2.bf16.msra.mxu0 0
        %1226 = vmatprep.subr.bf16.mxu0 0
        %1227 = vmatpush2.bf16.msra.mxu0 0
        %1228 = vmatprep.subr.bf16.mxu0 0
        %1229 = vmatpush2.bf16.msra.mxu0 0
        %1230 = vmatprep.mubr.bf16.mxu0 0
        %1231 = vmatmul.mubr.bf16.gmra.mxu0 %v1196
        %v1232 = vpop.f32.mrf.mxu0
        %v1233 = vadd.f32 0.0, %v1232
        %v1234 = vpop.f32.mrf.mxu0
        %v1235 = vpop.f32.mrf.mxu0
        %v1236 = vpop.f32.mrf.mxu0
        %1237 = vdwg.mxu0
        %v1238 = vpack.c.bf16 %v1233, %v1233
        %s1239 = scalar_lea.vmem %s10, 2
        %v1240 = vld [vmem:[%s1239] sm:$0x3]
        %v1242 = vsel %vm958, %v1238, 0
        %v1245 = vsel %vm1074, %v1240, 0
        %1247 = vmatprep.subr.bf16.mxu0 0
        %1248 = vmatpush1.bf16.msra.mxu0 0
        %1249 = vmatprep.subr.bf16.mxu0 0
        %1250 = vmatpush1.bf16.msra.mxu0 0
        %1251 = vmatprep.subr.bf16.mxu0 0
        %1252 = vmatpush1.bf16.msra.mxu0 0
        %1253 = vmatprep.subr.bf16.mxu0 0
        %1254 = vmatpush1.bf16.msra.mxu0 0
        %1255 = vmatprep.subr.bf16.mxu0 0
        %1256 = vmatpush1.bf16.msra.mxu0 0
        %1257 = vmatprep.subr.bf16.mxu0 0
        %1258 = vmatpush1.bf16.msra.mxu0 0
        %1259 = vmatprep.subr.bf16.mxu0 0
        %1260 = vmatpush1.bf16.msra.mxu0 0
        %1261 = vmatprep.subr.bf16.mxu0 0
        %1262 = vmatpush1.bf16.msra.mxu0 %v1245
        %1263 = vmatprep.subr.bf16.mxu0 0
        %1264 = vmatpush2.bf16.msra.mxu0 0
        %1265 = vmatprep.subr.bf16.mxu0 0
        %1266 = vmatpush2.bf16.msra.mxu0 0
        %1267 = vmatprep.subr.bf16.mxu0 0
        %1268 = vmatpush2.bf16.msra.mxu0 0
        %1269 = vmatprep.subr.bf16.mxu0 0
        %1270 = vmatpush2.bf16.msra.mxu0 0
        %1271 = vmatprep.subr.bf16.mxu0 0
        %1272 = vmatpush2.bf16.msra.mxu0 0
        %1273 = vmatprep.subr.bf16.mxu0 0
        %1274 = vmatpush2.bf16.msra.mxu0 0
        %1275 = vmatprep.subr.bf16.mxu0 0
        %1276 = vmatpush2.bf16.msra.mxu0 0
        %1277 = vmatprep.subr.bf16.mxu0 0
        %1278 = vmatpush2.bf16.msra.mxu0 0
        %1279 = vmatprep.mubr.bf16.mxu0 0
        %1280 = vmatmul.mubr.bf16.gmra.mxu0 %v1242
        %v1281 = vpop.f32.mrf.mxu0
        %v1282 = vadd.f32 0.0, %v1281
        %v1283 = vpop.f32.mrf.mxu0
        %v1284 = vpop.f32.mrf.mxu0
        %v1285 = vpop.f32.mrf.mxu0
        %1286 = vdwg.mxu0
        %v1287 = vadd.f32 %v1118, %v1282
        %1288 = vrot.lane.b32.xlu0 %v947, 120
        %v1289 = vpop.permute.xlu0 %1288
        %1290 = vrot.lane.b32.xlu0 %v948, 120
        %v1291 = vpop.permute.xlu0 %1290
        %v1293 = vsel %vm958, %v1289, 0
        %v1296 = vsel %vm958, %v1291, 0
        %1298 = vmatprep.subr.bf16.mxu0 0
        %1299 = vmatpush1.bf16.xpose.msra.mxu0 0
        %1300 = vmatprep.subr.bf16.mxu0 0
        %1301 = vmatpush1.bf16.xpose.msra.mxu0 0
        %1302 = vmatprep.subr.bf16.mxu0 0
        %1303 = vmatpush1.bf16.xpose.msra.mxu0 0
        %1304 = vmatprep.subr.bf16.mxu0 0
        %1305 = vmatpush1.bf16.xpose.msra.mxu0 0
        %1306 = vmatprep.subr.bf16.mxu0 0
        %1307 = vmatpush1.bf16.xpose.msra.mxu0 0
        %1308 = vmatprep.subr.bf16.mxu0 0
        %1309 = vmatpush1.bf16.xpose.msra.mxu0 0
        %1310 = vmatprep.subr.bf16.mxu0 0
        %1311 = vmatpush1.bf16.xpose.msra.mxu0 0
        %1312 = vmatprep.subr.bf16.mxu0 0
        %1313 = vmatpush1.bf16.xpose.msra.mxu0 %v1296
        %1314 = vmatprep.subr.bf16.mxu0 0
        %1315 = vmatpush2.bf16.xpose.msra.mxu0 0
        %1316 = vmatprep.subr.bf16.mxu0 0
        %1317 = vmatpush2.bf16.xpose.msra.mxu0 0
        %1318 = vmatprep.subr.bf16.mxu0 0
        %1319 = vmatpush2.bf16.xpose.msra.mxu0 0
        %1320 = vmatprep.subr.bf16.mxu0 0
        %1321 = vmatpush2.bf16.xpose.msra.mxu0 0
        %1322 = vmatprep.subr.bf16.mxu0 0
        %1323 = vmatpush2.bf16.xpose.msra.mxu0 0
        %1324 = vmatprep.subr.bf16.mxu0 0
        %1325 = vmatpush2.bf16.xpose.msra.mxu0 0
        %1326 = vmatprep.subr.bf16.mxu0 0
        %1327 = vmatpush2.bf16.xpose.msra.mxu0 0
        %1328 = vmatprep.subr.bf16.mxu0 0
        %1329 = vmatpush2.bf16.xpose.msra.mxu0 0
        %1330 = vmatprep.mubr.bf16.mxu0 0
        %1331 = vmatmul.mubr.bf16.gmra.mxu0 %v1293
        %v1332 = vpop.f32.mrf.mxu0
        %v1333 = vadd.f32 0.0, %v1332
        %v1334 = vpop.f32.mrf.mxu0
        %v1335 = vpop.f32.mrf.mxu0
        %v1336 = vpop.f32.mrf.mxu0
        %1337 = vdwg.mxu0
        %v1338 = vsel %vm1005, %v1333, -inf
        %v1339 = vrot.slane %v1338, 4
        %v1340 = vmax.f32 %v1338, %v1339
        %v1341 = vrot.slane %v1340, 2
        %v1342 = vmax.f32 %v1340, %v1341
        %v1343 = vrot.slane %v1342, 1
        %v1344 = vmax.f32 %v1342, %v1343
        %v1345 = vsub.f32 %v1333, %v1344
        %v1346 = vmul.f32 %v1345, 1.442695
        %v1347 = vpow.pop %v1346
        %v1348 = vsel %vm1005, %v1347, 0.0
        %v1349 = vrot.slane %v1348, 4
        %v1350 = vadd.f32 %v1348, %v1349
        %v1351 = vrot.slane %v1350, 2
        %v1352 = vadd.f32 %v1350, %v1351
        %v1353 = vrot.slane %v1352, 1
        %v1354 = vadd.f32 %v1352, %v1353
        %v1355 = vrcp.pop %v1354
        %v1356 = vmul.f32 %v1347, %v1355
        %v1357 = vpack.c.bf16 %v1356, %v1356
        %1358 = vrot.lane.b32.xlu0 %v949, 120
        %v1359 = vpop.permute.xlu0 %1358
        %v1362 = vsel %vm1005, %v1357, 0
        %1364 = vmatprep.subr.bf16.mxu0 0
        %1365 = vmatpush1.bf16.msra.mxu0 0
        %1366 = vmatprep.subr.bf16.mxu0 0
        %1367 = vmatpush1.bf16.msra.mxu0 0
        %1368 = vmatprep.subr.bf16.mxu0 0
        %1369 = vmatpush1.bf16.msra.mxu0 0
        %1370 = vmatprep.subr.bf16.mxu0 0
        %1371 = vmatpush1.bf16.msra.mxu0 0
        %1372 = vmatprep.subr.bf16.mxu0 0
        %1373 = vmatpush1.bf16.msra.mxu0 0
        %1374 = vmatprep.subr.bf16.mxu0 0
        %1375 = vmatpush1.bf16.msra.mxu0 0
        %1376 = vmatprep.subr.bf16.mxu0 0
        %1377 = vmatpush1.bf16.msra.mxu0 0
        %1378 = vmatprep.subr.bf16.mxu0 0
        %1379 = vmatpush1.bf16.msra.mxu0 %v1359
        %1380 = vmatprep.subr.bf16.mxu0 0
        %1381 = vmatpush2.bf16.msra.mxu0 0
        %1382 = vmatprep.subr.bf16.mxu0 0
        %1383 = vmatpush2.bf16.msra.mxu0 0
        %1384 = vmatprep.subr.bf16.mxu0 0
        %1385 = vmatpush2.bf16.msra.mxu0 0
        %1386 = vmatprep.subr.bf16.mxu0 0
        %1387 = vmatpush2.bf16.msra.mxu0 0
        %1388 = vmatprep.subr.bf16.mxu0 0
        %1389 = vmatpush2.bf16.msra.mxu0 0
        %1390 = vmatprep.subr.bf16.mxu0 0
        %1391 = vmatpush2.bf16.msra.mxu0 0
        %1392 = vmatprep.subr.bf16.mxu0 0
        %1393 = vmatpush2.bf16.msra.mxu0 0
        %1394 = vmatprep.subr.bf16.mxu0 0
        %1395 = vmatpush2.bf16.msra.mxu0 0
        %1396 = vmatprep.mubr.bf16.mxu0 0
        %1397 = vmatmul.mubr.bf16.gmra.mxu0 %v1362
        %v1398 = vpop.f32.mrf.mxu0
        %v1399 = vadd.f32 0.0, %v1398
        %v1400 = vpop.f32.mrf.mxu0
        %v1401 = vpop.f32.mrf.mxu0
        %v1402 = vpop.f32.mrf.mxu0
        %1403 = vdwg.mxu0
        %v1404 = vpack.c.bf16 %v1399, %v1399
        %s1405 = scalar_lea.vmem %s10, 4
        %v1406 = vld [vmem:[%s1405] sm:$0x3]
        %v1408 = vsel %vm958, %v1404, 0
        %v1411 = vsel %vm1074, %v1406, 0
        %1413 = vmatprep.subr.bf16.mxu0 0
        %1414 = vmatpush1.bf16.msra.mxu0 0
        %1415 = vmatprep.subr.bf16.mxu0 0
        %1416 = vmatpush1.bf16.msra.mxu0 0
        %1417 = vmatprep.subr.bf16.mxu0 0
        %1418 = vmatpush1.bf16.msra.mxu0 0
        %1419 = vmatprep.subr.bf16.mxu0 0
        %1420 = vmatpush1.bf16.msra.mxu0 0
        %1421 = vmatprep.subr.bf16.mxu0 0
        %1422 = vmatpush1.bf16.msra.mxu0 0
        %1423 = vmatprep.subr.bf16.mxu0 0
        %1424 = vmatpush1.bf16.msra.mxu0 0
        %1425 = vmatprep.subr.bf16.mxu0 0
        %1426 = vmatpush1.bf16.msra.mxu0 0
        %1427 = vmatprep.subr.bf16.mxu0 0
        %1428 = vmatpush1.bf16.msra.mxu0 %v1411
        %1429 = vmatprep.subr.bf16.mxu0 0
        %1430 = vmatpush2.bf16.msra.mxu0 0
        %1431 = vmatprep.subr.bf16.mxu0 0
        %1432 = vmatpush2.bf16.msra.mxu0 0
        %1433 = vmatprep.subr.bf16.mxu0 0
        %1434 = vmatpush2.bf16.msra.mxu0 0
        %1435 = vmatprep.subr.bf16.mxu0 0
        %1436 = vmatpush2.bf16.msra.mxu0 0
        %1437 = vmatprep.subr.bf16.mxu0 0
        %1438 = vmatpush2.bf16.msra.mxu0 0
        %1439 = vmatprep.subr.bf16.mxu0 0
        %1440 = vmatpush2.bf16.msra.mxu0 0
        %1441 = vmatprep.subr.bf16.mxu0 0
        %1442 = vmatpush2.bf16.msra.mxu0 0
        %1443 = vmatprep.subr.bf16.mxu0 0
        %1444 = vmatpush2.bf16.msra.mxu0 0
        %1445 = vmatprep.mubr.bf16.mxu0 0
        %1446 = vmatmul.mubr.bf16.gmra.mxu0 %v1408
        %v1447 = vpop.f32.mrf.mxu0
        %v1448 = vadd.f32 0.0, %v1447
        %v1449 = vpop.f32.mrf.mxu0
        %v1450 = vpop.f32.mrf.mxu0
        %v1451 = vpop.f32.mrf.mxu0
        %1452 = vdwg.mxu0
        %v1453 = vadd.f32 %v1287, %v1448
        %1454 = vrot.lane.b32.xlu0 %v947, 116
        %v1455 = vpop.permute.xlu0 %1454
        %1456 = vrot.lane.b32.xlu0 %v948, 116
        %v1457 = vpop.permute.xlu0 %1456
        %v1459 = vsel %vm958, %v1455, 0
        %v1462 = vsel %vm958, %v1457, 0
        %1464 = vmatprep.subr.bf16.mxu0 0
        %1465 = vmatpush1.bf16.xpose.msra.mxu0 0
        %1466 = vmatprep.subr.bf16.mxu0 0
        %1467 = vmatpush1.bf16.xpose.msra.mxu0 0
        %1468 = vmatprep.subr.bf16.mxu0 0
        %1469 = vmatpush1.bf16.xpose.msra.mxu0 0
        %1470 = vmatprep.subr.bf16.mxu0 0
        %1471 = vmatpush1.bf16.xpose.msra.mxu0 0
        %1472 = vmatprep.subr.bf16.mxu0 0
        %1473 = vmatpush1.bf16.xpose.msra.mxu0 0
        %1474 = vmatprep.subr.bf16.mxu0 0
        %1475 = vmatpush1.bf16.xpose.msra.mxu0 0
        %1476 = vmatprep.subr.bf16.mxu0 0
        %1477 = vmatpush1.bf16.xpose.msra.mxu0 0
        %1478 = vmatprep.subr.bf16.mxu0 0
        %1479 = vmatpush1.bf16.xpose.msra.mxu0 %v1462
        %1480 = vmatprep.subr.bf16.mxu0 0
        %1481 = vmatpush2.bf16.xpose.msra.mxu0 0
        %1482 = vmatprep.subr.bf16.mxu0 0
        %1483 = vmatpush2.bf16.xpose.msra.mxu0 0
        %1484 = vmatprep.subr.bf16.mxu0 0
        %1485 = vmatpush2.bf16.xpose.msra.mxu0 0
        %1486 = vmatprep.subr.bf16.mxu0 0
        %1487 = vmatpush2.bf16.xpose.msra.mxu0 0
        %1488 = vmatprep.subr.bf16.mxu0 0
        %1489 = vmatpush2.bf16.xpose.msra.mxu0 0
        %1490 = vmatprep.subr.bf16.mxu0 0
        %1491 = vmatpush2.bf16.xpose.msra.mxu0 0
        %1492 = vmatprep.subr.bf16.mxu0 0
        %1493 = vmatpush2.bf16.xpose.msra.mxu0 0
        %1494 = vmatprep.subr.bf16.mxu0 0
        %1495 = vmatpush2.bf16.xpose.msra.mxu0 0
        %1496 = vmatprep.mubr.bf16.mxu0 0
        %1497 = vmatmul.mubr.bf16.gmra.mxu0 %v1459
        %v1498 = vpop.f32.mrf.mxu0
        %v1499 = vadd.f32 0.0, %v1498
        %v1500 = vpop.f32.mrf.mxu0
        %v1501 = vpop.f32.mrf.mxu0
        %v1502 = vpop.f32.mrf.mxu0
        %1503 = vdwg.mxu0
        %v1504 = vsel %vm1005, %v1499, -inf
        %v1505 = vrot.slane %v1504, 4
        %v1506 = vmax.f32 %v1504, %v1505
        %v1507 = vrot.slane %v1506, 2
        %v1508 = vmax.f32 %v1506, %v1507
        %v1509 = vrot.slane %v1508, 1
        %v1510 = vmax.f32 %v1508, %v1509
        %v1511 = vsub.f32 %v1499, %v1510
        %v1512 = vmul.f32 %v1511, 1.442695
        %v1513 = vpow.pop %v1512
        %v1514 = vsel %vm1005, %v1513, 0.0
        %v1515 = vrot.slane %v1514, 4
        %v1516 = vadd.f32 %v1514, %v1515
        %v1517 = vrot.slane %v1516, 2
        %v1518 = vadd.f32 %v1516, %v1517
        %v1519 = vrot.slane %v1518, 1
        %v1520 = vadd.f32 %v1518, %v1519
        %v1521 = vrcp.pop %v1520
        %v1522 = vmul.f32 %v1513, %v1521
        %v1523 = vpack.c.bf16 %v1522, %v1522
        %1524 = vrot.lane.b32.xlu0 %v949, 116
        %v1525 = vpop.permute.xlu0 %1524
        %v1528 = vsel %vm1005, %v1523, 0
        %1530 = vmatprep.subr.bf16.mxu0 0
        %1531 = vmatpush1.bf16.msra.mxu0 0
        %1532 = vmatprep.subr.bf16.mxu0 0
        %1533 = vmatpush1.bf16.msra.mxu0 0
        %1534 = vmatprep.subr.bf16.mxu0 0
        %1535 = vmatpush1.bf16.msra.mxu0 0
        %1536 = vmatprep.subr.bf16.mxu0 0
        %1537 = vmatpush1.bf16.msra.mxu0 0
        %1538 = vmatprep.subr.bf16.mxu0 0
        %1539 = vmatpush1.bf16.msra.mxu0 0
        %1540 = vmatprep.subr.bf16.mxu0 0
        %1541 = vmatpush1.bf16.msra.mxu0 0
        %1542 = vmatprep.subr.bf16.mxu0 0
        %1543 = vmatpush1.bf16.msra.mxu0 0
        %1544 = vmatprep.subr.bf16.mxu0 0
        %1545 = vmatpush1.bf16.msra.mxu0 %v1525
        %1546 = vmatprep.subr.bf16.mxu0 0
        %1547 = vmatpush2.bf16.msra.mxu0 0
        %1548 = vmatprep.subr.bf16.mxu0 0
        %1549 = vmatpush2.bf16.msra.mxu0 0
        %1550 = vmatprep.subr.bf16.mxu0 0
        %1551 = vmatpush2.bf16.msra.mxu0 0
        %1552 = vmatprep.subr.bf16.mxu0 0
        %1553 = vmatpush2.bf16.msra.mxu0 0
        %1554 = vmatprep.subr.bf16.mxu0 0
        %1555 = vmatpush2.bf16.msra.mxu0 0
        %1556 = vmatprep.subr.bf16.mxu0 0
        %1557 = vmatpush2.bf16.msra.mxu0 0
        %1558 = vmatprep.subr.bf16.mxu0 0
        %1559 = vmatpush2.bf16.msra.mxu0 0
        %1560 = vmatprep.subr.bf16.mxu0 0
        %1561 = vmatpush2.bf16.msra.mxu0 0
        %1562 = vmatprep.mubr.bf16.mxu0 0
        %1563 = vmatmul.mubr.bf16.gmra.mxu0 %v1528
        %v1564 = vpop.f32.mrf.mxu0
        %v1565 = vadd.f32 0.0, %v1564
        %v1566 = vpop.f32.mrf.mxu0
        %v1567 = vpop.f32.mrf.mxu0
        %v1568 = vpop.f32.mrf.mxu0
        %1569 = vdwg.mxu0
        %v1570 = vpack.c.bf16 %v1565, %v1565
        %s1571 = scalar_lea.vmem %s10, 6
        %v1572 = vld [vmem:[%s1571] sm:$0x3]
        %v1574 = vsel %vm958, %v1570, 0
        %v1577 = vsel %vm1074, %v1572, 0
        %1579 = vmatprep.subr.bf16.mxu0 0
        %1580 = vmatpush1.bf16.msra.mxu0 0
        %1581 = vmatprep.subr.bf16.mxu0 0
        %1582 = vmatpush1.bf16.msra.mxu0 0
        %1583 = vmatprep.subr.bf16.mxu0 0
        %1584 = vmatpush1.bf16.msra.mxu0 0
        %1585 = vmatprep.subr.bf16.mxu0 0
        %1586 = vmatpush1.bf16.msra.mxu0 0
        %1587 = vmatprep.subr.bf16.mxu0 0
        %1588 = vmatpush1.bf16.msra.mxu0 0
        %1589 = vmatprep.subr.bf16.mxu0 0
        %1590 = vmatpush1.bf16.msra.mxu0 0
        %1591 = vmatprep.subr.bf16.mxu0 0
        %1592 = vmatpush1.bf16.msra.mxu0 0
        %1593 = vmatprep.subr.bf16.mxu0 0
        %1594 = vmatpush1.bf16.msra.mxu0 %v1577
        %1595 = vmatprep.subr.bf16.mxu0 0
        %1596 = vmatpush2.bf16.msra.mxu0 0
        %1597 = vmatprep.subr.bf16.mxu0 0
        %1598 = vmatpush2.bf16.msra.mxu0 0
        %1599 = vmatprep.subr.bf16.mxu0 0
        %1600 = vmatpush2.bf16.msra.mxu0 0
        %1601 = vmatprep.subr.bf16.mxu0 0
        %1602 = vmatpush2.bf16.msra.mxu0 0
        %1603 = vmatprep.subr.bf16.mxu0 0
        %1604 = vmatpush2.bf16.msra.mxu0 0
        %1605 = vmatprep.subr.bf16.mxu0 0
        %1606 = vmatpush2.bf16.msra.mxu0 0
        %1607 = vmatprep.subr.bf16.mxu0 0
        %1608 = vmatpush2.bf16.msra.mxu0 0
        %1609 = vmatprep.subr.bf16.mxu0 0
        %1610 = vmatpush2.bf16.msra.mxu0 0
        %1611 = vmatprep.mubr.bf16.mxu0 0
        %1612 = vmatmul.mubr.bf16.gmra.mxu0 %v1574
        %v1613 = vpop.f32.mrf.mxu0
        %v1614 = vadd.f32 0.0, %v1613
        %v1615 = vpop.f32.mrf.mxu0
        %v1616 = vpop.f32.mrf.mxu0
        %v1617 = vpop.f32.mrf.mxu0
        %1618 = vdwg.mxu0
        %v1619 = vadd.f32 %v1453, %v1614
        %1620 = vrot.lane.b32.xlu0 %v947, 112
        %v1621 = vpop.permute.xlu0 %1620
        %1622 = vrot.lane.b32.xlu0 %v948, 112
        %v1623 = vpop.permute.xlu0 %1622
        %v1625 = vsel %vm958, %v1621, 0
        %v1628 = vsel %vm958, %v1623, 0
        %1630 = vmatprep.subr.bf16.mxu0 0
        %1631 = vmatpush1.bf16.xpose.msra.mxu0 0
        %1632 = vmatprep.subr.bf16.mxu0 0
        %1633 = vmatpush1.bf16.xpose.msra.mxu0 0
        %1634 = vmatprep.subr.bf16.mxu0 0
        %1635 = vmatpush1.bf16.xpose.msra.mxu0 0
        %1636 = vmatprep.subr.bf16.mxu0 0
        %1637 = vmatpush1.bf16.xpose.msra.mxu0 0
        %1638 = vmatprep.subr.bf16.mxu0 0
        %1639 = vmatpush1.bf16.xpose.msra.mxu0 0
        %1640 = vmatprep.subr.bf16.mxu0 0
        %1641 = vmatpush1.bf16.xpose.msra.mxu0 0
        %1642 = vmatprep.subr.bf16.mxu0 0
        %1643 = vmatpush1.bf16.xpose.msra.mxu0 0
        %1644 = vmatprep.subr.bf16.mxu0 0
        %1645 = vmatpush1.bf16.xpose.msra.mxu0 %v1628
        %1646 = vmatprep.subr.bf16.mxu0 0
        %1647 = vmatpush2.bf16.xpose.msra.mxu0 0
        %1648 = vmatprep.subr.bf16.mxu0 0
        %1649 = vmatpush2.bf16.xpose.msra.mxu0 0
        %1650 = vmatprep.subr.bf16.mxu0 0
        %1651 = vmatpush2.bf16.xpose.msra.mxu0 0
        %1652 = vmatprep.subr.bf16.mxu0 0
        %1653 = vmatpush2.bf16.xpose.msra.mxu0 0
        %1654 = vmatprep.subr.bf16.mxu0 0
        %1655 = vmatpush2.bf16.xpose.msra.mxu0 0
        %1656 = vmatprep.subr.bf16.mxu0 0
        %1657 = vmatpush2.bf16.xpose.msra.mxu0 0
        %1658 = vmatprep.subr.bf16.mxu0 0
        %1659 = vmatpush2.bf16.xpose.msra.mxu0 0
        %1660 = vmatprep.subr.bf16.mxu0 0
        %1661 = vmatpush2.bf16.xpose.msra.mxu0 0
        %1662 = vmatprep.mubr.bf16.mxu0 0
        %1663 = vmatmul.mubr.bf16.gmra.mxu0 %v1625
        %v1664 = vpop.f32.mrf.mxu0
        %v1665 = vadd.f32 0.0, %v1664
        %v1666 = vpop.f32.mrf.mxu0
        %v1667 = vpop.f32.mrf.mxu0
        %v1668 = vpop.f32.mrf.mxu0
        %1669 = vdwg.mxu0
        %v1670 = vsel %vm1005, %v1665, -inf
        %v1671 = vrot.slane %v1670, 4
        %v1672 = vmax.f32 %v1670, %v1671
        %v1673 = vrot.slane %v1672, 2
        %v1674 = vmax.f32 %v1672, %v1673
        %v1675 = vrot.slane %v1674, 1
        %v1676 = vmax.f32 %v1674, %v1675
        %v1677 = vsub.f32 %v1665, %v1676
        %v1678 = vmul.f32 %v1677, 1.442695
        %v1679 = vpow.pop %v1678
        %v1680 = vsel %vm1005, %v1679, 0.0
        %v1681 = vrot.slane %v1680, 4
        %v1682 = vadd.f32 %v1680, %v1681
        %v1683 = vrot.slane %v1682, 2
        %v1684 = vadd.f32 %v1682, %v1683
        %v1685 = vrot.slane %v1684, 1
        %v1686 = vadd.f32 %v1684, %v1685
        %v1687 = vrcp.pop %v1686
        %v1688 = vmul.f32 %v1679, %v1687
        %v1689 = vpack.c.bf16 %v1688, %v1688
        %1690 = vrot.lane.b32.xlu0 %v949, 112
        %v1691 = vpop.permute.xlu0 %1690
        %v1694 = vsel %vm1005, %v1689, 0
        %1696 = vmatprep.subr.bf16.mxu0 0
        %1697 = vmatpush1.bf16.msra.mxu0 0
        %1698 = vmatprep.subr.bf16.mxu0 0
        %1699 = vmatpush1.bf16.msra.mxu0 0
        %1700 = vmatprep.subr.bf16.mxu0 0
        %1701 = vmatpush1.bf16.msra.mxu0 0
        %1702 = vmatprep.subr.bf16.mxu0 0
        %1703 = vmatpush1.bf16.msra.mxu0 0
        %1704 = vmatprep.subr.bf16.mxu0 0
        %1705 = vmatpush1.bf16.msra.mxu0 0
        %1706 = vmatprep.subr.bf16.mxu0 0
        %1707 = vmatpush1.bf16.msra.mxu0 0
        %1708 = vmatprep.subr.bf16.mxu0 0
        %1709 = vmatpush1.bf16.msra.mxu0 0
        %1710 = vmatprep.subr.bf16.mxu0 0
        %1711 = vmatpush1.bf16.msra.mxu0 %v1691
        %1712 = vmatprep.subr.bf16.mxu0 0
        %1713 = vmatpush2.bf16.msra.mxu0 0
        %1714 = vmatprep.subr.bf16.mxu0 0
        %1715 = vmatpush2.bf16.msra.mxu0 0
        %1716 = vmatprep.subr.bf16.mxu0 0
        %1717 = vmatpush2.bf16.msra.mxu0 0
        %1718 = vmatprep.subr.bf16.mxu0 0
        %1719 = vmatpush2.bf16.msra.mxu0 0
        %1720 = vmatprep.subr.bf16.mxu0 0
        %1721 = vmatpush2.bf16.msra.mxu0 0
        %1722 = vmatprep.subr.bf16.mxu0 0
        %1723 = vmatpush2.bf16.msra.mxu0 0
        %1724 = vmatprep.subr.bf16.mxu0 0
        %1725 = vmatpush2.bf16.msra.mxu0 0
        %1726 = vmatprep.subr.bf16.mxu0 0
        %1727 = vmatpush2.bf16.msra.mxu0 0
        %1728 = vmatprep.mubr.bf16.mxu0 0
        %1729 = vmatmul.mubr.bf16.gmra.mxu0 %v1694
        %v1730 = vpop.f32.mrf.mxu0
        %v1731 = vadd.f32 0.0, %v1730
        %v1732 = vpop.f32.mrf.mxu0
        %v1733 = vpop.f32.mrf.mxu0
        %v1734 = vpop.f32.mrf.mxu0
        %1735 = vdwg.mxu0
        %v1736 = vpack.c.bf16 %v1731, %v1731
        %s1737 = scalar_lea.vmem %s10, 8
        %v1738 = vld [vmem:[%s1737] sm:$0x3]
        %v1740 = vsel %vm958, %v1736, 0
        %v1743 = vsel %vm1074, %v1738, 0
        %1745 = vmatprep.subr.bf16.mxu0 0
        %1746 = vmatpush1.bf16.msra.mxu0 0
        %1747 = vmatprep.subr.bf16.mxu0 0
        %1748 = vmatpush1.bf16.msra.mxu0 0
        %1749 = vmatprep.subr.bf16.mxu0 0
        %1750 = vmatpush1.bf16.msra.mxu0 0
        %1751 = vmatprep.subr.bf16.mxu0 0
        %1752 = vmatpush1.bf16.msra.mxu0 0
        %1753 = vmatprep.subr.bf16.mxu0 0
        %1754 = vmatpush1.bf16.msra.mxu0 0
        %1755 = vmatprep.subr.bf16.mxu0 0
        %1756 = vmatpush1.bf16.msra.mxu0 0
        %1757 = vmatprep.subr.bf16.mxu0 0
        %1758 = vmatpush1.bf16.msra.mxu0 0
        %1759 = vmatprep.subr.bf16.mxu0 0
        %1760 = vmatpush1.bf16.msra.mxu0 %v1743
        %1761 = vmatprep.subr.bf16.mxu0 0
        %1762 = vmatpush2.bf16.msra.mxu0 0
        %1763 = vmatprep.subr.bf16.mxu0 0
        %1764 = vmatpush2.bf16.msra.mxu0 0
        %1765 = vmatprep.subr.bf16.mxu0 0
        %1766 = vmatpush2.bf16.msra.mxu0 0
        %1767 = vmatprep.subr.bf16.mxu0 0
        %1768 = vmatpush2.bf16.msra.mxu0 0
        %1769 = vmatprep.subr.bf16.mxu0 0
        %1770 = vmatpush2.bf16.msra.mxu0 0
        %1771 = vmatprep.subr.bf16.mxu0 0
        %1772 = vmatpush2.bf16.msra.mxu0 0
        %1773 = vmatprep.subr.bf16.mxu0 0
        %1774 = vmatpush2.bf16.msra.mxu0 0
        %1775 = vmatprep.subr.bf16.mxu0 0
        %1776 = vmatpush2.bf16.msra.mxu0 0
        %1777 = vmatprep.mubr.bf16.mxu0 0
        %1778 = vmatmul.mubr.bf16.gmra.mxu0 %v1740
        %v1779 = vpop.f32.mrf.mxu0
        %v1780 = vadd.f32 0.0, %v1779
        %v1781 = vpop.f32.mrf.mxu0
        %v1782 = vpop.f32.mrf.mxu0
        %v1783 = vpop.f32.mrf.mxu0
        %1784 = vdwg.mxu0
        %v1785 = vadd.f32 %v1619, %v1780
        %1786 = vrot.lane.b32.xlu0 %v947, 108
        %v1787 = vpop.permute.xlu0 %1786
        %1788 = vrot.lane.b32.xlu0 %v948, 108
        %v1789 = vpop.permute.xlu0 %1788
        %v1791 = vsel %vm958, %v1787, 0
        %v1794 = vsel %vm958, %v1789, 0
        %1796 = vmatprep.subr.bf16.mxu0 0
        %1797 = vmatpush1.bf16.xpose.msra.mxu0 0
        %1798 = vmatprep.subr.bf16.mxu0 0
        %1799 = vmatpush1.bf16.xpose.msra.mxu0 0
        %1800 = vmatprep.subr.bf16.mxu0 0
        %1801 = vmatpush1.bf16.xpose.msra.mxu0 0
        %1802 = vmatprep.subr.bf16.mxu0 0
        %1803 = vmatpush1.bf16.xpose.msra.mxu0 0
        %1804 = vmatprep.subr.bf16.mxu0 0
        %1805 = vmatpush1.bf16.xpose.msra.mxu0 0
        %1806 = vmatprep.subr.bf16.mxu0 0
        %1807 = vmatpush1.bf16.xpose.msra.mxu0 0
        %1808 = vmatprep.subr.bf16.mxu0 0
        %1809 = vmatpush1.bf16.xpose.msra.mxu0 0
        %1810 = vmatprep.subr.bf16.mxu0 0
        %1811 = vmatpush1.bf16.xpose.msra.mxu0 %v1794
        %1812 = vmatprep.subr.bf16.mxu0 0
        %1813 = vmatpush2.bf16.xpose.msra.mxu0 0
        %1814 = vmatprep.subr.bf16.mxu0 0
        %1815 = vmatpush2.bf16.xpose.msra.mxu0 0
        %1816 = vmatprep.subr.bf16.mxu0 0
        %1817 = vmatpush2.bf16.xpose.msra.mxu0 0
        %1818 = vmatprep.subr.bf16.mxu0 0
        %1819 = vmatpush2.bf16.xpose.msra.mxu0 0
        %1820 = vmatprep.subr.bf16.mxu0 0
        %1821 = vmatpush2.bf16.xpose.msra.mxu0 0
        %1822 = vmatprep.subr.bf16.mxu0 0
        %1823 = vmatpush2.bf16.xpose.msra.mxu0 0
        %1824 = vmatprep.subr.bf16.mxu0 0
        %1825 = vmatpush2.bf16.xpose.msra.mxu0 0
        %1826 = vmatprep.subr.bf16.mxu0 0
        %1827 = vmatpush2.bf16.xpose.msra.mxu0 0
        %1828 = vmatprep.mubr.bf16.mxu0 0
        %1829 = vmatmul.mubr.bf16.gmra.mxu0 %v1791
        %v1830 = vpop.f32.mrf.mxu0
        %v1831 = vadd.f32 0.0, %v1830
        %v1832 = vpop.f32.mrf.mxu0
        %v1833 = vpop.f32.mrf.mxu0
        %v1834 = vpop.f32.mrf.mxu0
        %1835 = vdwg.mxu0
        %v1836 = vsel %vm1005, %v1831, -inf
        %v1837 = vrot.slane %v1836, 4
        %v1838 = vmax.f32 %v1836, %v1837
        %v1839 = vrot.slane %v1838, 2
        %v1840 = vmax.f32 %v1838, %v1839
        %v1841 = vrot.slane %v1840, 1
        %v1842 = vmax.f32 %v1840, %v1841
        %v1843 = vsub.f32 %v1831, %v1842
        %v1844 = vmul.f32 %v1843, 1.442695
        %v1845 = vpow.pop %v1844
        %v1846 = vsel %vm1005, %v1845, 0.0
        %v1847 = vrot.slane %v1846, 4
        %v1848 = vadd.f32 %v1846, %v1847
        %v1849 = vrot.slane %v1848, 2
        %v1850 = vadd.f32 %v1848, %v1849
        %v1851 = vrot.slane %v1850, 1
        %v1852 = vadd.f32 %v1850, %v1851
        %v1853 = vrcp.pop %v1852
        %v1854 = vmul.f32 %v1845, %v1853
        %v1855 = vpack.c.bf16 %v1854, %v1854
        %1856 = vrot.lane.b32.xlu0 %v949, 108
        %v1857 = vpop.permute.xlu0 %1856
        %v1860 = vsel %vm1005, %v1855, 0
        %1862 = vmatprep.subr.bf16.mxu0 0
        %1863 = vmatpush1.bf16.msra.mxu0 0
        %1864 = vmatprep.subr.bf16.mxu0 0
        %1865 = vmatpush1.bf16.msra.mxu0 0
        %1866 = vmatprep.subr.bf16.mxu0 0
        %1867 = vmatpush1.bf16.msra.mxu0 0
        %1868 = vmatprep.subr.bf16.mxu0 0
        %1869 = vmatpush1.bf16.msra.mxu0 0
        %1870 = vmatprep.subr.bf16.mxu0 0
        %1871 = vmatpush1.bf16.msra.mxu0 0
        %1872 = vmatprep.subr.bf16.mxu0 0
        %1873 = vmatpush1.bf16.msra.mxu0 0
        %1874 = vmatprep.subr.bf16.mxu0 0
        %1875 = vmatpush1.bf16.msra.mxu0 0
        %1876 = vmatprep.subr.bf16.mxu0 0
        %1877 = vmatpush1.bf16.msra.mxu0 %v1857
        %1878 = vmatprep.subr.bf16.mxu0 0
        %1879 = vmatpush2.bf16.msra.mxu0 0
        %1880 = vmatprep.subr.bf16.mxu0 0
        %1881 = vmatpush2.bf16.msra.mxu0 0
        %1882 = vmatprep.subr.bf16.mxu0 0
        %1883 = vmatpush2.bf16.msra.mxu0 0
        %1884 = vmatprep.subr.bf16.mxu0 0
        %1885 = vmatpush2.bf16.msra.mxu0 0
        %1886 = vmatprep.subr.bf16.mxu0 0
        %1887 = vmatpush2.bf16.msra.mxu0 0
        %1888 = vmatprep.subr.bf16.mxu0 0
        %1889 = vmatpush2.bf16.msra.mxu0 0
        %1890 = vmatprep.subr.bf16.mxu0 0
        %1891 = vmatpush2.bf16.msra.mxu0 0
        %1892 = vmatprep.subr.bf16.mxu0 0
        %1893 = vmatpush2.bf16.msra.mxu0 0
        %1894 = vmatprep.mubr.bf16.mxu0 0
        %1895 = vmatmul.mubr.bf16.gmra.mxu0 %v1860
        %v1896 = vpop.f32.mrf.mxu0
        %v1897 = vadd.f32 0.0, %v1896
        %v1898 = vpop.f32.mrf.mxu0
        %v1899 = vpop.f32.mrf.mxu0
        %v1900 = vpop.f32.mrf.mxu0
        %1901 = vdwg.mxu0
        %v1902 = vpack.c.bf16 %v1897, %v1897
        %s1903 = scalar_lea.vmem %s10, 10
        %v1904 = vld [vmem:[%s1903] sm:$0x3]
        %v1906 = vsel %vm958, %v1902, 0
        %v1909 = vsel %vm1074, %v1904, 0
        %1911 = vmatprep.subr.bf16.mxu0 0
        %1912 = vmatpush1.bf16.msra.mxu0 0
        %1913 = vmatprep.subr.bf16.mxu0 0
        %1914 = vmatpush1.bf16.msra.mxu0 0
        %1915 = vmatprep.subr.bf16.mxu0 0
        %1916 = vmatpush1.bf16.msra.mxu0 0
        %1917 = vmatprep.subr.bf16.mxu0 0
        %1918 = vmatpush1.bf16.msra.mxu0 0
        %1919 = vmatprep.subr.bf16.mxu0 0
        %1920 = vmatpush1.bf16.msra.mxu0 0
        %1921 = vmatprep.subr.bf16.mxu0 0
        %1922 = vmatpush1.bf16.msra.mxu0 0
        %1923 = vmatprep.subr.bf16.mxu0 0
        %1924 = vmatpush1.bf16.msra.mxu0 0
        %1925 = vmatprep.subr.bf16.mxu0 0
        %1926 = vmatpush1.bf16.msra.mxu0 %v1909
        %1927 = vmatprep.subr.bf16.mxu0 0
        %1928 = vmatpush2.bf16.msra.mxu0 0
        %1929 = vmatprep.subr.bf16.mxu0 0
        %1930 = vmatpush2.bf16.msra.mxu0 0
        %1931 = vmatprep.subr.bf16.mxu0 0
        %1932 = vmatpush2.bf16.msra.mxu0 0
        %1933 = vmatprep.subr.bf16.mxu0 0
        %1934 = vmatpush2.bf16.msra.mxu0 0
        %1935 = vmatprep.subr.bf16.mxu0 0
        %1936 = vmatpush2.bf16.msra.mxu0 0
        %1937 = vmatprep.subr.bf16.mxu0 0
        %1938 = vmatpush2.bf16.msra.mxu0 0
        %1939 = vmatprep.subr.bf16.mxu0 0
        %1940 = vmatpush2.bf16.msra.mxu0 0
        %1941 = vmatprep.subr.bf16.mxu0 0
        %1942 = vmatpush2.bf16.msra.mxu0 0
        %1943 = vmatprep.mubr.bf16.mxu0 0
        %1944 = vmatmul.mubr.bf16.gmra.mxu0 %v1906
        %v1945 = vpop.f32.mrf.mxu0
        %v1946 = vadd.f32 0.0, %v1945
        %v1947 = vpop.f32.mrf.mxu0
        %v1948 = vpop.f32.mrf.mxu0
        %v1949 = vpop.f32.mrf.mxu0
        %1950 = vdwg.mxu0
        %v1951 = vadd.f32 %v1785, %v1946
        %1952 = vrot.lane.b32.xlu0 %v947, 104
        %v1953 = vpop.permute.xlu0 %1952
        %1954 = vrot.lane.b32.xlu0 %v948, 104
        %v1955 = vpop.permute.xlu0 %1954
        %v1957 = vsel %vm958, %v1953, 0
        %v1960 = vsel %vm958, %v1955, 0
        %1962 = vmatprep.subr.bf16.mxu0 0
        %1963 = vmatpush1.bf16.xpose.msra.mxu0 0
        %1964 = vmatprep.subr.bf16.mxu0 0
        %1965 = vmatpush1.bf16.xpose.msra.mxu0 0
        %1966 = vmatprep.subr.bf16.mxu0 0
        %1967 = vmatpush1.bf16.xpose.msra.mxu0 0
        %1968 = vmatprep.subr.bf16.mxu0 0
        %1969 = vmatpush1.bf16.xpose.msra.mxu0 0
        %1970 = vmatprep.subr.bf16.mxu0 0
        %1971 = vmatpush1.bf16.xpose.msra.mxu0 0
        %1972 = vmatprep.subr.bf16.mxu0 0
        %1973 = vmatpush1.bf16.xpose.msra.mxu0 0
        %1974 = vmatprep.subr.bf16.mxu0 0
        %1975 = vmatpush1.bf16.xpose.msra.mxu0 0
        %1976 = vmatprep.subr.bf16.mxu0 0
        %1977 = vmatpush1.bf16.xpose.msra.mxu0 %v1960
        %1978 = vmatprep.subr.bf16.mxu0 0
        %1979 = vmatpush2.bf16.xpose.msra.mxu0 0
        %1980 = vmatprep.subr.bf16.mxu0 0
        %1981 = vmatpush2.bf16.xpose.msra.mxu0 0
        %1982 = vmatprep.subr.bf16.mxu0 0
        %1983 = vmatpush2.bf16.xpose.msra.mxu0 0
        %1984 = vmatprep.subr.bf16.mxu0 0
        %1985 = vmatpush2.bf16.xpose.msra.mxu0 0
        %1986 = vmatprep.subr.bf16.mxu0 0
        %1987 = vmatpush2.bf16.xpose.msra.mxu0 0
        %1988 = vmatprep.subr.bf16.mxu0 0
        %1989 = vmatpush2.bf16.xpose.msra.mxu0 0
        %1990 = vmatprep.subr.bf16.mxu0 0
        %1991 = vmatpush2.bf16.xpose.msra.mxu0 0
        %1992 = vmatprep.subr.bf16.mxu0 0
        %1993 = vmatpush2.bf16.xpose.msra.mxu0 0
        %1994 = vmatprep.mubr.bf16.mxu0 0
        %1995 = vmatmul.mubr.bf16.gmra.mxu0 %v1957
        %v1996 = vpop.f32.mrf.mxu0
        %v1997 = vadd.f32 0.0, %v1996
        %v1998 = vpop.f32.mrf.mxu0
        %v1999 = vpop.f32.mrf.mxu0
        %v2000 = vpop.f32.mrf.mxu0
        %2001 = vdwg.mxu0
        %v2002 = vsel %vm1005, %v1997, -inf
        %v2003 = vrot.slane %v2002, 4
        %v2004 = vmax.f32 %v2002, %v2003
        %v2005 = vrot.slane %v2004, 2
        %v2006 = vmax.f32 %v2004, %v2005
        %v2007 = vrot.slane %v2006, 1
        %v2008 = vmax.f32 %v2006, %v2007
        %v2009 = vsub.f32 %v1997, %v2008
        %v2010 = vmul.f32 %v2009, 1.442695
        %v2011 = vpow.pop %v2010
        %v2012 = vsel %vm1005, %v2011, 0.0
        %v2013 = vrot.slane %v2012, 4
        %v2014 = vadd.f32 %v2012, %v2013
        %v2015 = vrot.slane %v2014, 2
        %v2016 = vadd.f32 %v2014, %v2015
        %v2017 = vrot.slane %v2016, 1
        %v2018 = vadd.f32 %v2016, %v2017
        %v2019 = vrcp.pop %v2018
        %v2020 = vmul.f32 %v2011, %v2019
        %v2021 = vpack.c.bf16 %v2020, %v2020
        %2022 = vrot.lane.b32.xlu0 %v949, 104
        %v2023 = vpop.permute.xlu0 %2022
        %v2026 = vsel %vm1005, %v2021, 0
        %2028 = vmatprep.subr.bf16.mxu0 0
        %2029 = vmatpush1.bf16.msra.mxu0 0
        %2030 = vmatprep.subr.bf16.mxu0 0
        %2031 = vmatpush1.bf16.msra.mxu0 0
        %2032 = vmatprep.subr.bf16.mxu0 0
        %2033 = vmatpush1.bf16.msra.mxu0 0
        %2034 = vmatprep.subr.bf16.mxu0 0
        %2035 = vmatpush1.bf16.msra.mxu0 0
        %2036 = vmatprep.subr.bf16.mxu0 0
        %2037 = vmatpush1.bf16.msra.mxu0 0
        %2038 = vmatprep.subr.bf16.mxu0 0
        %2039 = vmatpush1.bf16.msra.mxu0 0
        %2040 = vmatprep.subr.bf16.mxu0 0
        %2041 = vmatpush1.bf16.msra.mxu0 0
        %2042 = vmatprep.subr.bf16.mxu0 0
        %2043 = vmatpush1.bf16.msra.mxu0 %v2023
        %2044 = vmatprep.subr.bf16.mxu0 0
        %2045 = vmatpush2.bf16.msra.mxu0 0
        %2046 = vmatprep.subr.bf16.mxu0 0
        %2047 = vmatpush2.bf16.msra.mxu0 0
        %2048 = vmatprep.subr.bf16.mxu0 0
        %2049 = vmatpush2.bf16.msra.mxu0 0
        %2050 = vmatprep.subr.bf16.mxu0 0
        %2051 = vmatpush2.bf16.msra.mxu0 0
        %2052 = vmatprep.subr.bf16.mxu0 0
        %2053 = vmatpush2.bf16.msra.mxu0 0
        %2054 = vmatprep.subr.bf16.mxu0 0
        %2055 = vmatpush2.bf16.msra.mxu0 0
        %2056 = vmatprep.subr.bf16.mxu0 0
        %2057 = vmatpush2.bf16.msra.mxu0 0
        %2058 = vmatprep.subr.bf16.mxu0 0
        %2059 = vmatpush2.bf16.msra.mxu0 0
        %2060 = vmatprep.mubr.bf16.mxu0 0
        %2061 = vmatmul.mubr.bf16.gmra.mxu0 %v2026
        %v2062 = vpop.f32.mrf.mxu0
        %v2063 = vadd.f32 0.0, %v2062
        %v2064 = vpop.f32.mrf.mxu0
        %v2065 = vpop.f32.mrf.mxu0
        %v2066 = vpop.f32.mrf.mxu0
        %2067 = vdwg.mxu0
        %v2068 = vpack.c.bf16 %v2063, %v2063
        %s2069 = scalar_lea.vmem %s10, 12
        %v2070 = vld [vmem:[%s2069] sm:$0x3]
        %v2072 = vsel %vm958, %v2068, 0
        %v2075 = vsel %vm1074, %v2070, 0
        %2077 = vmatprep.subr.bf16.mxu0 0
        %2078 = vmatpush1.bf16.msra.mxu0 0
        %2079 = vmatprep.subr.bf16.mxu0 0
        %2080 = vmatpush1.bf16.msra.mxu0 0
        %2081 = vmatprep.subr.bf16.mxu0 0
        %2082 = vmatpush1.bf16.msra.mxu0 0
        %2083 = vmatprep.subr.bf16.mxu0 0
        %2084 = vmatpush1.bf16.msra.mxu0 0
        %2085 = vmatprep.subr.bf16.mxu0 0
        %2086 = vmatpush1.bf16.msra.mxu0 0
        %2087 = vmatprep.subr.bf16.mxu0 0
        %2088 = vmatpush1.bf16.msra.mxu0 0
        %2089 = vmatprep.subr.bf16.mxu0 0
        %2090 = vmatpush1.bf16.msra.mxu0 0
        %2091 = vmatprep.subr.bf16.mxu0 0
        %2092 = vmatpush1.bf16.msra.mxu0 %v2075
        %2093 = vmatprep.subr.bf16.mxu0 0
        %2094 = vmatpush2.bf16.msra.mxu0 0
        %2095 = vmatprep.subr.bf16.mxu0 0
        %2096 = vmatpush2.bf16.msra.mxu0 0
        %2097 = vmatprep.subr.bf16.mxu0 0
        %2098 = vmatpush2.bf16.msra.mxu0 0
        %2099 = vmatprep.subr.bf16.mxu0 0
        %2100 = vmatpush2.bf16.msra.mxu0 0
        %2101 = vmatprep.subr.bf16.mxu0 0
        %2102 = vmatpush2.bf16.msra.mxu0 0
        %2103 = vmatprep.subr.bf16.mxu0 0
        %2104 = vmatpush2.bf16.msra.mxu0 0
        %2105 = vmatprep.subr.bf16.mxu0 0
        %2106 = vmatpush2.bf16.msra.mxu0 0
        %2107 = vmatprep.subr.bf16.mxu0 0
        %2108 = vmatpush2.bf16.msra.mxu0 0
        %2109 = vmatprep.mubr.bf16.mxu0 0
        %2110 = vmatmul.mubr.bf16.gmra.mxu0 %v2072
        %v2111 = vpop.f32.mrf.mxu0
        %v2112 = vadd.f32 0.0, %v2111
        %v2113 = vpop.f32.mrf.mxu0
        %v2114 = vpop.f32.mrf.mxu0
        %v2115 = vpop.f32.mrf.mxu0
        %2116 = vdwg.mxu0
        %v2117 = vadd.f32 %v1951, %v2112
        %2118 = vrot.lane.b32.xlu0 %v947, 100
        %v2119 = vpop.permute.xlu0 %2118
        %2120 = vrot.lane.b32.xlu0 %v948, 100
        %v2121 = vpop.permute.xlu0 %2120
        %v2123 = vsel %vm958, %v2119, 0
        %v2126 = vsel %vm958, %v2121, 0
        %2128 = vmatprep.subr.bf16.mxu0 0
        %2129 = vmatpush1.bf16.xpose.msra.mxu0 0
        %2130 = vmatprep.subr.bf16.mxu0 0
        %2131 = vmatpush1.bf16.xpose.msra.mxu0 0
        %2132 = vmatprep.subr.bf16.mxu0 0
        %2133 = vmatpush1.bf16.xpose.msra.mxu0 0
        %2134 = vmatprep.subr.bf16.mxu0 0
        %2135 = vmatpush1.bf16.xpose.msra.mxu0 0
        %2136 = vmatprep.subr.bf16.mxu0 0
        %2137 = vmatpush1.bf16.xpose.msra.mxu0 0
        %2138 = vmatprep.subr.bf16.mxu0 0
        %2139 = vmatpush1.bf16.xpose.msra.mxu0 0
        %2140 = vmatprep.subr.bf16.mxu0 0
        %2141 = vmatpush1.bf16.xpose.msra.mxu0 0
        %2142 = vmatprep.subr.bf16.mxu0 0
        %2143 = vmatpush1.bf16.xpose.msra.mxu0 %v2126
        %2144 = vmatprep.subr.bf16.mxu0 0
        %2145 = vmatpush2.bf16.xpose.msra.mxu0 0
        %2146 = vmatprep.subr.bf16.mxu0 0
        %2147 = vmatpush2.bf16.xpose.msra.mxu0 0
        %2148 = vmatprep.subr.bf16.mxu0 0
        %2149 = vmatpush2.bf16.xpose.msra.mxu0 0
        %2150 = vmatprep.subr.bf16.mxu0 0
        %2151 = vmatpush2.bf16.xpose.msra.mxu0 0
        %2152 = vmatprep.subr.bf16.mxu0 0
        %2153 = vmatpush2.bf16.xpose.msra.mxu0 0
        %2154 = vmatprep.subr.bf16.mxu0 0
        %2155 = vmatpush2.bf16.xpose.msra.mxu0 0
        %2156 = vmatprep.subr.bf16.mxu0 0
        %2157 = vmatpush2.bf16.xpose.msra.mxu0 0
        %2158 = vmatprep.subr.bf16.mxu0 0
        %2159 = vmatpush2.bf16.xpose.msra.mxu0 0
        %2160 = vmatprep.mubr.bf16.mxu0 0
        %2161 = vmatmul.mubr.bf16.gmra.mxu0 %v2123
        %v2162 = vpop.f32.mrf.mxu0
        %v2163 = vadd.f32 0.0, %v2162
        %v2164 = vpop.f32.mrf.mxu0
        %v2165 = vpop.f32.mrf.mxu0
        %v2166 = vpop.f32.mrf.mxu0
        %2167 = vdwg.mxu0
        %v2168 = vsel %vm1005, %v2163, -inf
        %v2169 = vrot.slane %v2168, 4
        %v2170 = vmax.f32 %v2168, %v2169
        %v2171 = vrot.slane %v2170, 2
        %v2172 = vmax.f32 %v2170, %v2171
        %v2173 = vrot.slane %v2172, 1
        %v2174 = vmax.f32 %v2172, %v2173
        %v2175 = vsub.f32 %v2163, %v2174
        %v2176 = vmul.f32 %v2175, 1.442695
        %v2177 = vpow.pop %v2176
        %v2178 = vsel %vm1005, %v2177, 0.0
        %v2179 = vrot.slane %v2178, 4
        %v2180 = vadd.f32 %v2178, %v2179
        %v2181 = vrot.slane %v2180, 2
        %v2182 = vadd.f32 %v2180, %v2181
        %v2183 = vrot.slane %v2182, 1
        %v2184 = vadd.f32 %v2182, %v2183
        %v2185 = vrcp.pop %v2184
        %v2186 = vmul.f32 %v2177, %v2185
        %v2187 = vpack.c.bf16 %v2186, %v2186
        %2188 = vrot.lane.b32.xlu0 %v949, 100
        %v2189 = vpop.permute.xlu0 %2188
        %v2192 = vsel %vm1005, %v2187, 0
        %2194 = vmatprep.subr.bf16.mxu0 0
        %2195 = vmatpush1.bf16.msra.mxu0 0
        %2196 = vmatprep.subr.bf16.mxu0 0
        %2197 = vmatpush1.bf16.msra.mxu0 0
        %2198 = vmatprep.subr.bf16.mxu0 0
        %2199 = vmatpush1.bf16.msra.mxu0 0
        %2200 = vmatprep.subr.bf16.mxu0 0
        %2201 = vmatpush1.bf16.msra.mxu0 0
        %2202 = vmatprep.subr.bf16.mxu0 0
        %2203 = vmatpush1.bf16.msra.mxu0 0
        %2204 = vmatprep.subr.bf16.mxu0 0
        %2205 = vmatpush1.bf16.msra.mxu0 0
        %2206 = vmatprep.subr.bf16.mxu0 0
        %2207 = vmatpush1.bf16.msra.mxu0 0
        %2208 = vmatprep.subr.bf16.mxu0 0
        %2209 = vmatpush1.bf16.msra.mxu0 %v2189
        %2210 = vmatprep.subr.bf16.mxu0 0
        %2211 = vmatpush2.bf16.msra.mxu0 0
        %2212 = vmatprep.subr.bf16.mxu0 0
        %2213 = vmatpush2.bf16.msra.mxu0 0
        %2214 = vmatprep.subr.bf16.mxu0 0
        %2215 = vmatpush2.bf16.msra.mxu0 0
        %2216 = vmatprep.subr.bf16.mxu0 0
        %2217 = vmatpush2.bf16.msra.mxu0 0
        %2218 = vmatprep.subr.bf16.mxu0 0
        %2219 = vmatpush2.bf16.msra.mxu0 0
        %2220 = vmatprep.subr.bf16.mxu0 0
        %2221 = vmatpush2.bf16.msra.mxu0 0
        %2222 = vmatprep.subr.bf16.mxu0 0
        %2223 = vmatpush2.bf16.msra.mxu0 0
        %2224 = vmatprep.subr.bf16.mxu0 0
        %2225 = vmatpush2.bf16.msra.mxu0 0
        %2226 = vmatprep.mubr.bf16.mxu0 0
        %2227 = vmatmul.mubr.bf16.gmra.mxu0 %v2192
        %v2228 = vpop.f32.mrf.mxu0
        %v2229 = vadd.f32 0.0, %v2228
        %v2230 = vpop.f32.mrf.mxu0
        %v2231 = vpop.f32.mrf.mxu0
        %v2232 = vpop.f32.mrf.mxu0
        %2233 = vdwg.mxu0
        %v2234 = vpack.c.bf16 %v2229, %v2229
        %s2235 = scalar_lea.vmem %s10, 14
        %v2236 = vld [vmem:[%s2235] sm:$0x3]
        %v2238 = vsel %vm958, %v2234, 0
        %v2241 = vsel %vm1074, %v2236, 0
        %2243 = vmatprep.subr.bf16.mxu0 0
        %2244 = vmatpush1.bf16.msra.mxu0 0
        %2245 = vmatprep.subr.bf16.mxu0 0
        %2246 = vmatpush1.bf16.msra.mxu0 0
        %2247 = vmatprep.subr.bf16.mxu0 0
        %2248 = vmatpush1.bf16.msra.mxu0 0
        %2249 = vmatprep.subr.bf16.mxu0 0
        %2250 = vmatpush1.bf16.msra.mxu0 0
        %2251 = vmatprep.subr.bf16.mxu0 0
        %2252 = vmatpush1.bf16.msra.mxu0 0
        %2253 = vmatprep.subr.bf16.mxu0 0
        %2254 = vmatpush1.bf16.msra.mxu0 0
        %2255 = vmatprep.subr.bf16.mxu0 0
        %2256 = vmatpush1.bf16.msra.mxu0 0
        %2257 = vmatprep.subr.bf16.mxu0 0
        %2258 = vmatpush1.bf16.msra.mxu0 %v2241
        %2259 = vmatprep.subr.bf16.mxu0 0
        %2260 = vmatpush2.bf16.msra.mxu0 0
        %2261 = vmatprep.subr.bf16.mxu0 0
        %2262 = vmatpush2.bf16.msra.mxu0 0
        %2263 = vmatprep.subr.bf16.mxu0 0
        %2264 = vmatpush2.bf16.msra.mxu0 0
        %2265 = vmatprep.subr.bf16.mxu0 0
        %2266 = vmatpush2.bf16.msra.mxu0 0
        %2267 = vmatprep.subr.bf16.mxu0 0
        %2268 = vmatpush2.bf16.msra.mxu0 0
        %2269 = vmatprep.subr.bf16.mxu0 0
        %2270 = vmatpush2.bf16.msra.mxu0 0
        %2271 = vmatprep.subr.bf16.mxu0 0
        %2272 = vmatpush2.bf16.msra.mxu0 0
        %2273 = vmatprep.subr.bf16.mxu0 0
        %2274 = vmatpush2.bf16.msra.mxu0 0
        %2275 = vmatprep.mubr.bf16.mxu0 0
        %2276 = vmatmul.mubr.bf16.gmra.mxu0 %v2238
        %v2277 = vpop.f32.mrf.mxu0
        %v2278 = vadd.f32 0.0, %v2277
        %v2279 = vpop.f32.mrf.mxu0
        %v2280 = vpop.f32.mrf.mxu0
        %v2281 = vpop.f32.mrf.mxu0
        %2282 = vdwg.mxu0
        %v2283 = vadd.f32 %v2117, %v2278
        %v2284 = vld [vmem:[%s12] sm:$0x1]
        %v2285 = vld [vmem:[%s13] sm:$0x1]
        %v2286 = vsel %vm689, %v2283, 0.0
        %2287 = vadd.xlane.f32.xlu0 %v2286
        %v2288 = vpop.xlane.xlu0 %2287
        %v2289 = vmul.f32 %v2288, %v693
        %v2290 = vsub.f32 %v2283, %v2289
        %v2291 = vmul.f32 %v2290, %v2290
        %v2292 = vsel %vm689, %v2291, 0.0
        %2293 = vadd.xlane.f32.xlu0 %v2292
        %v2294 = vpop.xlane.xlu0 %2293
        %v2295 = vmul.f32 %v2294, %v693
        %v2296 = vadd.f32 %v2295, 1e-05
        %v2297 = vrsqrt.pop %v2296
        %v2298 = vmul.f32 %v2290, %v2297
        %v2300 = vlaneseq
        %v2301 = vshrl.u32 %v2300, 7
        %v2302 = vsub.s32 0, %v2301
        %v2303 = vrot.slane %v2284, %v2302
        %v2305 = vmul.f32 %v2298, %v2303
        %v2307 = vlaneseq
        %v2308 = vshrl.u32 %v2307, 7
        %v2309 = vsub.s32 0, %v2308
        %v2310 = vrot.slane %v2285, %v2309
        %v2312 = vadd.f32 %v2305, %v2310
        %v2313 = vpack.c.bf16 %v2312, %v2312
        %v2314 = vld [vmem:[#allocation13] sm:$0xf]
        %v2315 = vld [vmem:[#allocation13 + $0x4] sm:$0xf]
        %v2316 = vld [vmem:[#allocation13 + $0x8] sm:$0xf]
        %v2317 = vld [vmem:[#allocation13 + $0xc] sm:$0xf]
        %v2318 = vld [vmem:[%s15] sm:$0x1]
        %v2320 = vlaneseq
        %v2321 = vshrl.u32 %v2320, 7
        %v2322 = vsub.s32 0, %v2321
        %v2323 = vrot.slane %v2318, %v2322
        %v2329 = vunpack.c.l.b16 %v2314
        %v2330 = vunpack.c.l.b16 %v2315
        %v2331 = vunpack.c.l.b16 %v2316
        %v2332 = vunpack.c.l.b16 %v2317
        %v2333 = vpack.c.b16 %v2330, %v2329
        %v2334 = vpack.c.b16 %v2332, %v2331
        %v2338 = vsel %vm689, %v2313, 0
        %2340 = vmatprep.subr.bf16.mxu0 0
        %2341 = vmatpush1.bf16.msra.mxu0 0
        %2342 = vmatprep.subr.bf16.mxu0 0
        %2343 = vmatpush1.bf16.msra.mxu0 0
        %2344 = vmatprep.subr.bf16.mxu0 0
        %2345 = vmatpush1.bf16.msra.mxu0 0
        %2346 = vmatprep.subr.bf16.mxu0 0
        %2347 = vmatpush1.bf16.msra.mxu0 0
        %2348 = vmatprep.subr.bf16.mxu0 0
        %2349 = vmatpush1.bf16.msra.mxu0 0
        %2350 = vmatprep.subr.bf16.mxu0 0
        %2351 = vmatpush1.bf16.msra.mxu0 0
        %2352 = vmatprep.subr.bf16.mxu0 0
        %2353 = vmatpush1.bf16.msra.mxu0 %v2334
        %2354 = vmatprep.subr.bf16.mxu0 0
        %2355 = vmatpush1.bf16.msra.mxu0 %v2333
        %2356 = vmatprep.subr.bf16.mxu0 0
        %2357 = vmatpush2.bf16.msra.mxu0 0
        %2358 = vmatprep.subr.bf16.mxu0 0
        %2359 = vmatpush2.bf16.msra.mxu0 0
        %2360 = vmatprep.subr.bf16.mxu0 0
        %2361 = vmatpush2.bf16.msra.mxu0 0
        %2362 = vmatprep.subr.bf16.mxu0 0
        %2363 = vmatpush2.bf16.msra.mxu0 0
        %2364 = vmatprep.subr.bf16.mxu0 0
        %2365 = vmatpush2.bf16.msra.mxu0 0
        %2366 = vmatprep.subr.bf16.mxu0 0
        %2367 = vmatpush2.bf16.msra.mxu0 0
        %2368 = vmatprep.subr.bf16.mxu0 0
        %2369 = vmatpush2.bf16.msra.mxu0 0
        %2370 = vmatprep.subr.bf16.mxu0 0
        %2371 = vmatpush2.bf16.msra.mxu0 0
        %2372 = vmatprep.mubr.bf16.mxu0 0
        %2373 = vmatmul.mubr.bf16.gmra.mxu0 %v2338
        %v2374 = vpop.f32.mrf.mxu0
        %v2375 = vadd.f32 %v2323, %v2374
        %v2376 = vpop.f32.mrf.mxu0
        %v2377 = vpop.f32.mrf.mxu0
        %v2378 = vpop.f32.mrf.mxu0
        %2379 = vdwg.mxu0
        %v2380 = vmul.f32 %v2375, 0.5
        %v2381 = vmul.f32 %v2375, 0.044715
        %v2382 = vmul.f32 %v2381, %v2375
        %v2383 = vmul.f32 %v2382, %v2375
        %v2384 = vadd.f32 %v2375, %v2383
        %v2385 = vmul.f32 %v2384, 0.7978846
        %v2386 = vtanh.pop %v2385
        %v2387 = vadd.f32 %v2386, 1.0
        %v2388 = vmul.f32 %v2380, %v2387
        %v2389 = vpack.c.bf16 %v2388, %v2388
        %v2390 = vld [vmem:[%s16] sm:$0xf]
        %v2391 = vld [vmem:[%s16 + $0x4] sm:$0xf]
        %v2392 = vld [vmem:[%s16 + $0x8] sm:$0xf]
        %v2393 = vld [vmem:[%s16 + $0xc] sm:$0xf]
        %v2394 = vld [vmem:[%s16 + $0x10] sm:$0xf]
        %v2395 = vld [vmem:[%s16 + $0x14] sm:$0xf]
        %v2396 = vld [vmem:[%s16 + $0x18] sm:$0xf]
        %v2397 = vld [vmem:[%s16 + $0x1c] sm:$0xf]
        %v2398 = vld [vmem:[%s16 + $0x20] sm:$0xf]
        %v2399 = vld [vmem:[%s16 + $0x24] sm:$0xf]
        %v2400 = vld [vmem:[%s16 + $0x28] sm:$0xf]
        %v2401 = vld [vmem:[%s16 + $0x2c] sm:$0xf]
        %v2402 = vld [vmem:[%s16 + $0x30] sm:$0xf]
        %v2403 = vld [vmem:[%s16 + $0x34] sm:$0xf]
        %v2404 = vld [vmem:[%s16 + $0x38] sm:$0xf]
        %v2405 = vld [vmem:[%s16 + $0x3c] sm:$0xf]
        %v2406 = vld [vmem:[%s17] sm:$0x1]
        %v2408 = vlaneseq
        %v2409 = vshrl.u32 %v2408, 7
        %v2410 = vsub.s32 0, %v2409
        %v2411 = vrot.slane %v2406, %v2410
        %v2429 = vunpack.c.l.b16 %v2390
        %v2430 = vunpack.c.l.b16 %v2391
        %v2431 = vunpack.c.l.b16 %v2392
        %v2432 = vunpack.c.l.b16 %v2393
        %v2433 = vunpack.c.l.b16 %v2394
        %v2434 = vunpack.c.l.b16 %v2395
        %v2435 = vunpack.c.l.b16 %v2396
        %v2436 = vunpack.c.l.b16 %v2397
        %v2437 = vunpack.c.l.b16 %v2398
        %v2438 = vunpack.c.l.b16 %v2399
        %v2439 = vunpack.c.l.b16 %v2400
        %v2440 = vunpack.c.l.b16 %v2401
        %v2441 = vunpack.c.l.b16 %v2402
        %v2442 = vunpack.c.l.b16 %v2403
        %v2443 = vunpack.c.l.b16 %v2404
        %v2444 = vunpack.c.l.b16 %v2405
        %v2445 = vpack.c.b16 %v2430, %v2429
        %v2446 = vpack.c.b16 %v2432, %v2431
        %v2447 = vpack.c.b16 %v2434, %v2433
        %v2448 = vpack.c.b16 %v2436, %v2435
        %v2449 = vpack.c.b16 %v2438, %v2437
        %v2450 = vpack.c.b16 %v2440, %v2439
        %v2451 = vpack.c.b16 %v2442, %v2441
        %v2452 = vpack.c.b16 %v2444, %v2443
        %2461 = vmatprep.subr.bf16.mxu0 0
        %2462 = vmatpush1.bf16.msra.mxu0 %v2452
        %2463 = vmatprep.subr.bf16.mxu0 0
        %2464 = vmatpush1.bf16.msra.mxu0 %v2451
        %2465 = vmatprep.subr.bf16.mxu0 0
        %2466 = vmatpush1.bf16.msra.mxu0 %v2450
        %2467 = vmatprep.subr.bf16.mxu0 0
        %2468 = vmatpush1.bf16.msra.mxu0 %v2449
        %2469 = vmatprep.subr.bf16.mxu0 0
        %2470 = vmatpush1.bf16.msra.mxu0 %v2448
        %2471 = vmatprep.subr.bf16.mxu0 0
        %2472 = vmatpush1.bf16.msra.mxu0 %v2447
        %2473 = vmatprep.subr.bf16.mxu0 0
        %2474 = vmatpush1.bf16.msra.mxu0 %v2446
        %2475 = vmatprep.subr.bf16.mxu0 0
        %2476 = vmatpush1.bf16.msra.mxu0 %v2445
        %2477 = vmatprep.subr.bf16.mxu0 0
        %2478 = vmatpush2.bf16.msra.mxu0 0
        %2479 = vmatprep.subr.bf16.mxu0 0
        %2480 = vmatpush2.bf16.msra.mxu0 0
        %2481 = vmatprep.subr.bf16.mxu0 0
        %2482 = vmatpush2.bf16.msra.mxu0 0
        %2483 = vmatprep.subr.bf16.mxu0 0
        %2484 = vmatpush2.bf16.msra.mxu0 0
        %2485 = vmatprep.subr.bf16.mxu0 0
        %2486 = vmatpush2.bf16.msra.mxu0 0
        %2487 = vmatprep.subr.bf16.mxu0 0
        %2488 = vmatpush2.bf16.msra.mxu0 0
        %2489 = vmatprep.subr.bf16.mxu0 0
        %2490 = vmatpush2.bf16.msra.mxu0 0
        %2491 = vmatprep.subr.bf16.mxu0 0
        %2492 = vmatpush2.bf16.msra.mxu0 0
        %2493 = vmatprep.mubr.bf16.mxu0 0
        %2494 = vmatmul.mubr.bf16.gmra.mxu0 %v2389
        %v2495 = vpop.f32.mrf.mxu0
        %v2496 = vadd.f32 %v2411, %v2495
        %v2497 = vpop.f32.mrf.mxu0
        %v2498 = vpop.f32.mrf.mxu0
        %v2499 = vpop.f32.mrf.mxu0
        %2500 = vdwg.mxu0
        %v2501 = vadd.f32 %v2312, %v2496
        %2502 = vst.msk [vmem:[%s673] sm:$0xff] %vm689, %v2501
        %s2503 = sand.u32 %s432, 1
        %s2504 = scalar_lea.sflag [#allocation4], %s2503
        %s2505 = sand.u32 %s432, 1
        %s2506 = smul.addr %s2505, 8
        %s2507 = scalar_lea.vmem [#allocation14], %s2506
        // Predicated region
        $region121: #{tpu_custom_call.1} parent=91 // pred_check
          %p2508 = pneg %p442
        $region122: #{tpu_custom_call.1} parent=91 // pred_check_branch
          %2510 = sbr.rel (%p2508) target = $region124
        $region123: #{tpu_custom_call.1} parent=91 // pred_region
          %s2512 = ssub.s32 128, 128
          %2513 = vsyncadd %s2504, %s2512
          %s2514 = smul.addr %s36, 128
          %s2515 = scalar_lea.hbm %s18, %s2514
          %s2517 = sshll.u32 %s2507, 4
          %s2518 = int_to_ptr.vmem [resolvable:$true] %s2517
          %2520 = dma.vmem_to_hbm [thread:$0]  %s2518, 128, %s2515, %s2504
        $region124: #{tpu_custom_call.1} parent=91 // pred_fallthru
          _
      $region92: #{tpu_custom_call.1} parent=5 // pred_fallthru
        _
      %p2521 = scmp.le.s32.totalorder 2, %s31
      // Predicated region
      $region125: #{tpu_custom_call.1} parent=5 // pred_check
        %p2522 = pneg %p2521
      $region126: #{tpu_custom_call.1} parent=5 // pred_check_branch
        %2524 = sbr.rel (%p2522) target = $region128
      $region127: #{tpu_custom_call.1} parent=5 // pred_region
        %s2525 = ssub.s32 %s31, 2
        // Predicated region
        $region129: #{tpu_custom_call.1} parent=127 // pred_check
          %p2526 = pneg %p448
        $region130: #{tpu_custom_call.1} parent=127 // pred_check_branch
          %2528 = sbr.rel (%p2526) target = $region132
        $region131: #{tpu_custom_call.1} parent=127 // pred_region
          %s2529 = sand.u32 %s433, 1
          %s2530 = scalar_lea.sflag [#allocation4], %s2529
          %s2531 = sand.u32 %s433, 1
          %s2532 = smul.addr %s2531, 8
          %s2533 = scalar_lea.vmem [#allocation14], %s2532
          %2534 = dma.done %s2530, 128
        $region132: #{tpu_custom_call.1} parent=127 // pred_fallthru
          _
      $region128: #{tpu_custom_call.1} parent=5 // pred_fallthru
        _
    $region6: #{tpu_custom_call.1} parent=1 // loop_footer
      %s35 = sadd.s32 1, %s31
    $region7: #{tpu_custom_call.1} parent=1 // loop_footer_branch
      %30 = sbr.rel target = $region3
    $region8: #{tpu_custom_call.1} parent=1 // loop_exit
      _
    %2535 = vsyncpa [#allocation3], 1
    %s2536 = scalar_lea.sflag [#allocation3], 1
    %2537 = vsyncpa %s2536, 1
    %2538 = vsyncpa [#allocation6], 1
    %2539 = vsyncpa [#allocation9], 1
    %2540 = vsyncpa [#allocation12], 1
    %2541 = vsyncpa [#allocation4], 1
    %s2542 = scalar_lea.sflag [#allocation4], 1
    %2543 = vsyncpa %s2542, 1

</llo_original>
